<compile_context>
chip_gen: v5e
topology: v5e:2x2
jax: 0.10.0
libtpu: 0.0.40
codegen_flags: <defaults>
</compile_context>

<pallas_src>
import math

import jax
import jax.numpy as jnp
from jax import lax
from jax.experimental import pallas as pl
from jax.experimental.pallas import tpu as pltpu

# ----- model config (mirrors the PyTorch module) -----
D_MODEL = 64
PATCH = 6
HIDDEN = 128
NUM_CLASSES = 7
NUM_HEADS = 4
HEAD_DIM = D_MODEL // NUM_HEADS
NUM_LAYERS = 1          # reference model has a single encoder layer
LN_EPS = 1e-5
SEQ = 64                # pos_embedding is (1, 64, d_model) -> 48x48 image, patch 6
F_PAD = 128             # lane-padded patch feature dim (C*P*P = 36 -> 128)
OUT_ROWS, OUT_LANES = 8, 128   # lane-dense padded output tile

# rows of the packed vector slab (built in the wrapper, read in the kernel)
VROW_POOL = 0           # rows 0..7 : block-averaging pooling matrix (B nonzero rows)
VROW_BQ = 8             # q bias (softmax scale folded)
VROW_BK = 9             # k bias
VROW_BATTN = 10         # out_proj bias + bv @ Wo^T (constant attention bias)
VROW_LN1_G = 11
VROW_LN1_B = 12
VROW_MLP_B1 = 13
VROW_MLP_B2 = 14
VROW_LN2_G = 15
VROW_LN2_B = 16
VROW_CLS_B = 17
VEC_ROWS = 24


# ----------------- fused kernel -----------------
def _vit_kernel(xin_ref, wqkvo_ref, wslab_ref, w1wc_ref, vec_ref, o_ref):
    f32 = jnp.float32
    BS = xin_ref.shape[0]
    B = BS // SEQ

    def vrow(r, n=D_MODEL):
        return vec_ref[r:r + 1, :n]          # (1, n) row; broadcasts over sublanes

    # ---- patch embedding + positional embedding (pos + conv bias pre-folded) ----
    wpe = wslab_ref[0:F_PAD, :]                                           # (128, 64)
    x = jnp.dot(xin_ref[:, 0:F_PAD], wpe, preferred_element_type=f32) \
        + xin_ref[:, F_PAD:F_PAD + D_MODEL]                               # (B*S, 64)

    # ---- fused projection: [q*scale | k | per-head v@Wo] in ONE matmul ----
    qkvo = jnp.dot(x, wqkvo_ref[...], preferred_element_type=f32)         # (B*S, 384)
    q = qkvo[:, 0:D_MODEL] + vrow(VROW_BQ)
    k = qkvo[:, D_MODEL:2 * D_MODEL] + vrow(VROW_BK)
    vo = qkvo[:, 2 * D_MODEL:]                                            # (B*S, 4*64)
    b_attn = vrow(VROW_BATTN)

    # ---- per-batch multi-head self-attention (num_layers == 1 in the reference) ----
    dn = (((1,), (1,)), ((), ()))        # contract last dims: q @ k^T, no transpose op
    blocks = []
    for b in range(B):                                                    # static, small
        rs = slice(b * SEQ, (b + 1) * SEQ)
        qb, kb, vob = q[rs], k[rs], vo[rs]
        parts = []
        for h in range(NUM_HEADS):                                        # static, 4
            hs = slice(h * HEAD_DIM, (h + 1) * HEAD_DIM)
            s = lax.dot_general(qb[:, hs], kb[:, hs], dn,
                                preferred_element_type=f32)               # (S, S)
            s = s - jnp.max(s, axis=-1, keepdims=True)
            e = jnp.exp(s)
            inv = pl.reciprocal(jnp.sum(e, axis=-1, keepdims=True), approx=True)
            parts.append(jnp.dot(e * inv,
                                 vob[:, h * D_MODEL:(h + 1) * D_MODEL],
                                 preferred_element_type=f32))             # (S, D)
        # independent per-head partials, 2-level tree sum (no serial acc chain)
        while len(parts) > 1:
            parts = [parts[i] + parts[i + 1] if i + 1 < len(parts) else parts[i]
                     for i in range(0, len(parts), 2)]
        blocks.append(x[rs] + parts[0] + b_attn)                          # residual folded
    h1_in = jnp.concatenate(blocks, axis=0) if B > 1 else blocks[0]       # (B*S, D)

    def layer_norm(z, g, beta):
        # single pass: two independent reductions, var = E[z^2] - mu^2
        mu = jnp.mean(z, axis=-1, keepdims=True)
        ms = jnp.mean(z * z, axis=-1, keepdims=True)
        return (z - mu) * lax.rsqrt(ms - mu * mu + LN_EPS) * g + beta

    h1 = layer_norm(h1_in, vrow(VROW_LN1_G), vrow(VROW_LN1_B))

    # ---- MLP ----
    w1 = w1wc_ref[0:D_MODEL, :]                                           # (64, 128)
    m = jnp.dot(h1, w1, preferred_element_type=f32) + vrow(VROW_MLP_B1, HIDDEN)
    m = jnp.maximum(m, 0.0)                                               # ReLU
    w2 = wslab_ref[F_PAD:F_PAD + HIDDEN, :]                               # (128, 64)
    y2 = jnp.dot(m, w2, preferred_element_type=f32) + vrow(VROW_MLP_B2)
    y = layer_norm(h1 + y2, vrow(VROW_LN2_G), vrow(VROW_LN2_B))           # (B*S, D)

    # ---- mean pool as one averaging matmul, then lane-dense classifier ----
    pool = vec_ref[VROW_POOL:VROW_POOL + OUT_ROWS, 0:BS]                  # (8, B*S)
    pooled = jnp.dot(pool, y, preferred_element_type=f32)                 # (8, D)
    wc = w1wc_ref[D_MODEL:2 * D_MODEL, :]                                 # (64, 128) padded
    o_ref[...] = jnp.dot(pooled, wc, preferred_element_type=f32) \
        + vrow(VROW_CLS_B, OUT_LANES)                                     # (8, 128)


# ----------------- wrapper -----------------
def _full_spec(shape):
    n = len(shape)
    return pl.BlockSpec(shape, lambda i, _n=n: (0,) * _n)


def simple_vit_forward(x, p):
    B, C, H, W = x.shape
    ph, pw = H // PATCH, W // PATCH
    S = ph * pw
    F = C * PATCH * PATCH
    assert S == SEQ, "pos_embedding fixes the sequence length to 64 tokens"
    assert B * S <= 128 and B <= OUT_ROWS
    f32 = jnp.float32

    # Conv2d(stride == kernel) as patch-unfold + matmul (PyTorch (c,kh,kw) flattening,
    # row-major patch order); batch folded into rows; feature dim zero-padded 36 -> 128.
    patches = x.reshape(B, C, ph, PATCH, pw, PATCH)
    patches = patches.transpose(0, 2, 4, 1, 3, 5).reshape(B * S, F)
    patches = jnp.pad(patches, ((0, 0), (0, F_PAD - F)))
    # positional embedding pre-tiled to (B*S, D) with the conv bias folded in
    posb = jnp.tile(p["pos"][0], (B, 1)) + p["conv_b"][None, :]
    xin = jnp.concatenate([patches, posb], axis=1).astype(f32)            # (B*S, 192)

    w_pe = p["conv_w"].reshape(D_MODEL, F).T
    w_pe = jnp.pad(w_pe, ((0, F_PAD - F), (0, 0)))                        # (128, 64)

    # fused in-projection; softmax scale folded into Wq/bq; Wv@Wo folded per head
    scale = 1.0 / math.sqrt(HEAD_DIM)
    wq = p["in_proj_w"][:D_MODEL].T * scale
    wk = p["in_proj_w"][D_MODEL:2 * D_MODEL].T
    wv = p["in_proj_w"][2 * D_MODEL:].T
    bq = p["in_proj_b"][:D_MODEL] * scale
    bk = p["in_proj_b"][D_MODEL:2 * D_MODEL]
    bv = p["in_proj_b"][2 * D_MODEL:]
    wo = p["out_proj_w"].T                                                # applied as x @ wo
    wvo = jnp.concatenate(
        [wv[:, h * HEAD_DIM:(h + 1) * HEAD_DIM] @ wo[h * HEAD_DIM:(h + 1) * HEAD_DIM, :]
         for h in range(NUM_HEADS)], axis=1)                              # (64, 4*64)
    b_attn = p["out_proj_b"] + bv @ wo                                    # constant attn bias
    wqkvo = jnp.concatenate([wq, wk, wvo], axis=1)                        # (64, 384)

    # 64-lane weight slab: patch-embed weight | MLP W2
    wslab = jnp.concatenate([w_pe, p["mlp_w2"].T], axis=0)                # (256, 64)
    # 128-lane weight slab: MLP W1 | classifier (lane-padded to 128)
    wc_pad = jnp.pad(p["cls_w"].T, ((0, 0), (0, OUT_LANES - NUM_CLASSES)))
    w1wc = jnp.concatenate([p["mlp_w1"].T, wc_pad], axis=0)               # (128, 128)

    # packed vector slab: pooling matrix + every bias / LN scale (one 12 KiB DMA)
    def row(v):
        v = jnp.asarray(v, f32).reshape(1, -1)
        return jnp.pad(v, ((0, 0), (0, OUT_LANES - v.shape[1])))
    pool = jnp.zeros((OUT_ROWS, B * S), f32)
    for b in range(B):
        pool = pool.at[b, b * S:(b + 1) * S].set(1.0 / S)
    pool = jnp.pad(pool, ((0, 0), (0, OUT_LANES - B * S)))
    vec = jnp.concatenate(
        [pool, row(bq), row(bk), row(b_attn),
         row(p["ln1_g"]), row(p["ln1_b"]),
         row(p["mlp_b1"]), row(p["mlp_b2"]),
         row(p["ln2_g"]), row(p["ln2_b"]),
         row(p["cls_b"]),
         jnp.zeros((VEC_ROWS - VROW_CLS_B - 1, OUT_LANES), f32)],
        axis=0)                                                           # (24, 128)

    args = (xin, wqkvo, wslab, w1wc, vec)
    out = pl.pallas_call(
        _vit_kernel,
        out_shape=jax.ShapeDtypeStruct((OUT_ROWS, OUT_LANES), f32),
        grid=(1,),
        in_specs=[_full_spec(a.shape) for a in args],
        out_specs=pl.BlockSpec((OUT_ROWS, OUT_LANES), lambda i: (0, 0)),
        compiler_params=pltpu.CompilerParams(dimension_semantics=("arbitrary",)),
    )(*args)
    return out[:B, :NUM_CLASSES]


# ----------------- parameters -----------------
def init_params(key):
    ks = jax.random.split(key, 8)
    s = 0.02
    f32 = jnp.float32
    p = {}
    p["conv_w"] = jax.random.normal(ks[0], (D_MODEL, 1, PATCH, PATCH), f32) * s
    p["conv_b"] = jax.random.normal(ks[1], (D_MODEL,), f32) * s
    p["pos"] = jax.random.normal(ks[2], (1, SEQ, D_MODEL), f32)           # torch.randn
    p["in_proj_w"] = jax.random.normal(ks[3], (3 * D_MODEL, D_MODEL), f32) * s
    p["in_proj_b"] = jnp.zeros((3 * D_MODEL,), f32)
    p["out_proj_w"] = jax.random.normal(ks[4], (D_MODEL, D_MODEL), f32) * s
    p["out_proj_b"] = jnp.zeros((D_MODEL,), f32)
    p["ln1_g"] = jnp.ones((D_MODEL,), f32)
    p["ln1_b"] = jnp.zeros((D_MODEL,), f32)
    p["mlp_w1"] = jax.random.normal(ks[5], (HIDDEN, D_MODEL), f32) * s
    p["mlp_b1"] = jnp.zeros((HIDDEN,), f32)
    p["mlp_w2"] = jax.random.normal(ks[6], (D_MODEL, HIDDEN), f32) * s
    p["mlp_b2"] = jnp.zeros((D_MODEL,), f32)
    p["ln2_g"] = jnp.ones((D_MODEL,), f32)
    p["ln2_b"] = jnp.zeros((D_MODEL,), f32)
    p["cls_w"] = jax.random.normal(ks[7], (NUM_CLASSES, D_MODEL), f32) * s
    p["cls_b"] = jnp.zeros((NUM_CLASSES,), f32)
    return p


if __name__ == "__main__":
    key = jax.random.PRNGKey(0)
    pkey, xkey = jax.random.split(key)
    params = init_params(pkey)
    # pos_embedding is (1, 64, d_model) => 64 patches, i.e. a 48x48
    # single-channel image with patch_size=6.
    x = jax.random.normal(xkey, (2, 1, 48, 48), jnp.float32)

    logits = jax.jit(simple_vit_forward)(x, params)
    jax.block_until_ready(logits)
    assert logits.shape == (2, NUM_CLASSES), logits.shape
    assert bool(jnp.all(jnp.isfinite(logits)))
    print("KERNEL_OK")
</pallas_src>

<mosaic_0001>
module attributes {stable_mosaic.version = 11 : i64} {
  func.func @_vit_kernel(%arg0: i32, %arg1: memref<128x192xf32, #tpu.memory_space<vmem>>, %arg2: memref<64x384xf32, #tpu.memory_space<vmem>>, %arg3: memref<256x64xf32, #tpu.memory_space<vmem>>, %arg4: memref<128x128xf32, #tpu.memory_space<vmem>>, %arg5: memref<24x128xf32, #tpu.memory_space<vmem>>, %arg6: memref<8x128xf32, #tpu.memory_space<vmem>>) attributes {dimension_semantics = [#tpu.dimension_semantics<arbitrary>], iteration_bounds = array<i64: 1>, scalar_prefetch = 0 : i64, scratch_operands = 0 : i64, tpu.core_type = #tpu.core_type<tc>, window_params = [{pipeline_mode = #tpu.pipeline_mode<synchronous>, transform_indices = @transform_0, window_bounds = array<i64: 128, 192>}, {pipeline_mode = #tpu.pipeline_mode<synchronous>, transform_indices = @transform_1, window_bounds = array<i64: 64, 384>}, {pipeline_mode = #tpu.pipeline_mode<synchronous>, transform_indices = @transform_2, window_bounds = array<i64: 256, 64>}, {pipeline_mode = #tpu.pipeline_mode<synchronous>, transform_indices = @transform_3, window_bounds = array<i64: 128, 128>}, {pipeline_mode = #tpu.pipeline_mode<synchronous>, transform_indices = @transform_4, window_bounds = array<i64: 24, 128>}, {pipeline_mode = #tpu.pipeline_mode<synchronous>, transform_indices = @transform_5, window_bounds = array<i64: 8, 128>}]} {
    %c0 = arith.constant 0 : index
    %c0_0 = arith.constant 0 : index
    %0 = vector.load %arg3[%c0, %c0_0] : memref<256x64xf32, #tpu.memory_space<vmem>>, vector<128x64xf32>
    %c0_1 = arith.constant 0 : index
    %c0_2 = arith.constant 0 : index
    %1 = vector.load %arg1[%c0_1, %c0_2] : memref<128x192xf32, #tpu.memory_space<vmem>>, vector<128x128xf32>
    %cst = arith.constant dense<0.000000e+00> : vector<128x64xf32>
    %2 = tpu.matmul %1, %0, %cst {dimension_numbers = #tpu.dot_dimension_numbers<[1], [0], [0], [1], [0, 0, 1, 1], [], []>} : vector<128x128xf32>, vector<128x64xf32>, vector<128x64xf32> -> vector<128x64xf32>
    %c0_3 = arith.constant 0 : index
    %c128 = arith.constant 128 : index
    %3 = vector.load %arg1[%c0_3, %c128] : memref<128x192xf32, #tpu.memory_space<vmem>>, vector<128x64xf32>
    %4 = arith.addf %2, %3 : vector<128x64xf32>
    %c0_4 = arith.constant 0 : index
    %c0_5 = arith.constant 0 : index
    %5 = vector.load %arg2[%c0_4, %c0_5] : memref<64x384xf32, #tpu.memory_space<vmem>>, vector<64x384xf32>
    %cst_6 = arith.constant dense<0.000000e+00> : vector<128x384xf32>
    %6 = tpu.matmul %4, %5, %cst_6 {dimension_numbers = #tpu.dot_dimension_numbers<[1], [0], [0], [1], [0, 0, 1, 1], [], []>} : vector<128x64xf32>, vector<64x384xf32>, vector<128x384xf32> -> vector<128x384xf32>
    %7 = vector.extract_strided_slice %6 {offsets = [0, 0], sizes = [128, 64], strides = [1, 1]} : vector<128x384xf32> to vector<128x64xf32>
    %c8 = arith.constant 8 : index
    %c0_7 = arith.constant 0 : index
    %8 = vector.load %arg5[%c8, %c0_7] : memref<24x128xf32, #tpu.memory_space<vmem>>, vector<1x64xf32>
    %9 = vector.broadcast %8 : vector<1x64xf32> to vector<128x64xf32>
    %10 = arith.addf %7, %9 : vector<128x64xf32>
    %11 = vector.extract_strided_slice %6 {offsets = [0, 64], sizes = [128, 64], strides = [1, 1]} : vector<128x384xf32> to vector<128x64xf32>
    %c9 = arith.constant 9 : index
    %c0_8 = arith.constant 0 : index
    %12 = vector.load %arg5[%c9, %c0_8] : memref<24x128xf32, #tpu.memory_space<vmem>>, vector<1x64xf32>
    %13 = vector.broadcast %12 : vector<1x64xf32> to vector<128x64xf32>
    %14 = arith.addf %11, %13 : vector<128x64xf32>
    %15 = vector.extract_strided_slice %6 {offsets = [0, 128], sizes = [128, 256], strides = [1, 1]} : vector<128x384xf32> to vector<128x256xf32>
    %c10 = arith.constant 10 : index
    %c0_9 = arith.constant 0 : index
    %16 = vector.load %arg5[%c10, %c0_9] : memref<24x128xf32, #tpu.memory_space<vmem>>, vector<1x64xf32>
    %17 = vector.extract_strided_slice %10 {offsets = [0, 0], sizes = [64, 64], strides = [1, 1]} : vector<128x64xf32> to vector<64x64xf32>
    %18 = vector.extract_strided_slice %14 {offsets = [0, 0], sizes = [64, 64], strides = [1, 1]} : vector<128x64xf32> to vector<64x64xf32>
    %19 = vector.extract_strided_slice %15 {offsets = [0, 0], sizes = [64, 256], strides = [1, 1]} : vector<128x256xf32> to vector<64x256xf32>
    %20 = vector.extract_strided_slice %17 {offsets = [0, 0], sizes = [64, 16], strides = [1, 1]} : vector<64x64xf32> to vector<64x16xf32>
    %21 = vector.extract_strided_slice %18 {offsets = [0, 0], sizes = [64, 16], strides = [1, 1]} : vector<64x64xf32> to vector<64x16xf32>
    %cst_10 = arith.constant dense<0.000000e+00> : vector<64x64xf32>
    %22 = tpu.matmul %20, %21, %cst_10 {dimension_numbers = #tpu.dot_dimension_numbers<[1], [1], [0], [0], [0, 0, 1, 0], [], []>} : vector<64x16xf32>, vector<64x16xf32>, vector<64x64xf32> -> vector<64x64xf32>
    %cst_11 = arith.constant dense<0xFF800000> : vector<64xf32>
    %23 = vector.multi_reduction <maximumf>, %22, %cst_11 [1] : vector<64x64xf32> to vector<64xf32>
    %24 = vector.shape_cast %23 : vector<64xf32> to vector<64x1xf32>
    %25 = vector.broadcast %24 : vector<64x1xf32> to vector<64x64xf32>
    %26 = arith.subf %22, %25 : vector<64x64xf32>
    %27 = math.exp %26 : vector<64x64xf32>
    %cst_12 = arith.constant dense<0.000000e+00> : vector<64xf32>
    %28 = vector.multi_reduction <add>, %27, %cst_12 [1] : vector<64x64xf32> to vector<64xf32>
    %29 = vector.shape_cast %28 : vector<64xf32> to vector<64x1xf32>
    %30 = tpu.reciprocal %29 {approx = true} : vector<64x1xf32> -> vector<64x1xf32>
    %31 = vector.broadcast %30 : vector<64x1xf32> to vector<64x64xf32>
    %32 = arith.mulf %27, %31 : vector<64x64xf32>
    %33 = vector.extract_strided_slice %19 {offsets = [0, 0], sizes = [64, 64], strides = [1, 1]} : vector<64x256xf32> to vector<64x64xf32>
    %cst_13 = arith.constant dense<0.000000e+00> : vector<64x64xf32>
    %34 = tpu.matmul %32, %33, %cst_13 {dimension_numbers = #tpu.dot_dimension_numbers<[1], [0], [0], [1], [0, 0, 1, 1], [], []>} : vector<64x64xf32>, vector<64x64xf32>, vector<64x64xf32> -> vector<64x64xf32>
    %35 = vector.extract_strided_slice %17 {offsets = [0, 16], sizes = [64, 16], strides = [1, 1]} : vector<64x64xf32> to vector<64x16xf32>
    %36 = vector.extract_strided_slice %18 {offsets = [0, 16], sizes = [64, 16], strides = [1, 1]} : vector<64x64xf32> to vector<64x16xf32>
    %cst_14 = arith.constant dense<0.000000e+00> : vector<64x64xf32>
    %37 = tpu.matmul %35, %36, %cst_14 {dimension_numbers = #tpu.dot_dimension_numbers<[1], [1], [0], [0], [0, 0, 1, 0], [], []>} : vector<64x16xf32>, vector<64x16xf32>, vector<64x64xf32> -> vector<64x64xf32>
    %cst_15 = arith.constant dense<0xFF800000> : vector<64xf32>
    %38 = vector.multi_reduction <maximumf>, %37, %cst_15 [1] : vector<64x64xf32> to vector<64xf32>
    %39 = vector.shape_cast %38 : vector<64xf32> to vector<64x1xf32>
    %40 = vector.broadcast %39 : vector<64x1xf32> to vector<64x64xf32>
    %41 = arith.subf %37, %40 : vector<64x64xf32>
    %42 = math.exp %41 : vector<64x64xf32>
    %cst_16 = arith.constant dense<0.000000e+00> : vector<64xf32>
    %43 = vector.multi_reduction <add>, %42, %cst_16 [1] : vector<64x64xf32> to vector<64xf32>
    %44 = vector.shape_cast %43 : vector<64xf32> to vector<64x1xf32>
    %45 = tpu.reciprocal %44 {approx = true} : vector<64x1xf32> -> vector<64x1xf32>
    %46 = vector.broadcast %45 : vector<64x1xf32> to vector<64x64xf32>
    %47 = arith.mulf %42, %46 : vector<64x64xf32>
    %48 = vector.extract_strided_slice %19 {offsets = [0, 64], sizes = [64, 64], strides = [1, 1]} : vector<64x256xf32> to vector<64x64xf32>
    %cst_17 = arith.constant dense<0.000000e+00> : vector<64x64xf32>
    %49 = tpu.matmul %47, %48, %cst_17 {dimension_numbers = #tpu.dot_dimension_numbers<[1], [0], [0], [1], [0, 0, 1, 1], [], []>} : vector<64x64xf32>, vector<64x64xf32>, vector<64x64xf32> -> vector<64x64xf32>
    %50 = vector.extract_strided_slice %17 {offsets = [0, 32], sizes = [64, 16], strides = [1, 1]} : vector<64x64xf32> to vector<64x16xf32>
    %51 = vector.extract_strided_slice %18 {offsets = [0, 32], sizes = [64, 16], strides = [1, 1]} : vector<64x64xf32> to vector<64x16xf32>
    %cst_18 = arith.constant dense<0.000000e+00> : vector<64x64xf32>
    %52 = tpu.matmul %50, %51, %cst_18 {dimension_numbers = #tpu.dot_dimension_numbers<[1], [1], [0], [0], [0, 0, 1, 0], [], []>} : vector<64x16xf32>, vector<64x16xf32>, vector<64x64xf32> -> vector<64x64xf32>
    %cst_19 = arith.constant dense<0xFF800000> : vector<64xf32>
    %53 = vector.multi_reduction <maximumf>, %52, %cst_19 [1] : vector<64x64xf32> to vector<64xf32>
    %54 = vector.shape_cast %53 : vector<64xf32> to vector<64x1xf32>
    %55 = vector.broadcast %54 : vector<64x1xf32> to vector<64x64xf32>
    %56 = arith.subf %52, %55 : vector<64x64xf32>
    %57 = math.exp %56 : vector<64x64xf32>
    %cst_20 = arith.constant dense<0.000000e+00> : vector<64xf32>
    %58 = vector.multi_reduction <add>, %57, %cst_20 [1] : vector<64x64xf32> to vector<64xf32>
    %59 = vector.shape_cast %58 : vector<64xf32> to vector<64x1xf32>
    %60 = tpu.reciprocal %59 {approx = true} : vector<64x1xf32> -> vector<64x1xf32>
    %61 = vector.broadcast %60 : vector<64x1xf32> to vector<64x64xf32>
    %62 = arith.mulf %57, %61 : vector<64x64xf32>
    %63 = vector.extract_strided_slice %19 {offsets = [0, 128], sizes = [64, 64], strides = [1, 1]} : vector<64x256xf32> to vector<64x64xf32>
    %cst_21 = arith.constant dense<0.000000e+00> : vector<64x64xf32>
    %64 = tpu.matmul %62, %63, %cst_21 {dimension_numbers = #tpu.dot_dimension_numbers<[1], [0], [0], [1], [0, 0, 1, 1], [], []>} : vector<64x64xf32>, vector<64x64xf32>, vector<64x64xf32> -> vector<64x64xf32>
    %65 = vector.extract_strided_slice %17 {offsets = [0, 48], sizes = [64, 16], strides = [1, 1]} : vector<64x64xf32> to vector<64x16xf32>
    %66 = vector.extract_strided_slice %18 {offsets = [0, 48], sizes = [64, 16], strides = [1, 1]} : vector<64x64xf32> to vector<64x16xf32>
    %cst_22 = arith.constant dense<0.000000e+00> : vector<64x64xf32>
    %67 = tpu.matmul %65, %66, %cst_22 {dimension_numbers = #tpu.dot_dimension_numbers<[1], [1], [0], [0], [0, 0, 1, 0], [], []>} : vector<64x16xf32>, vector<64x16xf32>, vector<64x64xf32> -> vector<64x64xf32>
    %cst_23 = arith.constant dense<0xFF800000> : vector<64xf32>
    %68 = vector.multi_reduction <maximumf>, %67, %cst_23 [1] : vector<64x64xf32> to vector<64xf32>
    %69 = vector.shape_cast %68 : vector<64xf32> to vector<64x1xf32>
    %70 = vector.broadcast %69 : vector<64x1xf32> to vector<64x64xf32>
    %71 = arith.subf %67, %70 : vector<64x64xf32>
    %72 = math.exp %71 : vector<64x64xf32>
    %cst_24 = arith.constant dense<0.000000e+00> : vector<64xf32>
    %73 = vector.multi_reduction <add>, %72, %cst_24 [1] : vector<64x64xf32> to vector<64xf32>
    %74 = vector.shape_cast %73 : vector<64xf32> to vector<64x1xf32>
    %75 = tpu.reciprocal %74 {approx = true} : vector<64x1xf32> -> vector<64x1xf32>
    %76 = vector.broadcast %75 : vector<64x1xf32> to vector<64x64xf32>
    %77 = arith.mulf %72, %76 : vector<64x64xf32>
    %78 = vector.extract_strided_slice %19 {offsets = [0, 192], sizes = [64, 64], strides = [1, 1]} : vector<64x256xf32> to vector<64x64xf32>
    %cst_25 = arith.constant dense<0.000000e+00> : vector<64x64xf32>
    %79 = tpu.matmul %77, %78, %cst_25 {dimension_numbers = #tpu.dot_dimension_numbers<[1], [0], [0], [1], [0, 0, 1, 1], [], []>} : vector<64x64xf32>, vector<64x64xf32>, vector<64x64xf32> -> vector<64x64xf32>
    %80 = arith.addf %34, %49 : vector<64x64xf32>
    %81 = arith.addf %64, %79 : vector<64x64xf32>
    %82 = arith.addf %80, %81 : vector<64x64xf32>
    %83 = vector.extract_strided_slice %4 {offsets = [0, 0], sizes = [64, 64], strides = [1, 1]} : vector<128x64xf32> to vector<64x64xf32>
    %84 = arith.addf %83, %82 : vector<64x64xf32>
    %85 = vector.broadcast %16 : vector<1x64xf32> to vector<64x64xf32>
    %86 = arith.addf %84, %85 : vector<64x64xf32>
    %87 = vector.extract_strided_slice %10 {offsets = [64, 0], sizes = [64, 64], strides = [1, 1]} : vector<128x64xf32> to vector<64x64xf32>
    %88 = vector.extract_strided_slice %14 {offsets = [64, 0], sizes = [64, 64], strides = [1, 1]} : vector<128x64xf32> to vector<64x64xf32>
    %89 = vector.extract_strided_slice %15 {offsets = [64, 0], sizes = [64, 256], strides = [1, 1]} : vector<128x256xf32> to vector<64x256xf32>
    %90 = vector.extract_strided_slice %87 {offsets = [0, 0], sizes = [64, 16], strides = [1, 1]} : vector<64x64xf32> to vector<64x16xf32>
    %91 = vector.extract_strided_slice %88 {offsets = [0, 0], sizes = [64, 16], strides = [1, 1]} : vector<64x64xf32> to vector<64x16xf32>
    %cst_26 = arith.constant dense<0.000000e+00> : vector<64x64xf32>
    %92 = tpu.matmul %90, %91, %cst_26 {dimension_numbers = #tpu.dot_dimension_numbers<[1], [1], [0], [0], [0, 0, 1, 0], [], []>} : vector<64x16xf32>, vector<64x16xf32>, vector<64x64xf32> -> vector<64x64xf32>
    %cst_27 = arith.constant dense<0xFF800000> : vector<64xf32>
    %93 = vector.multi_reduction <maximumf>, %92, %cst_27 [1] : vector<64x64xf32> to vector<64xf32>
    %94 = vector.shape_cast %93 : vector<64xf32> to vector<64x1xf32>
    %95 = vector.broadcast %94 : vector<64x1xf32> to vector<64x64xf32>
    %96 = arith.subf %92, %95 : vector<64x64xf32>
    %97 = math.exp %96 : vector<64x64xf32>
    %cst_28 = arith.constant dense<0.000000e+00> : vector<64xf32>
    %98 = vector.multi_reduction <add>, %97, %cst_28 [1] : vector<64x64xf32> to vector<64xf32>
    %99 = vector.shape_cast %98 : vector<64xf32> to vector<64x1xf32>
    %100 = tpu.reciprocal %99 {approx = true} : vector<64x1xf32> -> vector<64x1xf32>
    %101 = vector.broadcast %100 : vector<64x1xf32> to vector<64x64xf32>
    %102 = arith.mulf %97, %101 : vector<64x64xf32>
    %103 = vector.extract_strided_slice %89 {offsets = [0, 0], sizes = [64, 64], strides = [1, 1]} : vector<64x256xf32> to vector<64x64xf32>
    %cst_29 = arith.constant dense<0.000000e+00> : vector<64x64xf32>
    %104 = tpu.matmul %102, %103, %cst_29 {dimension_numbers = #tpu.dot_dimension_numbers<[1], [0], [0], [1], [0, 0, 1, 1], [], []>} : vector<64x64xf32>, vector<64x64xf32>, vector<64x64xf32> -> vector<64x64xf32>
    %105 = vector.extract_strided_slice %87 {offsets = [0, 16], sizes = [64, 16], strides = [1, 1]} : vector<64x64xf32> to vector<64x16xf32>
    %106 = vector.extract_strided_slice %88 {offsets = [0, 16], sizes = [64, 16], strides = [1, 1]} : vector<64x64xf32> to vector<64x16xf32>
    %cst_30 = arith.constant dense<0.000000e+00> : vector<64x64xf32>
    %107 = tpu.matmul %105, %106, %cst_30 {dimension_numbers = #tpu.dot_dimension_numbers<[1], [1], [0], [0], [0, 0, 1, 0], [], []>} : vector<64x16xf32>, vector<64x16xf32>, vector<64x64xf32> -> vector<64x64xf32>
    %cst_31 = arith.constant dense<0xFF800000> : vector<64xf32>
    %108 = vector.multi_reduction <maximumf>, %107, %cst_31 [1] : vector<64x64xf32> to vector<64xf32>
    %109 = vector.shape_cast %108 : vector<64xf32> to vector<64x1xf32>
    %110 = vector.broadcast %109 : vector<64x1xf32> to vector<64x64xf32>
    %111 = arith.subf %107, %110 : vector<64x64xf32>
    %112 = math.exp %111 : vector<64x64xf32>
    %cst_32 = arith.constant dense<0.000000e+00> : vector<64xf32>
    %113 = vector.multi_reduction <add>, %112, %cst_32 [1] : vector<64x64xf32> to vector<64xf32>
    %114 = vector.shape_cast %113 : vector<64xf32> to vector<64x1xf32>
    %115 = tpu.reciprocal %114 {approx = true} : vector<64x1xf32> -> vector<64x1xf32>
    %116 = vector.broadcast %115 : vector<64x1xf32> to vector<64x64xf32>
    %117 = arith.mulf %112, %116 : vector<64x64xf32>
    %118 = vector.extract_strided_slice %89 {offsets = [0, 64], sizes = [64, 64], strides = [1, 1]} : vector<64x256xf32> to vector<64x64xf32>
    %cst_33 = arith.constant dense<0.000000e+00> : vector<64x64xf32>
    %119 = tpu.matmul %117, %118, %cst_33 {dimension_numbers = #tpu.dot_dimension_numbers<[1], [0], [0], [1], [0, 0, 1, 1], [], []>} : vector<64x64xf32>, vector<64x64xf32>, vector<64x64xf32> -> vector<64x64xf32>
    %120 = vector.extract_strided_slice %87 {offsets = [0, 32], sizes = [64, 16], strides = [1, 1]} : vector<64x64xf32> to vector<64x16xf32>
    %121 = vector.extract_strided_slice %88 {offsets = [0, 32], sizes = [64, 16], strides = [1, 1]} : vector<64x64xf32> to vector<64x16xf32>
    %cst_34 = arith.constant dense<0.000000e+00> : vector<64x64xf32>
    %122 = tpu.matmul %120, %121, %cst_34 {dimension_numbers = #tpu.dot_dimension_numbers<[1], [1], [0], [0], [0, 0, 1, 0], [], []>} : vector<64x16xf32>, vector<64x16xf32>, vector<64x64xf32> -> vector<64x64xf32>
    %cst_35 = arith.constant dense<0xFF800000> : vector<64xf32>
    %123 = vector.multi_reduction <maximumf>, %122, %cst_35 [1] : vector<64x64xf32> to vector<64xf32>
    %124 = vector.shape_cast %123 : vector<64xf32> to vector<64x1xf32>
    %125 = vector.broadcast %124 : vector<64x1xf32> to vector<64x64xf32>
    %126 = arith.subf %122, %125 : vector<64x64xf32>
    %127 = math.exp %126 : vector<64x64xf32>
    %cst_36 = arith.constant dense<0.000000e+00> : vector<64xf32>
    %128 = vector.multi_reduction <add>, %127, %cst_36 [1] : vector<64x64xf32> to vector<64xf32>
    %129 = vector.shape_cast %128 : vector<64xf32> to vector<64x1xf32>
    %130 = tpu.reciprocal %129 {approx = true} : vector<64x1xf32> -> vector<64x1xf32>
    %131 = vector.broadcast %130 : vector<64x1xf32> to vector<64x64xf32>
    %132 = arith.mulf %127, %131 : vector<64x64xf32>
    %133 = vector.extract_strided_slice %89 {offsets = [0, 128], sizes = [64, 64], strides = [1, 1]} : vector<64x256xf32> to vector<64x64xf32>
    %cst_37 = arith.constant dense<0.000000e+00> : vector<64x64xf32>
    %134 = tpu.matmul %132, %133, %cst_37 {dimension_numbers = #tpu.dot_dimension_numbers<[1], [0], [0], [1], [0, 0, 1, 1], [], []>} : vector<64x64xf32>, vector<64x64xf32>, vector<64x64xf32> -> vector<64x64xf32>
    %135 = vector.extract_strided_slice %87 {offsets = [0, 48], sizes = [64, 16], strides = [1, 1]} : vector<64x64xf32> to vector<64x16xf32>
    %136 = vector.extract_strided_slice %88 {offsets = [0, 48], sizes = [64, 16], strides = [1, 1]} : vector<64x64xf32> to vector<64x16xf32>
    %cst_38 = arith.constant dense<0.000000e+00> : vector<64x64xf32>
    %137 = tpu.matmul %135, %136, %cst_38 {dimension_numbers = #tpu.dot_dimension_numbers<[1], [1], [0], [0], [0, 0, 1, 0], [], []>} : vector<64x16xf32>, vector<64x16xf32>, vector<64x64xf32> -> vector<64x64xf32>
    %cst_39 = arith.constant dense<0xFF800000> : vector<64xf32>
    %138 = vector.multi_reduction <maximumf>, %137, %cst_39 [1] : vector<64x64xf32> to vector<64xf32>
    %139 = vector.shape_cast %138 : vector<64xf32> to vector<64x1xf32>
    %140 = vector.broadcast %139 : vector<64x1xf32> to vector<64x64xf32>
    %141 = arith.subf %137, %140 : vector<64x64xf32>
    %142 = math.exp %141 : vector<64x64xf32>
    %cst_40 = arith.constant dense<0.000000e+00> : vector<64xf32>
    %143 = vector.multi_reduction <add>, %142, %cst_40 [1] : vector<64x64xf32> to vector<64xf32>
    %144 = vector.shape_cast %143 : vector<64xf32> to vector<64x1xf32>
    %145 = tpu.reciprocal %144 {approx = true} : vector<64x1xf32> -> vector<64x1xf32>
    %146 = vector.broadcast %145 : vector<64x1xf32> to vector<64x64xf32>
    %147 = arith.mulf %142, %146 : vector<64x64xf32>
    %148 = vector.extract_strided_slice %89 {offsets = [0, 192], sizes = [64, 64], strides = [1, 1]} : vector<64x256xf32> to vector<64x64xf32>
    %cst_41 = arith.constant dense<0.000000e+00> : vector<64x64xf32>
    %149 = tpu.matmul %147, %148, %cst_41 {dimension_numbers = #tpu.dot_dimension_numbers<[1], [0], [0], [1], [0, 0, 1, 1], [], []>} : vector<64x64xf32>, vector<64x64xf32>, vector<64x64xf32> -> vector<64x64xf32>
    %150 = arith.addf %104, %119 : vector<64x64xf32>
    %151 = arith.addf %134, %149 : vector<64x64xf32>
    %152 = arith.addf %150, %151 : vector<64x64xf32>
    %153 = vector.extract_strided_slice %4 {offsets = [64, 0], sizes = [64, 64], strides = [1, 1]} : vector<128x64xf32> to vector<64x64xf32>
    %154 = arith.addf %153, %152 : vector<64x64xf32>
    %155 = vector.broadcast %16 : vector<1x64xf32> to vector<64x64xf32>
    %156 = arith.addf %154, %155 : vector<64x64xf32>
    %157 = tpu.concatenate %86, %156 in 0 : vector<64x64xf32>, vector<64x64xf32> -> vector<128x64xf32>
    %c11 = arith.constant 11 : index
    %c0_42 = arith.constant 0 : index
    %158 = vector.load %arg5[%c11, %c0_42] : memref<24x128xf32, #tpu.memory_space<vmem>>, vector<1x64xf32>
    %c12 = arith.constant 12 : index
    %c0_43 = arith.constant 0 : index
    %159 = vector.load %arg5[%c12, %c0_43] : memref<24x128xf32, #tpu.memory_space<vmem>>, vector<1x64xf32>
    %cst_44 = arith.constant dense<0.000000e+00> : vector<128xf32>
    %160 = vector.multi_reduction <add>, %157, %cst_44 [1] : vector<128x64xf32> to vector<128xf32>
    %161 = vector.shape_cast %160 : vector<128xf32> to vector<128x1xf32>
    %cst_45 = arith.constant 6.400000e+01 : f32
    %162 = vector.broadcast %cst_45 : f32 to vector<128x1xf32>
    %163 = arith.divf %161, %162 : vector<128x1xf32>
    %164 = arith.mulf %157, %157 : vector<128x64xf32>
    %cst_46 = arith.constant dense<0.000000e+00> : vector<128xf32>
    %165 = vector.multi_reduction <add>, %164, %cst_46 [1] : vector<128x64xf32> to vector<128xf32>
    %166 = vector.shape_cast %165 : vector<128xf32> to vector<128x1xf32>
    %cst_47 = arith.constant 6.400000e+01 : f32
    %167 = vector.broadcast %cst_47 : f32 to vector<128x1xf32>
    %168 = arith.divf %166, %167 : vector<128x1xf32>
    %169 = vector.broadcast %163 : vector<128x1xf32> to vector<128x64xf32>
    %170 = arith.subf %157, %169 : vector<128x64xf32>
    %171 = arith.mulf %163, %163 : vector<128x1xf32>
    %172 = arith.subf %168, %171 : vector<128x1xf32>
    %cst_48 = arith.constant 9.99999974E-6 : f32
    %173 = vector.broadcast %cst_48 : f32 to vector<128x1xf32>
    %174 = arith.addf %172, %173 : vector<128x1xf32>
    %175 = math.rsqrt %174 : vector<128x1xf32>
    %176 = vector.broadcast %175 : vector<128x1xf32> to vector<128x64xf32>
    %177 = arith.mulf %170, %176 : vector<128x64xf32>
    %178 = vector.broadcast %158 : vector<1x64xf32> to vector<128x64xf32>
    %179 = arith.mulf %177, %178 : vector<128x64xf32>
    %180 = vector.broadcast %159 : vector<1x64xf32> to vector<128x64xf32>
    %181 = arith.addf %179, %180 : vector<128x64xf32>
    %c0_49 = arith.constant 0 : index
    %c0_50 = arith.constant 0 : index
    %182 = vector.load %arg4[%c0_49, %c0_50] : memref<128x128xf32, #tpu.memory_space<vmem>>, vector<64x128xf32>
    %cst_51 = arith.constant dense<0.000000e+00> : vector<128x128xf32>
    %183 = tpu.matmul %181, %182, %cst_51 {dimension_numbers = #tpu.dot_dimension_numbers<[1], [0], [0], [1], [0, 0, 1, 1], [], []>} : vector<128x64xf32>, vector<64x128xf32>, vector<128x128xf32> -> vector<128x128xf32>
    %c13 = arith.constant 13 : index
    %c0_52 = arith.constant 0 : index
    %184 = vector.load %arg5[%c13, %c0_52] : memref<24x128xf32, #tpu.memory_space<vmem>>, vector<1x128xf32>
    %185 = vector.broadcast %184 : vector<1x128xf32> to vector<128x128xf32>
    %186 = arith.addf %183, %185 : vector<128x128xf32>
    %cst_53 = arith.constant 0.000000e+00 : f32
    %187 = vector.broadcast %cst_53 : f32 to vector<128x128xf32>
    %188 = arith.maximumf %186, %187 : vector<128x128xf32>
    %c128_54 = arith.constant 128 : index
    %c0_55 = arith.constant 0 : index
    %189 = vector.load %arg3[%c128_54, %c0_55] : memref<256x64xf32, #tpu.memory_space<vmem>>, vector<128x64xf32>
    %cst_56 = arith.constant dense<0.000000e+00> : vector<128x64xf32>
    %190 = tpu.matmul %188, %189, %cst_56 {dimension_numbers = #tpu.dot_dimension_numbers<[1], [0], [0], [1], [0, 0, 1, 1], [], []>} : vector<128x128xf32>, vector<128x64xf32>, vector<128x64xf32> -> vector<128x64xf32>
    %c14 = arith.constant 14 : index
    %c0_57 = arith.constant 0 : index
    %191 = vector.load %arg5[%c14, %c0_57] : memref<24x128xf32, #tpu.memory_space<vmem>>, vector<1x64xf32>
    %192 = vector.broadcast %191 : vector<1x64xf32> to vector<128x64xf32>
    %193 = arith.addf %190, %192 : vector<128x64xf32>
    %194 = arith.addf %181, %193 : vector<128x64xf32>
    %c15 = arith.constant 15 : index
    %c0_58 = arith.constant 0 : index
    %195 = vector.load %arg5[%c15, %c0_58] : memref<24x128xf32, #tpu.memory_space<vmem>>, vector<1x64xf32>
    %c16 = arith.constant 16 : index
    %c0_59 = arith.constant 0 : index
    %196 = vector.load %arg5[%c16, %c0_59] : memref<24x128xf32, #tpu.memory_space<vmem>>, vector<1x64xf32>
    %cst_60 = arith.constant dense<0.000000e+00> : vector<128xf32>
    %197 = vector.multi_reduction <add>, %194, %cst_60 [1] : vector<128x64xf32> to vector<128xf32>
    %198 = vector.shape_cast %197 : vector<128xf32> to vector<128x1xf32>
    %cst_61 = arith.constant 6.400000e+01 : f32
    %199 = vector.broadcast %cst_61 : f32 to vector<128x1xf32>
    %200 = arith.divf %198, %199 : vector<128x1xf32>
    %201 = arith.mulf %194, %194 : vector<128x64xf32>
    %cst_62 = arith.constant dense<0.000000e+00> : vector<128xf32>
    %202 = vector.multi_reduction <add>, %201, %cst_62 [1] : vector<128x64xf32> to vector<128xf32>
    %203 = vector.shape_cast %202 : vector<128xf32> to vector<128x1xf32>
    %cst_63 = arith.constant 6.400000e+01 : f32
    %204 = vector.broadcast %cst_63 : f32 to vector<128x1xf32>
    %205 = arith.divf %203, %204 : vector<128x1xf32>
    %206 = vector.broadcast %200 : vector<128x1xf32> to vector<128x64xf32>
    %207 = arith.subf %194, %206 : vector<128x64xf32>
    %208 = arith.mulf %200, %200 : vector<128x1xf32>
    %209 = arith.subf %205, %208 : vector<128x1xf32>
    %cst_64 = arith.constant 9.99999974E-6 : f32
    %210 = vector.broadcast %cst_64 : f32 to vector<128x1xf32>
    %211 = arith.addf %209, %210 : vector<128x1xf32>
    %212 = math.rsqrt %211 : vector<128x1xf32>
    %213 = vector.broadcast %212 : vector<128x1xf32> to vector<128x64xf32>
    %214 = arith.mulf %207, %213 : vector<128x64xf32>
    %215 = vector.broadcast %195 : vector<1x64xf32> to vector<128x64xf32>
    %216 = arith.mulf %214, %215 : vector<128x64xf32>
    %217 = vector.broadcast %196 : vector<1x64xf32> to vector<128x64xf32>
    %218 = arith.addf %216, %217 : vector<128x64xf32>
    %c0_65 = arith.constant 0 : index
    %c0_66 = arith.constant 0 : index
    %219 = vector.load %arg5[%c0_65, %c0_66] : memref<24x128xf32, #tpu.memory_space<vmem>>, vector<8x128xf32>
    %cst_67 = arith.constant dense<0.000000e+00> : vector<8x64xf32>
    %220 = tpu.matmul %219, %218, %cst_67 {dimension_numbers = #tpu.dot_dimension_numbers<[1], [0], [0], [1], [0, 0, 1, 1], [], []>} : vector<8x128xf32>, vector<128x64xf32>, vector<8x64xf32> -> vector<8x64xf32>
    %c64 = arith.constant 64 : index
    %c0_68 = arith.constant 0 : index
    %221 = vector.load %arg4[%c64, %c0_68] : memref<128x128xf32, #tpu.memory_space<vmem>>, vector<64x128xf32>
    %cst_69 = arith.constant dense<0.000000e+00> : vector<8x128xf32>
    %222 = tpu.matmul %220, %221, %cst_69 {dimension_numbers = #tpu.dot_dimension_numbers<[1], [0], [0], [1], [0, 0, 1, 1], [], []>} : vector<8x64xf32>, vector<64x128xf32>, vector<8x128xf32> -> vector<8x128xf32>
    %c17 = arith.constant 17 : index
    %c0_70 = arith.constant 0 : index
    %223 = vector.load %arg5[%c17, %c0_70] : memref<24x128xf32, #tpu.memory_space<vmem>>, vector<1x128xf32>
    %224 = vector.broadcast %223 : vector<1x128xf32> to vector<8x128xf32>
    %225 = arith.addf %222, %224 : vector<8x128xf32>
    %c0_71 = arith.constant 0 : index
    %c0_72 = arith.constant 0 : index
    %226 = vector.load %arg6[%c0_71, %c0_72] : memref<8x128xf32, #tpu.memory_space<vmem>>, vector<8x128xf32>
    tpu.vector_store %arg6[%c0_71, %c0_72], %225 {strides = array<i32>} : memref<8x128xf32, #tpu.memory_space<vmem>>, vector<8x128xf32>,
    return
  }
  func.func @transform_0(%arg0: i32) -> (i32, i32) {
    %c0_i32 = arith.constant 0 : i32
    %c0_i32_0 = arith.constant 0 : i32
    %c0_i32_1 = arith.constant 0 : i32
    return %c0_i32, %c0_i32_0 : i32, i32
  }
  func.func @transform_1(%arg0: i32) -> (i32, i32) {
    %c0_i32 = arith.constant 0 : i32
    %c0_i32_0 = arith.constant 0 : i32
    %c0_i32_1 = arith.constant 0 : i32
    return %c0_i32, %c0_i32_0 : i32, i32
  }
  func.func @transform_2(%arg0: i32) -> (i32, i32) {
    %c0_i32 = arith.constant 0 : i32
    %c0_i32_0 = arith.constant 0 : i32
    %c0_i32_1 = arith.constant 0 : i32
    return %c0_i32, %c0_i32_0 : i32, i32
  }
  func.func @transform_3(%arg0: i32) -> (i32, i32) {
    %c0_i32 = arith.constant 0 : i32
    %c0_i32_0 = arith.constant 0 : i32
    %c0_i32_1 = arith.constant 0 : i32
    return %c0_i32, %c0_i32_0 : i32, i32
  }
  func.func @transform_4(%arg0: i32) -> (i32, i32) {
    %c0_i32 = arith.constant 0 : i32
    %c0_i32_0 = arith.constant 0 : i32
    %c0_i32_1 = arith.constant 0 : i32
    return %c0_i32, %c0_i32_0 : i32, i32
  }
  func.func @transform_5(%arg0: i32) -> (i32, i32) {
    %c0_i32 = arith.constant 0 : i32
    %c0_i32_0 = arith.constant 0 : i32
    %c0_i32_1 = arith.constant 0 : i32
    return %c0_i32, %c0_i32_0 : i32, i32
  }
}

</mosaic_0001>

<llo_original>
// kernel: simple_vit_forward.1
$region0: #{simple_vit_forward.1}
  #allocation0 [shape = 'u32[]', space=smem, size = 0x4, offset = 0x4, fixed_abs, tag = 'smem constant byte address 0x4 - core index']
  #allocation1 [shape = 'u32[72,128]{1,0:T(1,128)}', space=vmem, size = 0x9000, scoped, tag = 'internal scratch']
  %s0 = inlined_call_operand.vmem [shape: f32[128,192], index: 0, kind: input, shape index: {}]
  %s1 = inlined_call_operand.vmem [shape: f32[64,384], index: 1, kind: input, shape index: {}]
  %s2 = inlined_call_operand.vmem [shape: f32[256,64], index: 2, kind: input, shape index: {}]
  %s3 = inlined_call_operand.vmem [shape: f32[128,128], index: 3, kind: input, shape index: {}]
  %s4 = inlined_call_operand.vmem [shape: f32[24,128], index: 4, kind: input, shape index: {}]
  %s5 = inlined_call_operand.vmem [shape: f32[8,128], index: 5, kind: output, shape index: {}]
  %s6 = sld [smem:[#allocation0]]
  $region30: #{simple_vit_forward.1} parent=0
    _
  %s8 = ssub.s32 1, %s6
  %s9 = scalar_select 0, %s8, %s6
  // Predicated region
  $region2: #{simple_vit_forward.1} parent=0 // pred_check
    _
  $region3: #{simple_vit_forward.1} parent=0 // pred_check_branch
    %11 = sbr.rel (0) target = $region5
  $region4: #{simple_vit_forward.1} parent=0 // pred_region
    _
  $region5: #{simple_vit_forward.1} parent=0 // pred_fallthru
    _
  // Predicated region
  $region6: #{simple_vit_forward.1} parent=0 // pred_check
    _
  $region7: #{simple_vit_forward.1} parent=0 // pred_check_branch
    %13 = sbr.rel (0) target = $region9
  $region8: #{simple_vit_forward.1} parent=0 // pred_region
    _
  $region9: #{simple_vit_forward.1} parent=0 // pred_fallthru
    _
  // Predicated region
  $region10: #{simple_vit_forward.1} parent=0 // pred_check
    _
  $region11: #{simple_vit_forward.1} parent=0 // pred_check_branch
    %15 = sbr.rel (0) target = $region13
  $region12: #{simple_vit_forward.1} parent=0 // pred_region
    _
  $region13: #{simple_vit_forward.1} parent=0 // pred_fallthru
    _
  // Predicated region
  $region14: #{simple_vit_forward.1} parent=0 // pred_check
    _
  $region15: #{simple_vit_forward.1} parent=0 // pred_check_branch
    %17 = sbr.rel (0) target = $region17
  $region16: #{simple_vit_forward.1} parent=0 // pred_region
    _
  $region17: #{simple_vit_forward.1} parent=0 // pred_fallthru
    _
  // Predicated region
  $region18: #{simple_vit_forward.1} parent=0 // pred_check
    _
  $region19: #{simple_vit_forward.1} parent=0 // pred_check_branch
    %19 = sbr.rel (0) target = $region21
  $region20: #{simple_vit_forward.1} parent=0 // pred_region
    _
  $region21: #{simple_vit_forward.1} parent=0 // pred_fallthru
    _
  %v20 = vld [vmem:[%s2] sm:$0xff]
  %v21 = vld [vmem:[%s2 + $0x8] sm:$0xff]
  %v22 = vld [vmem:[%s2 + $0x10] sm:$0xff]
  %v23 = vld [vmem:[%s2 + $0x18] sm:$0xff]
  %v24 = vld [vmem:[%s2 + $0x20] sm:$0xff]
  %v25 = vld [vmem:[%s2 + $0x28] sm:$0xff]
  %v26 = vld [vmem:[%s2 + $0x30] sm:$0xff]
  %v27 = vld [vmem:[%s2 + $0x38] sm:$0xff]
  %v28 = vld [vmem:[%s2 + $0x40] sm:$0xff]
  %v29 = vld [vmem:[%s2 + $0x48] sm:$0xff]
  %v30 = vld [vmem:[%s2 + $0x50] sm:$0xff]
  %v31 = vld [vmem:[%s2 + $0x58] sm:$0xff]
  %v32 = vld [vmem:[%s2 + $0x60] sm:$0xff]
  %v33 = vld [vmem:[%s2 + $0x68] sm:$0xff]
  %v34 = vld [vmem:[%s2 + $0x70] sm:$0xff]
  %v35 = vld [vmem:[%s2 + $0x78] sm:$0xff]
  %v36 = vld [vmem:[%s0] sm:$0xff]
  %v37 = vld [vmem:[%s0 + $0x10] sm:$0xff]
  %v38 = vld [vmem:[%s0 + $0x20] sm:$0xff]
  %v39 = vld [vmem:[%s0 + $0x30] sm:$0xff]
  %v40 = vld [vmem:[%s0 + $0x40] sm:$0xff]
  %v41 = vld [vmem:[%s0 + $0x50] sm:$0xff]
  %v42 = vld [vmem:[%s0 + $0x60] sm:$0xff]
  %v43 = vld [vmem:[%s0 + $0x70] sm:$0xff]
  %v44 = vld [vmem:[%s0 + $0x80] sm:$0xff]
  %v45 = vld [vmem:[%s0 + $0x90] sm:$0xff]
  %v46 = vld [vmem:[%s0 + $0xa0] sm:$0xff]
  %v47 = vld [vmem:[%s0 + $0xb0] sm:$0xff]
  %v48 = vld [vmem:[%s0 + $0xc0] sm:$0xff]
  %v49 = vld [vmem:[%s0 + $0xd0] sm:$0xff]
  %v50 = vld [vmem:[%s0 + $0xe0] sm:$0xff]
  %v51 = vld [vmem:[%s0 + $0xf0] sm:$0xff]
  %v52 = vld [vmem:[%s0 + $0x8] sm:$0xff]
  %v53 = vld [vmem:[%s0 + $0x18] sm:$0xff]
  %v54 = vld [vmem:[%s0 + $0x28] sm:$0xff]
  %v55 = vld [vmem:[%s0 + $0x38] sm:$0xff]
  %v56 = vld [vmem:[%s0 + $0x48] sm:$0xff]
  %v57 = vld [vmem:[%s0 + $0x58] sm:$0xff]
  %v58 = vld [vmem:[%s0 + $0x68] sm:$0xff]
  %v59 = vld [vmem:[%s0 + $0x78] sm:$0xff]
  %v60 = vld [vmem:[%s0 + $0x88] sm:$0xff]
  %v61 = vld [vmem:[%s0 + $0x98] sm:$0xff]
  %v62 = vld [vmem:[%s0 + $0xa8] sm:$0xff]
  %v63 = vld [vmem:[%s0 + $0xb8] sm:$0xff]
  %v64 = vld [vmem:[%s0 + $0xc8] sm:$0xff]
  %v65 = vld [vmem:[%s0 + $0xd8] sm:$0xff]
  %v66 = vld [vmem:[%s0 + $0xe8] sm:$0xff]
  %v67 = vld [vmem:[%s0 + $0xf8] sm:$0xff]
  %68 = vmatpush.msra.mxu0 %v35
  %69 = vmatpush.msra.mxu0 %v34
  %70 = vmatpush.msra.mxu0 %v33
  %71 = vmatpush.msra.mxu0 %v32
  %72 = vmatpush.msra.mxu0 %v31
  %73 = vmatpush.msra.mxu0 %v30
  %74 = vmatpush.msra.mxu0 %v29
  %75 = vmatpush.msra.mxu0 %v28
  %76 = vmatpush.msra.mxu0 %v27
  %77 = vmatpush.msra.mxu0 %v26
  %78 = vmatpush.msra.mxu0 %v25
  %79 = vmatpush.msra.mxu0 %v24
  %80 = vmatpush.msra.mxu0 %v23
  %81 = vmatpush.msra.mxu0 %v22
  %82 = vmatpush.msra.mxu0 %v21
  %83 = vmatpush.msra.mxu0 %v20
  %84 = vmatmul.f32.gmra.mxu0 %v36
  %v85 = vpop.f32.mrf.mxu0
  %v86 = vadd.f32 %v52, %v85
  %87 = vmatmul.f32.gmra.mxu0 %v37
  %v88 = vpop.f32.mrf.mxu0
  %v89 = vadd.f32 %v53, %v88
  %90 = vmatmul.f32.gmra.mxu0 %v38
  %v91 = vpop.f32.mrf.mxu0
  %v92 = vadd.f32 %v54, %v91
  %93 = vmatmul.f32.gmra.mxu0 %v39
  %v94 = vpop.f32.mrf.mxu0
  %v95 = vadd.f32 %v55, %v94
  %96 = vmatmul.f32.gmra.mxu0 %v40
  %v97 = vpop.f32.mrf.mxu0
  %v98 = vadd.f32 %v56, %v97
  %99 = vmatmul.f32.gmra.mxu0 %v41
  %v100 = vpop.f32.mrf.mxu0
  %v101 = vadd.f32 %v57, %v100
  %102 = vmatmul.f32.gmra.mxu0 %v42
  %v103 = vpop.f32.mrf.mxu0
  %v104 = vadd.f32 %v58, %v103
  %105 = vmatmul.f32.gmra.mxu0 %v43
  %v106 = vpop.f32.mrf.mxu0
  %v107 = vadd.f32 %v59, %v106
  %108 = vmatmul.f32.gmra.mxu0 %v44
  %v109 = vpop.f32.mrf.mxu0
  %v110 = vadd.f32 %v60, %v109
  %111 = vmatmul.f32.gmra.mxu0 %v45
  %v112 = vpop.f32.mrf.mxu0
  %v113 = vadd.f32 %v61, %v112
  %114 = vmatmul.f32.gmra.mxu0 %v46
  %v115 = vpop.f32.mrf.mxu0
  %v116 = vadd.f32 %v62, %v115
  %117 = vmatmul.f32.gmra.mxu0 %v47
  %v118 = vpop.f32.mrf.mxu0
  %v119 = vadd.f32 %v63, %v118
  %120 = vmatmul.f32.gmra.mxu0 %v48
  %v121 = vpop.f32.mrf.mxu0
  %v122 = vadd.f32 %v64, %v121
  %123 = vmatmul.f32.gmra.mxu0 %v49
  %v124 = vpop.f32.mrf.mxu0
  %v125 = vadd.f32 %v65, %v124
  %126 = vmatmul.f32.gmra.mxu0 %v50
  %v127 = vpop.f32.mrf.mxu0
  %v128 = vadd.f32 %v66, %v127
  %129 = vmatmul.f32.gmra.mxu0 %v51
  %v130 = vpop.f32.mrf.mxu0
  %v131 = vadd.f32 %v67, %v130
  %132 = vdwg.mxu0
  %v133 = vld [vmem:[%s1] sm:$0xff]
  %v134 = vld [vmem:[%s1 + $0x8] sm:$0xff]
  %v135 = vld [vmem:[%s1 + $0x10] sm:$0xff]
  %v136 = vld [vmem:[%s1 + $0x18] sm:$0xff]
  %v137 = vld [vmem:[%s1 + $0x20] sm:$0xff]
  %v138 = vld [vmem:[%s1 + $0x28] sm:$0xff]
  %v139 = vld [vmem:[%s1 + $0x30] sm:$0xff]
  %v140 = vld [vmem:[%s1 + $0x38] sm:$0xff]
  %v141 = vld [vmem:[%s1 + $0x40] sm:$0xff]
  %v142 = vld [vmem:[%s1 + $0x48] sm:$0xff]
  %v143 = vld [vmem:[%s1 + $0x50] sm:$0xff]
  %v144 = vld [vmem:[%s1 + $0x58] sm:$0xff]
  %v145 = vld [vmem:[%s1 + $0x60] sm:$0xff]
  %v146 = vld [vmem:[%s1 + $0x68] sm:$0xff]
  %v147 = vld [vmem:[%s1 + $0x70] sm:$0xff]
  %v148 = vld [vmem:[%s1 + $0x78] sm:$0xff]
  %v149 = vld [vmem:[%s1 + $0x80] sm:$0xff]
  %v150 = vld [vmem:[%s1 + $0x88] sm:$0xff]
  %v151 = vld [vmem:[%s1 + $0x90] sm:$0xff]
  %v152 = vld [vmem:[%s1 + $0x98] sm:$0xff]
  %v153 = vld [vmem:[%s1 + $0xa0] sm:$0xff]
  %v154 = vld [vmem:[%s1 + $0xa8] sm:$0xff]
  %v155 = vld [vmem:[%s1 + $0xb0] sm:$0xff]
  %v156 = vld [vmem:[%s1 + $0xb8] sm:$0xff]
  %vm157 = vcmask 523264
  %v159 = vsel %vm157, %v86, 0
  %v162 = vsel %vm157, %v89, 0
  %v165 = vsel %vm157, %v92, 0
  %v168 = vsel %vm157, %v95, 0
  %v171 = vsel %vm157, %v98, 0
  %v174 = vsel %vm157, %v101, 0
  %v177 = vsel %vm157, %v104, 0
  %v180 = vsel %vm157, %v107, 0
  %v183 = vsel %vm157, %v110, 0
  %v186 = vsel %vm157, %v113, 0
  %v189 = vsel %vm157, %v116, 0
  %v192 = vsel %vm157, %v119, 0
  %v195 = vsel %vm157, %v122, 0
  %v198 = vsel %vm157, %v125, 0
  %v201 = vsel %vm157, %v128, 0
  %v204 = vsel %vm157, %v131, 0
  %206 = vmatpush.msra.mxu0 0.0
  %207 = vmatpush.msra.mxu0 0.0
  %208 = vmatpush.msra.mxu0 0.0
  %209 = vmatpush.msra.mxu0 0.0
  %210 = vmatpush.msra.mxu0 0.0
  %211 = vmatpush.msra.mxu0 0.0
  %212 = vmatpush.msra.mxu0 0.0
  %213 = vmatpush.msra.mxu0 0.0
  %214 = vmatpush.msra.mxu0 %v154
  %215 = vmatpush.msra.mxu0 %v151
  %216 = vmatpush.msra.mxu0 %v148
  %217 = vmatpush.msra.mxu0 %v145
  %218 = vmatpush.msra.mxu0 %v142
  %219 = vmatpush.msra.mxu0 %v139
  %220 = vmatpush.msra.mxu0 %v136
  %221 = vmatpush.msra.mxu0 %v133
  %222 = vmatmul.f32.gmra.mxu0 %v159
  %v223 = vpop.f32.mrf.mxu0
  %v224 = vadd.f32 0.0, %v223
  %225 = vmatmul.f32.gmra.mxu0 %v162
  %v226 = vpop.f32.mrf.mxu0
  %v227 = vadd.f32 0.0, %v226
  %228 = vmatmul.f32.gmra.mxu0 %v165
  %v229 = vpop.f32.mrf.mxu0
  %v230 = vadd.f32 0.0, %v229
  %231 = vmatmul.f32.gmra.mxu0 %v168
  %v232 = vpop.f32.mrf.mxu0
  %v233 = vadd.f32 0.0, %v232
  %234 = vmatmul.f32.gmra.mxu0 %v171
  %v235 = vpop.f32.mrf.mxu0
  %v236 = vadd.f32 0.0, %v235
  %237 = vmatmul.f32.gmra.mxu0 %v174
  %v238 = vpop.f32.mrf.mxu0
  %v239 = vadd.f32 0.0, %v238
  %240 = vmatmul.f32.gmra.mxu0 %v177
  %v241 = vpop.f32.mrf.mxu0
  %v242 = vadd.f32 0.0, %v241
  %243 = vmatmul.f32.gmra.mxu0 %v180
  %v244 = vpop.f32.mrf.mxu0
  %v245 = vadd.f32 0.0, %v244
  %246 = vmatmul.f32.gmra.mxu0 %v183
  %v247 = vpop.f32.mrf.mxu0
  %v248 = vadd.f32 0.0, %v247
  %249 = vmatmul.f32.gmra.mxu0 %v186
  %v250 = vpop.f32.mrf.mxu0
  %v251 = vadd.f32 0.0, %v250
  %252 = vmatmul.f32.gmra.mxu0 %v189
  %v253 = vpop.f32.mrf.mxu0
  %v254 = vadd.f32 0.0, %v253
  %255 = vmatmul.f32.gmra.mxu0 %v192
  %v256 = vpop.f32.mrf.mxu0
  %v257 = vadd.f32 0.0, %v256
  %258 = vmatmul.f32.gmra.mxu0 %v195
  %v259 = vpop.f32.mrf.mxu0
  %v260 = vadd.f32 0.0, %v259
  %261 = vmatmul.f32.gmra.mxu0 %v198
  %v262 = vpop.f32.mrf.mxu0
  %v263 = vadd.f32 0.0, %v262
  %264 = vmatmul.f32.gmra.mxu0 %v201
  %v265 = vpop.f32.mrf.mxu0
  %v266 = vadd.f32 0.0, %v265
  %267 = vmatmul.f32.gmra.mxu0 %v204
  %v268 = vpop.f32.mrf.mxu0
  %v269 = vadd.f32 0.0, %v268
  %270 = vdwg.mxu0
  %271 = vmatpush.msra.mxu0 0.0
  %272 = vmatpush.msra.mxu0 0.0
  %273 = vmatpush.msra.mxu0 0.0
  %274 = vmatpush.msra.mxu0 0.0
  %275 = vmatpush.msra.mxu0 0.0
  %276 = vmatpush.msra.mxu0 0.0
  %277 = vmatpush.msra.mxu0 0.0
  %278 = vmatpush.msra.mxu0 0.0
  %279 = vmatpush.msra.mxu0 %v155
  %280 = vmatpush.msra.mxu0 %v152
  %281 = vmatpush.msra.mxu0 %v149
  %282 = vmatpush.msra.mxu0 %v146
  %283 = vmatpush.msra.mxu0 %v143
  %284 = vmatpush.msra.mxu0 %v140
  %285 = vmatpush.msra.mxu0 %v137
  %286 = vmatpush.msra.mxu0 %v134
  %287 = vmatmul.f32.gmra.mxu0 %v159
  %v288 = vpop.f32.mrf.mxu0
  %v289 = vadd.f32 0.0, %v288
  %290 = vmatmul.f32.gmra.mxu0 %v162
  %v291 = vpop.f32.mrf.mxu0
  %v292 = vadd.f32 0.0, %v291
  %293 = vmatmul.f32.gmra.mxu0 %v165
  %v294 = vpop.f32.mrf.mxu0
  %v295 = vadd.f32 0.0, %v294
  %296 = vmatmul.f32.gmra.mxu0 %v168
  %v297 = vpop.f32.mrf.mxu0
  %v298 = vadd.f32 0.0, %v297
  %299 = vmatmul.f32.gmra.mxu0 %v171
  %v300 = vpop.f32.mrf.mxu0
  %v301 = vadd.f32 0.0, %v300
  %302 = vmatmul.f32.gmra.mxu0 %v174
  %v303 = vpop.f32.mrf.mxu0
  %v304 = vadd.f32 0.0, %v303
  %305 = vmatmul.f32.gmra.mxu0 %v177
  %v306 = vpop.f32.mrf.mxu0
  %v307 = vadd.f32 0.0, %v306
  %308 = vmatmul.f32.gmra.mxu0 %v180
  %v309 = vpop.f32.mrf.mxu0
  %v310 = vadd.f32 0.0, %v309
  %311 = vmatmul.f32.gmra.mxu0 %v183
  %v312 = vpop.f32.mrf.mxu0
  %v313 = vadd.f32 0.0, %v312
  %314 = vmatmul.f32.gmra.mxu0 %v186
  %v315 = vpop.f32.mrf.mxu0
  %v316 = vadd.f32 0.0, %v315
  %317 = vmatmul.f32.gmra.mxu0 %v189
  %v318 = vpop.f32.mrf.mxu0
  %v319 = vadd.f32 0.0, %v318
  %320 = vmatmul.f32.gmra.mxu0 %v192
  %v321 = vpop.f32.mrf.mxu0
  %v322 = vadd.f32 0.0, %v321
  %323 = vmatmul.f32.gmra.mxu0 %v195
  %v324 = vpop.f32.mrf.mxu0
  %v325 = vadd.f32 0.0, %v324
  %326 = vmatmul.f32.gmra.mxu0 %v198
  %v327 = vpop.f32.mrf.mxu0
  %v328 = vadd.f32 0.0, %v327
  %329 = vmatmul.f32.gmra.mxu0 %v201
  %v330 = vpop.f32.mrf.mxu0
  %v331 = vadd.f32 0.0, %v330
  %332 = vmatmul.f32.gmra.mxu0 %v204
  %v333 = vpop.f32.mrf.mxu0
  %v334 = vadd.f32 0.0, %v333
  %335 = vdwg.mxu0
  %336 = vmatpush.msra.mxu0 0.0
  %337 = vmatpush.msra.mxu0 0.0
  %338 = vmatpush.msra.mxu0 0.0
  %339 = vmatpush.msra.mxu0 0.0
  %340 = vmatpush.msra.mxu0 0.0
  %341 = vmatpush.msra.mxu0 0.0
  %342 = vmatpush.msra.mxu0 0.0
  %343 = vmatpush.msra.mxu0 0.0
  %344 = vmatpush.msra.mxu0 %v156
  %345 = vmatpush.msra.mxu0 %v153
  %346 = vmatpush.msra.mxu0 %v150
  %347 = vmatpush.msra.mxu0 %v147
  %348 = vmatpush.msra.mxu0 %v144
  %349 = vmatpush.msra.mxu0 %v141
  %350 = vmatpush.msra.mxu0 %v138
  %351 = vmatpush.msra.mxu0 %v135
  %352 = vmatmul.f32.gmra.mxu0 %v159
  %v353 = vpop.f32.mrf.mxu0
  %v354 = vadd.f32 0.0, %v353
  %355 = vmatmul.f32.gmra.mxu0 %v162
  %v356 = vpop.f32.mrf.mxu0
  %v357 = vadd.f32 0.0, %v356
  %358 = vmatmul.f32.gmra.mxu0 %v165
  %v359 = vpop.f32.mrf.mxu0
  %v360 = vadd.f32 0.0, %v359
  %361 = vmatmul.f32.gmra.mxu0 %v168
  %v362 = vpop.f32.mrf.mxu0
  %v363 = vadd.f32 0.0, %v362
  %364 = vmatmul.f32.gmra.mxu0 %v171
  %v365 = vpop.f32.mrf.mxu0
  %v366 = vadd.f32 0.0, %v365
  %367 = vmatmul.f32.gmra.mxu0 %v174
  %v368 = vpop.f32.mrf.mxu0
  %v369 = vadd.f32 0.0, %v368
  %370 = vmatmul.f32.gmra.mxu0 %v177
  %v371 = vpop.f32.mrf.mxu0
  %v372 = vadd.f32 0.0, %v371
  %373 = vmatmul.f32.gmra.mxu0 %v180
  %v374 = vpop.f32.mrf.mxu0
  %v375 = vadd.f32 0.0, %v374
  %376 = vmatmul.f32.gmra.mxu0 %v183
  %v377 = vpop.f32.mrf.mxu0
  %v378 = vadd.f32 0.0, %v377
  %379 = vmatmul.f32.gmra.mxu0 %v186
  %v380 = vpop.f32.mrf.mxu0
  %v381 = vadd.f32 0.0, %v380
  %382 = vmatmul.f32.gmra.mxu0 %v189
  %v383 = vpop.f32.mrf.mxu0
  %v384 = vadd.f32 0.0, %v383
  %385 = vmatmul.f32.gmra.mxu0 %v192
  %v386 = vpop.f32.mrf.mxu0
  %v387 = vadd.f32 0.0, %v386
  %388 = vmatmul.f32.gmra.mxu0 %v195
  %v389 = vpop.f32.mrf.mxu0
  %v390 = vadd.f32 0.0, %v389
  %391 = vmatmul.f32.gmra.mxu0 %v198
  %v392 = vpop.f32.mrf.mxu0
  %v393 = vadd.f32 0.0, %v392
  %394 = vmatmul.f32.gmra.mxu0 %v201
  %v395 = vpop.f32.mrf.mxu0
  %v396 = vadd.f32 0.0, %v395
  %397 = vmatmul.f32.gmra.mxu0 %v204
  %v398 = vpop.f32.mrf.mxu0
  %v399 = vadd.f32 0.0, %v398
  %400 = vdwg.mxu0
  %v401 = vld [vmem:[%s4 + $0x8] sm:$0x1]
  %v402 = vperm.slane %v401, 0
  %v403 = vadd.f32 %v224, %v402
  %v404 = vadd.f32 %v227, %v402
  %v405 = vadd.f32 %v230, %v402
  %v406 = vadd.f32 %v233, %v402
  %v407 = vadd.f32 %v236, %v402
  %v408 = vadd.f32 %v239, %v402
  %v409 = vadd.f32 %v242, %v402
  %v410 = vadd.f32 %v245, %v402
  %v411 = vadd.f32 %v248, %v402
  %v412 = vadd.f32 %v251, %v402
  %v413 = vadd.f32 %v254, %v402
  %v414 = vadd.f32 %v257, %v402
  %v415 = vadd.f32 %v260, %v402
  %v416 = vadd.f32 %v263, %v402
  %v417 = vadd.f32 %v266, %v402
  %v418 = vadd.f32 %v269, %v402
  %v419 = vld [vmem:[%s4 + $0x9] sm:$0x1]
  %v420 = vperm.slane %v419, 0
  %422 = vrot.lane.b32.xlu0 %v420, 64
  %v423 = vpop.permute.xlu0 %422
  %v425 = vadd.f32 %v224, %v423
  %v426 = vadd.f32 %v227, %v423
  %v427 = vadd.f32 %v230, %v423
  %v428 = vadd.f32 %v233, %v423
  %v429 = vadd.f32 %v236, %v423
  %v430 = vadd.f32 %v239, %v423
  %v431 = vadd.f32 %v242, %v423
  %v432 = vadd.f32 %v245, %v423
  %v433 = vadd.f32 %v248, %v423
  %v434 = vadd.f32 %v251, %v423
  %v435 = vadd.f32 %v254, %v423
  %v436 = vadd.f32 %v257, %v423
  %v437 = vadd.f32 %v260, %v423
  %v438 = vadd.f32 %v263, %v423
  %v439 = vadd.f32 %v266, %v423
  %v440 = vadd.f32 %v269, %v423
  %v441 = vld [vmem:[%s4 + $0xa] sm:$0x1]
  %450 = vrot.lane.b32.xlu0 %v425, 64
  %v451 = vpop.permute.xlu0 %450
  %452 = vrot.lane.b32.xlu0 %v426, 64
  %v453 = vpop.permute.xlu0 %452
  %454 = vrot.lane.b32.xlu0 %v427, 64
  %v455 = vpop.permute.xlu0 %454
  %456 = vrot.lane.b32.xlu0 %v428, 64
  %v457 = vpop.permute.xlu0 %456
  %458 = vrot.lane.b32.xlu0 %v429, 64
  %v459 = vpop.permute.xlu0 %458
  %460 = vrot.lane.b32.xlu0 %v430, 64
  %v461 = vpop.permute.xlu0 %460
  %462 = vrot.lane.b32.xlu0 %v431, 64
  %v463 = vpop.permute.xlu0 %462
  %464 = vrot.lane.b32.xlu0 %v432, 64
  %v465 = vpop.permute.xlu0 %464
  %vm466 = vcmask 130048
  %v468 = vsel %vm466, %v403, 0
  %v471 = vsel %vm466, %v404, 0
  %v474 = vsel %vm466, %v405, 0
  %v477 = vsel %vm466, %v406, 0
  %v480 = vsel %vm466, %v407, 0
  %v483 = vsel %vm466, %v408, 0
  %v486 = vsel %vm466, %v409, 0
  %v489 = vsel %vm466, %v410, 0
  %v491 = vsel %vm466, %v451, 0
  %v493 = vsel %vm466, %v453, 0
  %v495 = vsel %vm466, %v455, 0
  %v497 = vsel %vm466, %v457, 0
  %v499 = vsel %vm466, %v459, 0
  %v501 = vsel %vm466, %v461, 0
  %v503 = vsel %vm466, %v463, 0
  %v505 = vsel %vm466, %v465, 0
  %507 = vmatpush.xpose.msra.mxu0 0.0
  %508 = vmatpush.xpose.msra.mxu0 0.0
  %509 = vmatpush.xpose.msra.mxu0 0.0
  %510 = vmatpush.xpose.msra.mxu0 0.0
  %511 = vmatpush.xpose.msra.mxu0 0.0
  %512 = vmatpush.xpose.msra.mxu0 0.0
  %513 = vmatpush.xpose.msra.mxu0 0.0
  %514 = vmatpush.xpose.msra.mxu0 0.0
  %515 = vmatpush.xpose.msra.mxu0 %v505
  %516 = vmatpush.xpose.msra.mxu0 %v503
  %517 = vmatpush.xpose.msra.mxu0 %v501
  %518 = vmatpush.xpose.msra.mxu0 %v499
  %519 = vmatpush.xpose.msra.mxu0 %v497
  %520 = vmatpush.xpose.msra.mxu0 %v495
  %521 = vmatpush.xpose.msra.mxu0 %v493
  %522 = vmatpush.xpose.msra.mxu0 %v491
  %523 = vmatmul.f32.gmra.mxu0 %v468
  %v524 = vpop.f32.mrf.mxu0
  %v525 = vadd.f32 0.0, %v524
  %526 = vmatmul.f32.gmra.mxu0 %v471
  %v527 = vpop.f32.mrf.mxu0
  %v528 = vadd.f32 0.0, %v527
  %529 = vmatmul.f32.gmra.mxu0 %v474
  %v530 = vpop.f32.mrf.mxu0
  %v531 = vadd.f32 0.0, %v530
  %532 = vmatmul.f32.gmra.mxu0 %v477
  %v533 = vpop.f32.mrf.mxu0
  %v534 = vadd.f32 0.0, %v533
  %535 = vmatmul.f32.gmra.mxu0 %v480
  %v536 = vpop.f32.mrf.mxu0
  %v537 = vadd.f32 0.0, %v536
  %538 = vmatmul.f32.gmra.mxu0 %v483
  %v539 = vpop.f32.mrf.mxu0
  %v540 = vadd.f32 0.0, %v539
  %541 = vmatmul.f32.gmra.mxu0 %v486
  %v542 = vpop.f32.mrf.mxu0
  %v543 = vadd.f32 0.0, %v542
  %544 = vmatmul.f32.gmra.mxu0 %v489
  %v545 = vpop.f32.mrf.mxu0
  %v546 = vadd.f32 0.0, %v545
  %547 = vdwg.mxu0
  %v548 = vsel %vm157, %v525, -inf
  %549 = vmax.xlane.f32.xlu0 %v548
  %v550 = vpop.xlane.xlu0 %549
  %v551 = vsel %vm157, %v528, -inf
  %552 = vmax.xlane.f32.xlu0 %v551
  %v553 = vpop.xlane.xlu0 %552
  %v554 = vsel %vm157, %v531, -inf
  %555 = vmax.xlane.f32.xlu0 %v554
  %v556 = vpop.xlane.xlu0 %555
  %v557 = vsel %vm157, %v534, -inf
  %558 = vmax.xlane.f32.xlu0 %v557
  %v559 = vpop.xlane.xlu0 %558
  %v560 = vsel %vm157, %v537, -inf
  %561 = vmax.xlane.f32.xlu0 %v560
  %v562 = vpop.xlane.xlu0 %561
  %v563 = vsel %vm157, %v540, -inf
  %564 = vmax.xlane.f32.xlu0 %v563
  %v565 = vpop.xlane.xlu0 %564
  %v566 = vsel %vm157, %v543, -inf
  %567 = vmax.xlane.f32.xlu0 %v566
  %v568 = vpop.xlane.xlu0 %567
  %v569 = vsel %vm157, %v546, -inf
  %570 = vmax.xlane.f32.xlu0 %v569
  %v571 = vpop.xlane.xlu0 %570
  %v572 = vsub.f32 %v525, %v550
  %v573 = vsub.f32 %v528, %v553
  %v574 = vsub.f32 %v531, %v556
  %v575 = vsub.f32 %v534, %v559
  %v576 = vsub.f32 %v537, %v562
  %v577 = vsub.f32 %v540, %v565
  %v578 = vsub.f32 %v543, %v568
  %v579 = vsub.f32 %v546, %v571
  %v580 = vmul.f32 %v572, 1.442695
  %v581 = vpow.pop %v580
  %v582 = vmul.f32 %v573, 1.442695
  %v583 = vpow.pop %v582
  %v584 = vmul.f32 %v574, 1.442695
  %v585 = vpow.pop %v584
  %v586 = vmul.f32 %v575, 1.442695
  %v587 = vpow.pop %v586
  %v588 = vmul.f32 %v576, 1.442695
  %v589 = vpow.pop %v588
  %v590 = vmul.f32 %v577, 1.442695
  %v591 = vpow.pop %v590
  %v592 = vmul.f32 %v578, 1.442695
  %v593 = vpow.pop %v592
  %v594 = vmul.f32 %v579, 1.442695
  %v595 = vpow.pop %v594
  %v596 = vsel %vm157, %v581, 0.0
  %597 = vadd.xlane.f32.xlu0 %v596
  %v598 = vpop.xlane.xlu0 %597
  %v599 = vsel %vm157, %v583, 0.0
  %600 = vadd.xlane.f32.xlu0 %v599
  %v601 = vpop.xlane.xlu0 %600
  %v602 = vsel %vm157, %v585, 0.0
  %603 = vadd.xlane.f32.xlu0 %v602
  %v604 = vpop.xlane.xlu0 %603
  %v605 = vsel %vm157, %v587, 0.0
  %606 = vadd.xlane.f32.xlu0 %v605
  %v607 = vpop.xlane.xlu0 %606
  %v608 = vsel %vm157, %v589, 0.0
  %609 = vadd.xlane.f32.xlu0 %v608
  %v610 = vpop.xlane.xlu0 %609
  %v611 = vsel %vm157, %v591, 0.0
  %612 = vadd.xlane.f32.xlu0 %v611
  %v613 = vpop.xlane.xlu0 %612
  %v614 = vsel %vm157, %v593, 0.0
  %615 = vadd.xlane.f32.xlu0 %v614
  %v616 = vpop.xlane.xlu0 %615
  %v617 = vsel %vm157, %v595, 0.0
  %618 = vadd.xlane.f32.xlu0 %v617
  %v619 = vpop.xlane.xlu0 %618
  %v620 = vrcp.pop %v598
  %v621 = vrcp.pop %v601
  %v622 = vrcp.pop %v604
  %v623 = vrcp.pop %v607
  %v624 = vrcp.pop %v610
  %v625 = vrcp.pop %v613
  %v626 = vrcp.pop %v616
  %v627 = vrcp.pop %v619
  %v628 = vmul.f32 %v581, %v620
  %v629 = vmul.f32 %v583, %v621
  %v630 = vmul.f32 %v585, %v622
  %v631 = vmul.f32 %v587, %v623
  %v632 = vmul.f32 %v589, %v624
  %v633 = vmul.f32 %v591, %v625
  %v634 = vmul.f32 %v593, %v626
  %v635 = vmul.f32 %v595, %v627
  %636 = vrot.lane.b32.xlu0 %v403, 112
  %v637 = vpop.permute.xlu0 %636
  %638 = vrot.lane.b32.xlu0 %v404, 112
  %v639 = vpop.permute.xlu0 %638
  %640 = vrot.lane.b32.xlu0 %v405, 112
  %v641 = vpop.permute.xlu0 %640
  %642 = vrot.lane.b32.xlu0 %v406, 112
  %v643 = vpop.permute.xlu0 %642
  %644 = vrot.lane.b32.xlu0 %v407, 112
  %v645 = vpop.permute.xlu0 %644
  %646 = vrot.lane.b32.xlu0 %v408, 112
  %v647 = vpop.permute.xlu0 %646
  %648 = vrot.lane.b32.xlu0 %v409, 112
  %v649 = vpop.permute.xlu0 %648
  %650 = vrot.lane.b32.xlu0 %v410, 112
  %v651 = vpop.permute.xlu0 %650
  %652 = vrot.lane.b32.xlu0 %v425, 48
  %v653 = vpop.permute.xlu0 %652
  %654 = vrot.lane.b32.xlu0 %v426, 48
  %v655 = vpop.permute.xlu0 %654
  %656 = vrot.lane.b32.xlu0 %v427, 48
  %v657 = vpop.permute.xlu0 %656
  %658 = vrot.lane.b32.xlu0 %v428, 48
  %v659 = vpop.permute.xlu0 %658
  %660 = vrot.lane.b32.xlu0 %v429, 48
  %v661 = vpop.permute.xlu0 %660
  %662 = vrot.lane.b32.xlu0 %v430, 48
  %v663 = vpop.permute.xlu0 %662
  %664 = vrot.lane.b32.xlu0 %v431, 48
  %v665 = vpop.permute.xlu0 %664
  %666 = vrot.lane.b32.xlu0 %v432, 48
  %v667 = vpop.permute.xlu0 %666
  %v668 = vsel %vm466, %v637, 0
  %v670 = vsel %vm466, %v639, 0
  %v672 = vsel %vm466, %v641, 0
  %v674 = vsel %vm466, %v643, 0
  %v676 = vsel %vm466, %v645, 0
  %v678 = vsel %vm466, %v647, 0
  %v680 = vsel %vm466, %v649, 0
  %v682 = vsel %vm466, %v651, 0
  %v684 = vsel %vm466, %v653, 0
  %v686 = vsel %vm466, %v655, 0
  %v688 = vsel %vm466, %v657, 0
  %v690 = vsel %vm466, %v659, 0
  %v692 = vsel %vm466, %v661, 0
  %v694 = vsel %vm466, %v663, 0
  %v696 = vsel %vm466, %v665, 0
  %v698 = vsel %vm466, %v667, 0
  %700 = vmatpush.xpose.msra.mxu0 0.0
  %701 = vmatpush.xpose.msra.mxu0 0.0
  %702 = vmatpush.xpose.msra.mxu0 0.0
  %703 = vmatpush.xpose.msra.mxu0 0.0
  %704 = vmatpush.xpose.msra.mxu0 0.0
  %705 = vmatpush.xpose.msra.mxu0 0.0
  %706 = vmatpush.xpose.msra.mxu0 0.0
  %707 = vmatpush.xpose.msra.mxu0 0.0
  %708 = vmatpush.xpose.msra.mxu0 %v698
  %709 = vmatpush.xpose.msra.mxu0 %v696
  %710 = vmatpush.xpose.msra.mxu0 %v694
  %711 = vmatpush.xpose.msra.mxu0 %v692
  %712 = vmatpush.xpose.msra.mxu0 %v690
  %713 = vmatpush.xpose.msra.mxu0 %v688
  %714 = vmatpush.xpose.msra.mxu0 %v686
  %715 = vmatpush.xpose.msra.mxu0 %v684
  %716 = vmatmul.f32.gmra.mxu0 %v668
  %v717 = vpop.f32.mrf.mxu0
  %v718 = vadd.f32 0.0, %v717
  %719 = vmatmul.f32.gmra.mxu0 %v670
  %v720 = vpop.f32.mrf.mxu0
  %v721 = vadd.f32 0.0, %v720
  %722 = vmatmul.f32.gmra.mxu0 %v672
  %v723 = vpop.f32.mrf.mxu0
  %v724 = vadd.f32 0.0, %v723
  %725 = vmatmul.f32.gmra.mxu0 %v674
  %v726 = vpop.f32.mrf.mxu0
  %v727 = vadd.f32 0.0, %v726
  %728 = vmatmul.f32.gmra.mxu0 %v676
  %v729 = vpop.f32.mrf.mxu0
  %v730 = vadd.f32 0.0, %v729
  %731 = vmatmul.f32.gmra.mxu0 %v678
  %v732 = vpop.f32.mrf.mxu0
  %v733 = vadd.f32 0.0, %v732
  %734 = vmatmul.f32.gmra.mxu0 %v680
  %v735 = vpop.f32.mrf.mxu0
  %v736 = vadd.f32 0.0, %v735
  %737 = vmatmul.f32.gmra.mxu0 %v682
  %v738 = vpop.f32.mrf.mxu0
  %v739 = vadd.f32 0.0, %v738
  %740 = vdwg.mxu0
  %v741 = vsel %vm157, %v718, -inf
  %742 = vmax.xlane.f32.xlu0 %v741
  %v743 = vpop.xlane.xlu0 %742
  %v744 = vsel %vm157, %v721, -inf
  %745 = vmax.xlane.f32.xlu0 %v744
  %v746 = vpop.xlane.xlu0 %745
  %v747 = vsel %vm157, %v724, -inf
  %748 = vmax.xlane.f32.xlu0 %v747
  %v749 = vpop.xlane.xlu0 %748
  %v750 = vsel %vm157, %v727, -inf
  %751 = vmax.xlane.f32.xlu0 %v750
  %v752 = vpop.xlane.xlu0 %751
  %v753 = vsel %vm157, %v730, -inf
  %754 = vmax.xlane.f32.xlu0 %v753
  %v755 = vpop.xlane.xlu0 %754
  %v756 = vsel %vm157, %v733, -inf
  %757 = vmax.xlane.f32.xlu0 %v756
  %v758 = vpop.xlane.xlu0 %757
  %v759 = vsel %vm157, %v736, -inf
  %760 = vmax.xlane.f32.xlu0 %v759
  %v761 = vpop.xlane.xlu0 %760
  %v762 = vsel %vm157, %v739, -inf
  %763 = vmax.xlane.f32.xlu0 %v762
  %v764 = vpop.xlane.xlu0 %763
  %v765 = vsub.f32 %v718, %v743
  %v766 = vsub.f32 %v721, %v746
  %v767 = vsub.f32 %v724, %v749
  %v768 = vsub.f32 %v727, %v752
  %v769 = vsub.f32 %v730, %v755
  %v770 = vsub.f32 %v733, %v758
  %v771 = vsub.f32 %v736, %v761
  %v772 = vsub.f32 %v739, %v764
  %v773 = vmul.f32 %v765, 1.442695
  %v774 = vpow.pop %v773
  %v775 = vmul.f32 %v766, 1.442695
  %v776 = vpow.pop %v775
  %v777 = vmul.f32 %v767, 1.442695
  %v778 = vpow.pop %v777
  %v779 = vmul.f32 %v768, 1.442695
  %v780 = vpow.pop %v779
  %v781 = vmul.f32 %v769, 1.442695
  %v782 = vpow.pop %v781
  %v783 = vmul.f32 %v770, 1.442695
  %v784 = vpow.pop %v783
  %v785 = vmul.f32 %v771, 1.442695
  %v786 = vpow.pop %v785
  %v787 = vmul.f32 %v772, 1.442695
  %v788 = vpow.pop %v787
  %v789 = vsel %vm157, %v774, 0.0
  %790 = vadd.xlane.f32.xlu0 %v789
  %v791 = vpop.xlane.xlu0 %790
  %v792 = vsel %vm157, %v776, 0.0
  %793 = vadd.xlane.f32.xlu0 %v792
  %v794 = vpop.xlane.xlu0 %793
  %v795 = vsel %vm157, %v778, 0.0
  %796 = vadd.xlane.f32.xlu0 %v795
  %v797 = vpop.xlane.xlu0 %796
  %v798 = vsel %vm157, %v780, 0.0
  %799 = vadd.xlane.f32.xlu0 %v798
  %v800 = vpop.xlane.xlu0 %799
  %v801 = vsel %vm157, %v782, 0.0
  %802 = vadd.xlane.f32.xlu0 %v801
  %v803 = vpop.xlane.xlu0 %802
  %v804 = vsel %vm157, %v784, 0.0
  %805 = vadd.xlane.f32.xlu0 %v804
  %v806 = vpop.xlane.xlu0 %805
  %v807 = vsel %vm157, %v786, 0.0
  %808 = vadd.xlane.f32.xlu0 %v807
  %v809 = vpop.xlane.xlu0 %808
  %v810 = vsel %vm157, %v788, 0.0
  %811 = vadd.xlane.f32.xlu0 %v810
  %v812 = vpop.xlane.xlu0 %811
  %v813 = vrcp.pop %v791
  %v814 = vrcp.pop %v794
  %v815 = vrcp.pop %v797
  %v816 = vrcp.pop %v800
  %v817 = vrcp.pop %v803
  %v818 = vrcp.pop %v806
  %v819 = vrcp.pop %v809
  %v820 = vrcp.pop %v812
  %v821 = vmul.f32 %v774, %v813
  %v822 = vmul.f32 %v776, %v814
  %v823 = vmul.f32 %v778, %v815
  %v824 = vmul.f32 %v780, %v816
  %v825 = vmul.f32 %v782, %v817
  %v826 = vmul.f32 %v784, %v818
  %v827 = vmul.f32 %v786, %v819
  %v828 = vmul.f32 %v788, %v820
  %837 = vrot.lane.b32.xlu0 %v289, 64
  %v838 = vpop.permute.xlu0 %837
  %839 = vrot.lane.b32.xlu0 %v292, 64
  %v840 = vpop.permute.xlu0 %839
  %841 = vrot.lane.b32.xlu0 %v295, 64
  %v842 = vpop.permute.xlu0 %841
  %843 = vrot.lane.b32.xlu0 %v298, 64
  %v844 = vpop.permute.xlu0 %843
  %845 = vrot.lane.b32.xlu0 %v301, 64
  %v846 = vpop.permute.xlu0 %845
  %847 = vrot.lane.b32.xlu0 %v304, 64
  %v848 = vpop.permute.xlu0 %847
  %849 = vrot.lane.b32.xlu0 %v307, 64
  %v850 = vpop.permute.xlu0 %849
  %851 = vrot.lane.b32.xlu0 %v310, 64
  %v852 = vpop.permute.xlu0 %851
  %v862 = vsel %vm157, %v821, 0
  %v865 = vsel %vm157, %v822, 0
  %v868 = vsel %vm157, %v823, 0
  %v871 = vsel %vm157, %v824, 0
  %v874 = vsel %vm157, %v825, 0
  %v877 = vsel %vm157, %v826, 0
  %v880 = vsel %vm157, %v827, 0
  %v883 = vsel %vm157, %v828, 0
  %885 = vmatpush.msra.mxu0 0.0
  %886 = vmatpush.msra.mxu0 0.0
  %887 = vmatpush.msra.mxu0 0.0
  %888 = vmatpush.msra.mxu0 0.0
  %889 = vmatpush.msra.mxu0 0.0
  %890 = vmatpush.msra.mxu0 0.0
  %891 = vmatpush.msra.mxu0 0.0
  %892 = vmatpush.msra.mxu0 0.0
  %893 = vmatpush.msra.mxu0 %v852
  %894 = vmatpush.msra.mxu0 %v850
  %895 = vmatpush.msra.mxu0 %v848
  %896 = vmatpush.msra.mxu0 %v846
  %897 = vmatpush.msra.mxu0 %v844
  %898 = vmatpush.msra.mxu0 %v842
  %899 = vmatpush.msra.mxu0 %v840
  %900 = vmatpush.msra.mxu0 %v838
  %901 = vmatmul.f32.gmra.mxu0 %v862
  %v902 = vpop.f32.mrf.mxu0
  %v903 = vadd.f32 0.0, %v902
  %904 = vmatmul.f32.gmra.mxu0 %v865
  %v905 = vpop.f32.mrf.mxu0
  %v906 = vadd.f32 0.0, %v905
  %907 = vmatmul.f32.gmra.mxu0 %v868
  %v908 = vpop.f32.mrf.mxu0
  %v909 = vadd.f32 0.0, %v908
  %910 = vmatmul.f32.gmra.mxu0 %v871
  %v911 = vpop.f32.mrf.mxu0
  %v912 = vadd.f32 0.0, %v911
  %913 = vmatmul.f32.gmra.mxu0 %v874
  %v914 = vpop.f32.mrf.mxu0
  %v915 = vadd.f32 0.0, %v914
  %916 = vmatmul.f32.gmra.mxu0 %v877
  %v917 = vpop.f32.mrf.mxu0
  %v918 = vadd.f32 0.0, %v917
  %919 = vmatmul.f32.gmra.mxu0 %v880
  %v920 = vpop.f32.mrf.mxu0
  %v921 = vadd.f32 0.0, %v920
  %922 = vmatmul.f32.gmra.mxu0 %v883
  %v923 = vpop.f32.mrf.mxu0
  %v924 = vadd.f32 0.0, %v923
  %925 = vdwg.mxu0
  %926 = vrot.lane.b32.xlu0 %v403, 96
  %v927 = vpop.permute.xlu0 %926
  %928 = vrot.lane.b32.xlu0 %v404, 96
  %v929 = vpop.permute.xlu0 %928
  %930 = vrot.lane.b32.xlu0 %v405, 96
  %v931 = vpop.permute.xlu0 %930
  %932 = vrot.lane.b32.xlu0 %v406, 96
  %v933 = vpop.permute.xlu0 %932
  %934 = vrot.lane.b32.xlu0 %v407, 96
  %v935 = vpop.permute.xlu0 %934
  %936 = vrot.lane.b32.xlu0 %v408, 96
  %v937 = vpop.permute.xlu0 %936
  %938 = vrot.lane.b32.xlu0 %v409, 96
  %v939 = vpop.permute.xlu0 %938
  %940 = vrot.lane.b32.xlu0 %v410, 96
  %v941 = vpop.permute.xlu0 %940
  %942 = vrot.lane.b32.xlu0 %v425, 32
  %v943 = vpop.permute.xlu0 %942
  %944 = vrot.lane.b32.xlu0 %v426, 32
  %v945 = vpop.permute.xlu0 %944
  %946 = vrot.lane.b32.xlu0 %v427, 32
  %v947 = vpop.permute.xlu0 %946
  %948 = vrot.lane.b32.xlu0 %v428, 32
  %v949 = vpop.permute.xlu0 %948
  %950 = vrot.lane.b32.xlu0 %v429, 32
  %v951 = vpop.permute.xlu0 %950
  %952 = vrot.lane.b32.xlu0 %v430, 32
  %v953 = vpop.permute.xlu0 %952
  %954 = vrot.lane.b32.xlu0 %v431, 32
  %v955 = vpop.permute.xlu0 %954
  %956 = vrot.lane.b32.xlu0 %v432, 32
  %v957 = vpop.permute.xlu0 %956
  %v958 = vsel %vm466, %v927, 0
  %v960 = vsel %vm466, %v929, 0
  %v962 = vsel %vm466, %v931, 0
  %v964 = vsel %vm466, %v933, 0
  %v966 = vsel %vm466, %v935, 0
  %v968 = vsel %vm466, %v937, 0
  %v970 = vsel %vm466, %v939, 0
  %v972 = vsel %vm466, %v941, 0
  %v974 = vsel %vm466, %v943, 0
  %v976 = vsel %vm466, %v945, 0
  %v978 = vsel %vm466, %v947, 0
  %v980 = vsel %vm466, %v949, 0
  %v982 = vsel %vm466, %v951, 0
  %v984 = vsel %vm466, %v953, 0
  %v986 = vsel %vm466, %v955, 0
  %v988 = vsel %vm466, %v957, 0
  %990 = vmatpush.xpose.msra.mxu0 0.0
  %991 = vmatpush.xpose.msra.mxu0 0.0
  %992 = vmatpush.xpose.msra.mxu0 0.0
  %993 = vmatpush.xpose.msra.mxu0 0.0
  %994 = vmatpush.xpose.msra.mxu0 0.0
  %995 = vmatpush.xpose.msra.mxu0 0.0
  %996 = vmatpush.xpose.msra.mxu0 0.0
  %997 = vmatpush.xpose.msra.mxu0 0.0
  %998 = vmatpush.xpose.msra.mxu0 %v988
  %999 = vmatpush.xpose.msra.mxu0 %v986
  %1000 = vmatpush.xpose.msra.mxu0 %v984
  %1001 = vmatpush.xpose.msra.mxu0 %v982
  %1002 = vmatpush.xpose.msra.mxu0 %v980
  %1003 = vmatpush.xpose.msra.mxu0 %v978
  %1004 = vmatpush.xpose.msra.mxu0 %v976
  %1005 = vmatpush.xpose.msra.mxu0 %v974
  %1006 = vmatmul.f32.gmra.mxu0 %v958
  %v1007 = vpop.f32.mrf.mxu0
  %v1008 = vadd.f32 0.0, %v1007
  %1009 = vmatmul.f32.gmra.mxu0 %v960
  %v1010 = vpop.f32.mrf.mxu0
  %v1011 = vadd.f32 0.0, %v1010
  %1012 = vmatmul.f32.gmra.mxu0 %v962
  %v1013 = vpop.f32.mrf.mxu0
  %v1014 = vadd.f32 0.0, %v1013
  %1015 = vmatmul.f32.gmra.mxu0 %v964
  %v1016 = vpop.f32.mrf.mxu0
  %v1017 = vadd.f32 0.0, %v1016
  %1018 = vmatmul.f32.gmra.mxu0 %v966
  %v1019 = vpop.f32.mrf.mxu0
  %v1020 = vadd.f32 0.0, %v1019
  %1021 = vmatmul.f32.gmra.mxu0 %v968
  %v1022 = vpop.f32.mrf.mxu0
  %v1023 = vadd.f32 0.0, %v1022
  %1024 = vmatmul.f32.gmra.mxu0 %v970
  %v1025 = vpop.f32.mrf.mxu0
  %v1026 = vadd.f32 0.0, %v1025
  %1027 = vmatmul.f32.gmra.mxu0 %v972
  %v1028 = vpop.f32.mrf.mxu0
  %v1029 = vadd.f32 0.0, %v1028
  %1030 = vdwg.mxu0
  %v1031 = vsel %vm157, %v1008, -inf
  %1032 = vmax.xlane.f32.xlu0 %v1031
  %v1033 = vpop.xlane.xlu0 %1032
  %v1034 = vsel %vm157, %v1011, -inf
  %1035 = vmax.xlane.f32.xlu0 %v1034
  %v1036 = vpop.xlane.xlu0 %1035
  %v1037 = vsel %vm157, %v1014, -inf
  %1038 = vmax.xlane.f32.xlu0 %v1037
  %v1039 = vpop.xlane.xlu0 %1038
  %v1040 = vsel %vm157, %v1017, -inf
  %1041 = vmax.xlane.f32.xlu0 %v1040
  %v1042 = vpop.xlane.xlu0 %1041
  %v1043 = vsel %vm157, %v1020, -inf
  %1044 = vmax.xlane.f32.xlu0 %v1043
  %v1045 = vpop.xlane.xlu0 %1044
  %v1046 = vsel %vm157, %v1023, -inf
  %1047 = vmax.xlane.f32.xlu0 %v1046
  %v1048 = vpop.xlane.xlu0 %1047
  %v1049 = vsel %vm157, %v1026, -inf
  %1050 = vmax.xlane.f32.xlu0 %v1049
  %v1051 = vpop.xlane.xlu0 %1050
  %v1052 = vsel %vm157, %v1029, -inf
  %1053 = vmax.xlane.f32.xlu0 %v1052
  %v1054 = vpop.xlane.xlu0 %1053
  %v1055 = vsub.f32 %v1008, %v1033
  %v1056 = vsub.f32 %v1011, %v1036
  %v1057 = vsub.f32 %v1014, %v1039
  %v1058 = vsub.f32 %v1017, %v1042
  %v1059 = vsub.f32 %v1020, %v1045
  %v1060 = vsub.f32 %v1023, %v1048
  %v1061 = vsub.f32 %v1026, %v1051
  %v1062 = vsub.f32 %v1029, %v1054
  %v1063 = vmul.f32 %v1055, 1.442695
  %v1064 = vpow.pop %v1063
  %v1065 = vmul.f32 %v1056, 1.442695
  %v1066 = vpow.pop %v1065
  %v1067 = vmul.f32 %v1057, 1.442695
  %v1068 = vpow.pop %v1067
  %v1069 = vmul.f32 %v1058, 1.442695
  %v1070 = vpow.pop %v1069
  %v1071 = vmul.f32 %v1059, 1.442695
  %v1072 = vpow.pop %v1071
  %v1073 = vmul.f32 %v1060, 1.442695
  %v1074 = vpow.pop %v1073
  %v1075 = vmul.f32 %v1061, 1.442695
  %v1076 = vpow.pop %v1075
  %v1077 = vmul.f32 %v1062, 1.442695
  %v1078 = vpow.pop %v1077
  %v1079 = vsel %vm157, %v1064, 0.0
  %1080 = vadd.xlane.f32.xlu0 %v1079
  %v1081 = vpop.xlane.xlu0 %1080
  %v1082 = vsel %vm157, %v1066, 0.0
  %1083 = vadd.xlane.f32.xlu0 %v1082
  %v1084 = vpop.xlane.xlu0 %1083
  %v1085 = vsel %vm157, %v1068, 0.0
  %1086 = vadd.xlane.f32.xlu0 %v1085
  %v1087 = vpop.xlane.xlu0 %1086
  %v1088 = vsel %vm157, %v1070, 0.0
  %1089 = vadd.xlane.f32.xlu0 %v1088
  %v1090 = vpop.xlane.xlu0 %1089
  %v1091 = vsel %vm157, %v1072, 0.0
  %1092 = vadd.xlane.f32.xlu0 %v1091
  %v1093 = vpop.xlane.xlu0 %1092
  %v1094 = vsel %vm157, %v1074, 0.0
  %1095 = vadd.xlane.f32.xlu0 %v1094
  %v1096 = vpop.xlane.xlu0 %1095
  %v1097 = vsel %vm157, %v1076, 0.0
  %1098 = vadd.xlane.f32.xlu0 %v1097
  %v1099 = vpop.xlane.xlu0 %1098
  %v1100 = vsel %vm157, %v1078, 0.0
  %1101 = vadd.xlane.f32.xlu0 %v1100
  %v1102 = vpop.xlane.xlu0 %1101
  %v1103 = vrcp.pop %v1081
  %v1104 = vrcp.pop %v1084
  %v1105 = vrcp.pop %v1087
  %v1106 = vrcp.pop %v1090
  %v1107 = vrcp.pop %v1093
  %v1108 = vrcp.pop %v1096
  %v1109 = vrcp.pop %v1099
  %v1110 = vrcp.pop %v1102
  %v1111 = vmul.f32 %v1064, %v1103
  %v1112 = vmul.f32 %v1066, %v1104
  %v1113 = vmul.f32 %v1068, %v1105
  %v1114 = vmul.f32 %v1070, %v1106
  %v1115 = vmul.f32 %v1072, %v1107
  %v1116 = vmul.f32 %v1074, %v1108
  %v1117 = vmul.f32 %v1076, %v1109
  %v1118 = vmul.f32 %v1078, %v1110
  %1119 = vrot.lane.b32.xlu0 %v403, 80
  %v1120 = vpop.permute.xlu0 %1119
  %1121 = vrot.lane.b32.xlu0 %v404, 80
  %v1122 = vpop.permute.xlu0 %1121
  %1123 = vrot.lane.b32.xlu0 %v405, 80
  %v1124 = vpop.permute.xlu0 %1123
  %1125 = vrot.lane.b32.xlu0 %v406, 80
  %v1126 = vpop.permute.xlu0 %1125
  %1127 = vrot.lane.b32.xlu0 %v407, 80
  %v1128 = vpop.permute.xlu0 %1127
  %1129 = vrot.lane.b32.xlu0 %v408, 80
  %v1130 = vpop.permute.xlu0 %1129
  %1131 = vrot.lane.b32.xlu0 %v409, 80
  %v1132 = vpop.permute.xlu0 %1131
  %1133 = vrot.lane.b32.xlu0 %v410, 80
  %v1134 = vpop.permute.xlu0 %1133
  %1135 = vrot.lane.b32.xlu0 %v425, 16
  %v1136 = vpop.permute.xlu0 %1135
  %1137 = vrot.lane.b32.xlu0 %v426, 16
  %v1138 = vpop.permute.xlu0 %1137
  %1139 = vrot.lane.b32.xlu0 %v427, 16
  %v1140 = vpop.permute.xlu0 %1139
  %1141 = vrot.lane.b32.xlu0 %v428, 16
  %v1142 = vpop.permute.xlu0 %1141
  %1143 = vrot.lane.b32.xlu0 %v429, 16
  %v1144 = vpop.permute.xlu0 %1143
  %1145 = vrot.lane.b32.xlu0 %v430, 16
  %v1146 = vpop.permute.xlu0 %1145
  %1147 = vrot.lane.b32.xlu0 %v431, 16
  %v1148 = vpop.permute.xlu0 %1147
  %1149 = vrot.lane.b32.xlu0 %v432, 16
  %v1150 = vpop.permute.xlu0 %1149
  %v1151 = vsel %vm466, %v1120, 0
  %v1153 = vsel %vm466, %v1122, 0
  %v1155 = vsel %vm466, %v1124, 0
  %v1157 = vsel %vm466, %v1126, 0
  %v1159 = vsel %vm466, %v1128, 0
  %v1161 = vsel %vm466, %v1130, 0
  %v1163 = vsel %vm466, %v1132, 0
  %v1165 = vsel %vm466, %v1134, 0
  %v1167 = vsel %vm466, %v1136, 0
  %v1169 = vsel %vm466, %v1138, 0
  %v1171 = vsel %vm466, %v1140, 0
  %v1173 = vsel %vm466, %v1142, 0
  %v1175 = vsel %vm466, %v1144, 0
  %v1177 = vsel %vm466, %v1146, 0
  %v1179 = vsel %vm466, %v1148, 0
  %v1181 = vsel %vm466, %v1150, 0
  %1183 = vmatpush.xpose.msra.mxu0 0.0
  %1184 = vmatpush.xpose.msra.mxu0 0.0
  %1185 = vmatpush.xpose.msra.mxu0 0.0
  %1186 = vmatpush.xpose.msra.mxu0 0.0
  %1187 = vmatpush.xpose.msra.mxu0 0.0
  %1188 = vmatpush.xpose.msra.mxu0 0.0
  %1189 = vmatpush.xpose.msra.mxu0 0.0
  %1190 = vmatpush.xpose.msra.mxu0 0.0
  %1191 = vmatpush.xpose.msra.mxu0 %v1181
  %1192 = vmatpush.xpose.msra.mxu0 %v1179
  %1193 = vmatpush.xpose.msra.mxu0 %v1177
  %1194 = vmatpush.xpose.msra.mxu0 %v1175
  %1195 = vmatpush.xpose.msra.mxu0 %v1173
  %1196 = vmatpush.xpose.msra.mxu0 %v1171
  %1197 = vmatpush.xpose.msra.mxu0 %v1169
  %1198 = vmatpush.xpose.msra.mxu0 %v1167
  %1199 = vmatmul.f32.gmra.mxu0 %v1151
  %v1200 = vpop.f32.mrf.mxu0
  %v1201 = vadd.f32 0.0, %v1200
  %1202 = vmatmul.f32.gmra.mxu0 %v1153
  %v1203 = vpop.f32.mrf.mxu0
  %v1204 = vadd.f32 0.0, %v1203
  %1205 = vmatmul.f32.gmra.mxu0 %v1155
  %v1206 = vpop.f32.mrf.mxu0
  %v1207 = vadd.f32 0.0, %v1206
  %1208 = vmatmul.f32.gmra.mxu0 %v1157
  %v1209 = vpop.f32.mrf.mxu0
  %v1210 = vadd.f32 0.0, %v1209
  %1211 = vmatmul.f32.gmra.mxu0 %v1159
  %v1212 = vpop.f32.mrf.mxu0
  %v1213 = vadd.f32 0.0, %v1212
  %1214 = vmatmul.f32.gmra.mxu0 %v1161
  %v1215 = vpop.f32.mrf.mxu0
  %v1216 = vadd.f32 0.0, %v1215
  %1217 = vmatmul.f32.gmra.mxu0 %v1163
  %v1218 = vpop.f32.mrf.mxu0
  %v1219 = vadd.f32 0.0, %v1218
  %1220 = vmatmul.f32.gmra.mxu0 %v1165
  %v1221 = vpop.f32.mrf.mxu0
  %v1222 = vadd.f32 0.0, %v1221
  %1223 = vdwg.mxu0
  %v1224 = vsel %vm157, %v1201, -inf
  %1225 = vmax.xlane.f32.xlu0 %v1224
  %v1226 = vpop.xlane.xlu0 %1225
  %v1227 = vsel %vm157, %v1204, -inf
  %1228 = vmax.xlane.f32.xlu0 %v1227
  %v1229 = vpop.xlane.xlu0 %1228
  %v1230 = vsel %vm157, %v1207, -inf
  %1231 = vmax.xlane.f32.xlu0 %v1230
  %v1232 = vpop.xlane.xlu0 %1231
  %v1233 = vsel %vm157, %v1210, -inf
  %1234 = vmax.xlane.f32.xlu0 %v1233
  %v1235 = vpop.xlane.xlu0 %1234
  %v1236 = vsel %vm157, %v1213, -inf
  %1237 = vmax.xlane.f32.xlu0 %v1236
  %v1238 = vpop.xlane.xlu0 %1237
  %v1239 = vsel %vm157, %v1216, -inf
  %1240 = vmax.xlane.f32.xlu0 %v1239
  %v1241 = vpop.xlane.xlu0 %1240
  %v1242 = vsel %vm157, %v1219, -inf
  %1243 = vmax.xlane.f32.xlu0 %v1242
  %v1244 = vpop.xlane.xlu0 %1243
  %v1245 = vsel %vm157, %v1222, -inf
  %1246 = vmax.xlane.f32.xlu0 %v1245
  %v1247 = vpop.xlane.xlu0 %1246
  %v1248 = vsub.f32 %v1201, %v1226
  %v1249 = vsub.f32 %v1204, %v1229
  %v1250 = vsub.f32 %v1207, %v1232
  %v1251 = vsub.f32 %v1210, %v1235
  %v1252 = vsub.f32 %v1213, %v1238
  %v1253 = vsub.f32 %v1216, %v1241
  %v1254 = vsub.f32 %v1219, %v1244
  %v1255 = vsub.f32 %v1222, %v1247
  %v1256 = vmul.f32 %v1248, 1.442695
  %v1257 = vpow.pop %v1256
  %v1258 = vmul.f32 %v1249, 1.442695
  %v1259 = vpow.pop %v1258
  %v1260 = vmul.f32 %v1250, 1.442695
  %v1261 = vpow.pop %v1260
  %v1262 = vmul.f32 %v1251, 1.442695
  %v1263 = vpow.pop %v1262
  %v1264 = vmul.f32 %v1252, 1.442695
  %v1265 = vpow.pop %v1264
  %v1266 = vmul.f32 %v1253, 1.442695
  %v1267 = vpow.pop %v1266
  %v1268 = vmul.f32 %v1254, 1.442695
  %v1269 = vpow.pop %v1268
  %v1270 = vmul.f32 %v1255, 1.442695
  %v1271 = vpow.pop %v1270
  %v1272 = vsel %vm157, %v1257, 0.0
  %1273 = vadd.xlane.f32.xlu0 %v1272
  %v1274 = vpop.xlane.xlu0 %1273
  %v1275 = vsel %vm157, %v1259, 0.0
  %1276 = vadd.xlane.f32.xlu0 %v1275
  %v1277 = vpop.xlane.xlu0 %1276
  %v1278 = vsel %vm157, %v1261, 0.0
  %1279 = vadd.xlane.f32.xlu0 %v1278
  %v1280 = vpop.xlane.xlu0 %1279
  %v1281 = vsel %vm157, %v1263, 0.0
  %1282 = vadd.xlane.f32.xlu0 %v1281
  %v1283 = vpop.xlane.xlu0 %1282
  %v1284 = vsel %vm157, %v1265, 0.0
  %1285 = vadd.xlane.f32.xlu0 %v1284
  %v1286 = vpop.xlane.xlu0 %1285
  %v1287 = vsel %vm157, %v1267, 0.0
  %1288 = vadd.xlane.f32.xlu0 %v1287
  %v1289 = vpop.xlane.xlu0 %1288
  %v1290 = vsel %vm157, %v1269, 0.0
  %1291 = vadd.xlane.f32.xlu0 %v1290
  %v1292 = vpop.xlane.xlu0 %1291
  %v1293 = vsel %vm157, %v1271, 0.0
  %1294 = vadd.xlane.f32.xlu0 %v1293
  %v1295 = vpop.xlane.xlu0 %1294
  %v1296 = vrcp.pop %v1274
  %v1297 = vrcp.pop %v1277
  %v1298 = vrcp.pop %v1280
  %v1299 = vrcp.pop %v1283
  %v1300 = vrcp.pop %v1286
  %v1301 = vrcp.pop %v1289
  %v1302 = vrcp.pop %v1292
  %v1303 = vrcp.pop %v1295
  %v1304 = vmul.f32 %v1257, %v1296
  %v1305 = vmul.f32 %v1259, %v1297
  %v1306 = vmul.f32 %v1261, %v1298
  %v1307 = vmul.f32 %v1263, %v1299
  %v1308 = vmul.f32 %v1265, %v1300
  %v1309 = vmul.f32 %v1267, %v1301
  %v1310 = vmul.f32 %v1269, %v1302
  %v1311 = vmul.f32 %v1271, %v1303
  %1320 = vrot.lane.b32.xlu0 %v354, 64
  %v1321 = vpop.permute.xlu0 %1320
  %1322 = vrot.lane.b32.xlu0 %v357, 64
  %v1323 = vpop.permute.xlu0 %1322
  %1324 = vrot.lane.b32.xlu0 %v360, 64
  %v1325 = vpop.permute.xlu0 %1324
  %1326 = vrot.lane.b32.xlu0 %v363, 64
  %v1327 = vpop.permute.xlu0 %1326
  %1328 = vrot.lane.b32.xlu0 %v366, 64
  %v1329 = vpop.permute.xlu0 %1328
  %1330 = vrot.lane.b32.xlu0 %v369, 64
  %v1331 = vpop.permute.xlu0 %1330
  %1332 = vrot.lane.b32.xlu0 %v372, 64
  %v1333 = vpop.permute.xlu0 %1332
  %1334 = vrot.lane.b32.xlu0 %v375, 64
  %v1335 = vpop.permute.xlu0 %1334
  %v1345 = vsel %vm157, %v1304, 0
  %v1348 = vsel %vm157, %v1305, 0
  %v1351 = vsel %vm157, %v1306, 0
  %v1354 = vsel %vm157, %v1307, 0
  %v1357 = vsel %vm157, %v1308, 0
  %v1360 = vsel %vm157, %v1309, 0
  %v1363 = vsel %vm157, %v1310, 0
  %v1366 = vsel %vm157, %v1311, 0
  %1368 = vmatpush.msra.mxu0 0.0
  %1369 = vmatpush.msra.mxu0 0.0
  %1370 = vmatpush.msra.mxu0 0.0
  %1371 = vmatpush.msra.mxu0 0.0
  %1372 = vmatpush.msra.mxu0 0.0
  %1373 = vmatpush.msra.mxu0 0.0
  %1374 = vmatpush.msra.mxu0 0.0
  %1375 = vmatpush.msra.mxu0 0.0
  %1376 = vmatpush.msra.mxu0 %v1335
  %1377 = vmatpush.msra.mxu0 %v1333
  %1378 = vmatpush.msra.mxu0 %v1331
  %1379 = vmatpush.msra.mxu0 %v1329
  %1380 = vmatpush.msra.mxu0 %v1327
  %1381 = vmatpush.msra.mxu0 %v1325
  %1382 = vmatpush.msra.mxu0 %v1323
  %1383 = vmatpush.msra.mxu0 %v1321
  %1384 = vmatmul.f32.gmra.mxu0 %v1345
  %v1385 = vpop.f32.mrf.mxu0
  %v1386 = vadd.f32 0.0, %v1385
  %1387 = vmatmul.f32.gmra.mxu0 %v1348
  %v1388 = vpop.f32.mrf.mxu0
  %v1389 = vadd.f32 0.0, %v1388
  %1390 = vmatmul.f32.gmra.mxu0 %v1351
  %v1391 = vpop.f32.mrf.mxu0
  %v1392 = vadd.f32 0.0, %v1391
  %1393 = vmatmul.f32.gmra.mxu0 %v1354
  %v1394 = vpop.f32.mrf.mxu0
  %v1395 = vadd.f32 0.0, %v1394
  %1396 = vmatmul.f32.gmra.mxu0 %v1357
  %v1397 = vpop.f32.mrf.mxu0
  %v1398 = vadd.f32 0.0, %v1397
  %1399 = vmatmul.f32.gmra.mxu0 %v1360
  %v1400 = vpop.f32.mrf.mxu0
  %v1401 = vadd.f32 0.0, %v1400
  %1402 = vmatmul.f32.gmra.mxu0 %v1363
  %v1403 = vpop.f32.mrf.mxu0
  %v1404 = vadd.f32 0.0, %v1403
  %1405 = vmatmul.f32.gmra.mxu0 %v1366
  %v1406 = vpop.f32.mrf.mxu0
  %v1407 = vadd.f32 0.0, %v1406
  %1408 = vdwg.mxu0
  %v1410 = vsel %vm157, %v628, 0
  %v1413 = vsel %vm157, %v629, 0
  %v1416 = vsel %vm157, %v630, 0
  %v1419 = vsel %vm157, %v631, 0
  %v1422 = vsel %vm157, %v632, 0
  %v1425 = vsel %vm157, %v633, 0
  %v1428 = vsel %vm157, %v634, 0
  %v1431 = vsel %vm157, %v635, 0
  %1433 = vmatpush.msra.mxu0 0.0
  %1434 = vmatpush.msra.mxu0 0.0
  %1435 = vmatpush.msra.mxu0 0.0
  %1436 = vmatpush.msra.mxu0 0.0
  %1437 = vmatpush.msra.mxu0 0.0
  %1438 = vmatpush.msra.mxu0 0.0
  %1439 = vmatpush.msra.mxu0 0.0
  %1440 = vmatpush.msra.mxu0 0.0
  %1441 = vmatpush.msra.mxu0 %v310
  %1442 = vmatpush.msra.mxu0 %v307
  %1443 = vmatpush.msra.mxu0 %v304
  %1444 = vmatpush.msra.mxu0 %v301
  %1445 = vmatpush.msra.mxu0 %v298
  %1446 = vmatpush.msra.mxu0 %v295
  %1447 = vmatpush.msra.mxu0 %v292
  %1448 = vmatpush.msra.mxu0 %v289
  %1449 = vmatmul.f32.gmra.mxu0 %v1410
  %v1450 = vpop.f32.mrf.mxu0
  %v1451 = vadd.f32 %v903, %v1450
  %1452 = vmatmul.f32.gmra.mxu0 %v1413
  %v1453 = vpop.f32.mrf.mxu0
  %v1454 = vadd.f32 %v906, %v1453
  %1455 = vmatmul.f32.gmra.mxu0 %v1416
  %v1456 = vpop.f32.mrf.mxu0
  %v1457 = vadd.f32 %v909, %v1456
  %1458 = vmatmul.f32.gmra.mxu0 %v1419
  %v1459 = vpop.f32.mrf.mxu0
  %v1460 = vadd.f32 %v912, %v1459
  %1461 = vmatmul.f32.gmra.mxu0 %v1422
  %v1462 = vpop.f32.mrf.mxu0
  %v1463 = vadd.f32 %v915, %v1462
  %1464 = vmatmul.f32.gmra.mxu0 %v1425
  %v1465 = vpop.f32.mrf.mxu0
  %v1466 = vadd.f32 %v918, %v1465
  %1467 = vmatmul.f32.gmra.mxu0 %v1428
  %v1468 = vpop.f32.mrf.mxu0
  %v1469 = vadd.f32 %v921, %v1468
  %1470 = vmatmul.f32.gmra.mxu0 %v1431
  %v1471 = vpop.f32.mrf.mxu0
  %v1472 = vadd.f32 %v924, %v1471
  %1473 = vdwg.mxu0
  %v1475 = vsel %vm157, %v1111, 0
  %v1478 = vsel %vm157, %v1112, 0
  %v1481 = vsel %vm157, %v1113, 0
  %v1484 = vsel %vm157, %v1114, 0
  %v1487 = vsel %vm157, %v1115, 0
  %v1490 = vsel %vm157, %v1116, 0
  %v1493 = vsel %vm157, %v1117, 0
  %v1496 = vsel %vm157, %v1118, 0
  %1498 = vmatpush.msra.mxu0 0.0
  %1499 = vmatpush.msra.mxu0 0.0
  %1500 = vmatpush.msra.mxu0 0.0
  %1501 = vmatpush.msra.mxu0 0.0
  %1502 = vmatpush.msra.mxu0 0.0
  %1503 = vmatpush.msra.mxu0 0.0
  %1504 = vmatpush.msra.mxu0 0.0
  %1505 = vmatpush.msra.mxu0 0.0
  %1506 = vmatpush.msra.mxu0 %v375
  %1507 = vmatpush.msra.mxu0 %v372
  %1508 = vmatpush.msra.mxu0 %v369
  %1509 = vmatpush.msra.mxu0 %v366
  %1510 = vmatpush.msra.mxu0 %v363
  %1511 = vmatpush.msra.mxu0 %v360
  %1512 = vmatpush.msra.mxu0 %v357
  %1513 = vmatpush.msra.mxu0 %v354
  %1514 = vmatmul.f32.gmra.mxu0 %v1475
  %v1515 = vpop.f32.mrf.mxu0
  %v1516 = vadd.f32 %v1386, %v1515
  %1517 = vmatmul.f32.gmra.mxu0 %v1478
  %v1518 = vpop.f32.mrf.mxu0
  %v1519 = vadd.f32 %v1389, %v1518
  %1520 = vmatmul.f32.gmra.mxu0 %v1481
  %v1521 = vpop.f32.mrf.mxu0
  %v1522 = vadd.f32 %v1392, %v1521
  %1523 = vmatmul.f32.gmra.mxu0 %v1484
  %v1524 = vpop.f32.mrf.mxu0
  %v1525 = vadd.f32 %v1395, %v1524
  %1526 = vmatmul.f32.gmra.mxu0 %v1487
  %v1527 = vpop.f32.mrf.mxu0
  %v1528 = vadd.f32 %v1398, %v1527
  %1529 = vmatmul.f32.gmra.mxu0 %v1490
  %v1530 = vpop.f32.mrf.mxu0
  %v1531 = vadd.f32 %v1401, %v1530
  %1532 = vmatmul.f32.gmra.mxu0 %v1493
  %v1533 = vpop.f32.mrf.mxu0
  %v1534 = vadd.f32 %v1404, %v1533
  %1535 = vmatmul.f32.gmra.mxu0 %v1496
  %v1536 = vpop.f32.mrf.mxu0
  %v1537 = vadd.f32 %v1407, %v1536
  %1538 = vdwg.mxu0
  %v1539 = vadd.f32 %v1451, %v1516
  %v1540 = vadd.f32 %v1454, %v1519
  %v1541 = vadd.f32 %v1457, %v1522
  %v1542 = vadd.f32 %v1460, %v1525
  %v1543 = vadd.f32 %v1463, %v1528
  %v1544 = vadd.f32 %v1466, %v1531
  %v1545 = vadd.f32 %v1469, %v1534
  %v1546 = vadd.f32 %v1472, %v1537
  %v1547 = vadd.f32 %v86, %v1539
  %v1548 = vadd.f32 %v89, %v1540
  %v1549 = vadd.f32 %v92, %v1541
  %v1550 = vadd.f32 %v95, %v1542
  %v1551 = vadd.f32 %v98, %v1543
  %v1552 = vadd.f32 %v101, %v1544
  %v1553 = vadd.f32 %v104, %v1545
  %v1554 = vadd.f32 %v107, %v1546
  %v1555 = vperm.slane %v441, 0
  %v1556 = vadd.f32 %v1547, %v1555
  %v1557 = vadd.f32 %v1548, %v1555
  %v1558 = vadd.f32 %v1549, %v1555
  %v1559 = vadd.f32 %v1550, %v1555
  %v1560 = vadd.f32 %v1551, %v1555
  %v1561 = vadd.f32 %v1552, %v1555
  %v1562 = vadd.f32 %v1553, %v1555
  %v1563 = vadd.f32 %v1554, %v1555
  %1572 = vrot.lane.b32.xlu0 %v433, 64
  %v1573 = vpop.permute.xlu0 %1572
  %1574 = vrot.lane.b32.xlu0 %v434, 64
  %v1575 = vpop.permute.xlu0 %1574
  %1576 = vrot.lane.b32.xlu0 %v435, 64
  %v1577 = vpop.permute.xlu0 %1576
  %1578 = vrot.lane.b32.xlu0 %v436, 64
  %v1579 = vpop.permute.xlu0 %1578
  %1580 = vrot.lane.b32.xlu0 %v437, 64
  %v1581 = vpop.permute.xlu0 %1580
  %1582 = vrot.lane.b32.xlu0 %v438, 64
  %v1583 = vpop.permute.xlu0 %1582
  %1584 = vrot.lane.b32.xlu0 %v439, 64
  %v1585 = vpop.permute.xlu0 %1584
  %1586 = vrot.lane.b32.xlu0 %v440, 64
  %v1587 = vpop.permute.xlu0 %1586
  %v1589 = vsel %vm466, %v411, 0
  %v1592 = vsel %vm466, %v412, 0
  %v1595 = vsel %vm466, %v413, 0
  %v1598 = vsel %vm466, %v414, 0
  %v1601 = vsel %vm466, %v415, 0
  %v1604 = vsel %vm466, %v416, 0
  %v1607 = vsel %vm466, %v417, 0
  %v1610 = vsel %vm466, %v418, 0
  %v1612 = vsel %vm466, %v1573, 0
  %v1614 = vsel %vm466, %v1575, 0
  %v1616 = vsel %vm466, %v1577, 0
  %v1618 = vsel %vm466, %v1579, 0
  %v1620 = vsel %vm466, %v1581, 0
  %v1622 = vsel %vm466, %v1583, 0
  %v1624 = vsel %vm466, %v1585, 0
  %v1626 = vsel %vm466, %v1587, 0
  %1628 = vmatpush.xpose.msra.mxu0 0.0
  %1629 = vmatpush.xpose.msra.mxu0 0.0
  %1630 = vmatpush.xpose.msra.mxu0 0.0
  %1631 = vmatpush.xpose.msra.mxu0 0.0
  %1632 = vmatpush.xpose.msra.mxu0 0.0
  %1633 = vmatpush.xpose.msra.mxu0 0.0
  %1634 = vmatpush.xpose.msra.mxu0 0.0
  %1635 = vmatpush.xpose.msra.mxu0 0.0
  %1636 = vmatpush.xpose.msra.mxu0 %v1626
  %1637 = vmatpush.xpose.msra.mxu0 %v1624
  %1638 = vmatpush.xpose.msra.mxu0 %v1622
  %1639 = vmatpush.xpose.msra.mxu0 %v1620
  %1640 = vmatpush.xpose.msra.mxu0 %v1618
  %1641 = vmatpush.xpose.msra.mxu0 %v1616
  %1642 = vmatpush.xpose.msra.mxu0 %v1614
  %1643 = vmatpush.xpose.msra.mxu0 %v1612
  %1644 = vmatmul.f32.gmra.mxu0 %v1589
  %v1645 = vpop.f32.mrf.mxu0
  %v1646 = vadd.f32 0.0, %v1645
  %1647 = vmatmul.f32.gmra.mxu0 %v1592
  %v1648 = vpop.f32.mrf.mxu0
  %v1649 = vadd.f32 0.0, %v1648
  %1650 = vmatmul.f32.gmra.mxu0 %v1595
  %v1651 = vpop.f32.mrf.mxu0
  %v1652 = vadd.f32 0.0, %v1651
  %1653 = vmatmul.f32.gmra.mxu0 %v1598
  %v1654 = vpop.f32.mrf.mxu0
  %v1655 = vadd.f32 0.0, %v1654
  %1656 = vmatmul.f32.gmra.mxu0 %v1601
  %v1657 = vpop.f32.mrf.mxu0
  %v1658 = vadd.f32 0.0, %v1657
  %1659 = vmatmul.f32.gmra.mxu0 %v1604
  %v1660 = vpop.f32.mrf.mxu0
  %v1661 = vadd.f32 0.0, %v1660
  %1662 = vmatmul.f32.gmra.mxu0 %v1607
  %v1663 = vpop.f32.mrf.mxu0
  %v1664 = vadd.f32 0.0, %v1663
  %1665 = vmatmul.f32.gmra.mxu0 %v1610
  %v1666 = vpop.f32.mrf.mxu0
  %v1667 = vadd.f32 0.0, %v1666
  %1668 = vdwg.mxu0
  %v1669 = vsel %vm157, %v1646, -inf
  %1670 = vmax.xlane.f32.xlu0 %v1669
  %v1671 = vpop.xlane.xlu0 %1670
  %v1672 = vsel %vm157, %v1649, -inf
  %1673 = vmax.xlane.f32.xlu0 %v1672
  %v1674 = vpop.xlane.xlu0 %1673
  %v1675 = vsel %vm157, %v1652, -inf
  %1676 = vmax.xlane.f32.xlu0 %v1675
  %v1677 = vpop.xlane.xlu0 %1676
  %v1678 = vsel %vm157, %v1655, -inf
  %1679 = vmax.xlane.f32.xlu0 %v1678
  %v1680 = vpop.xlane.xlu0 %1679
  %v1681 = vsel %vm157, %v1658, -inf
  %1682 = vmax.xlane.f32.xlu0 %v1681
  %v1683 = vpop.xlane.xlu0 %1682
  %v1684 = vsel %vm157, %v1661, -inf
  %1685 = vmax.xlane.f32.xlu0 %v1684
  %v1686 = vpop.xlane.xlu0 %1685
  %v1687 = vsel %vm157, %v1664, -inf
  %1688 = vmax.xlane.f32.xlu0 %v1687
  %v1689 = vpop.xlane.xlu0 %1688
  %v1690 = vsel %vm157, %v1667, -inf
  %1691 = vmax.xlane.f32.xlu0 %v1690
  %v1692 = vpop.xlane.xlu0 %1691
  %v1693 = vsub.f32 %v1646, %v1671
  %v1694 = vsub.f32 %v1649, %v1674
  %v1695 = vsub.f32 %v1652, %v1677
  %v1696 = vsub.f32 %v1655, %v1680
  %v1697 = vsub.f32 %v1658, %v1683
  %v1698 = vsub.f32 %v1661, %v1686
  %v1699 = vsub.f32 %v1664, %v1689
  %v1700 = vsub.f32 %v1667, %v1692
  %v1701 = vmul.f32 %v1693, 1.442695
  %v1702 = vpow.pop %v1701
  %v1703 = vmul.f32 %v1694, 1.442695
  %v1704 = vpow.pop %v1703
  %v1705 = vmul.f32 %v1695, 1.442695
  %v1706 = vpow.pop %v1705
  %v1707 = vmul.f32 %v1696, 1.442695
  %v1708 = vpow.pop %v1707
  %v1709 = vmul.f32 %v1697, 1.442695
  %v1710 = vpow.pop %v1709
  %v1711 = vmul.f32 %v1698, 1.442695
  %v1712 = vpow.pop %v1711
  %v1713 = vmul.f32 %v1699, 1.442695
  %v1714 = vpow.pop %v1713
  %v1715 = vmul.f32 %v1700, 1.442695
  %v1716 = vpow.pop %v1715
  %v1717 = vsel %vm157, %v1702, 0.0
  %1718 = vadd.xlane.f32.xlu0 %v1717
  %v1719 = vpop.xlane.xlu0 %1718
  %v1720 = vsel %vm157, %v1704, 0.0
  %1721 = vadd.xlane.f32.xlu0 %v1720
  %v1722 = vpop.xlane.xlu0 %1721
  %v1723 = vsel %vm157, %v1706, 0.0
  %1724 = vadd.xlane.f32.xlu0 %v1723
  %v1725 = vpop.xlane.xlu0 %1724
  %v1726 = vsel %vm157, %v1708, 0.0
  %1727 = vadd.xlane.f32.xlu0 %v1726
  %v1728 = vpop.xlane.xlu0 %1727
  %v1729 = vsel %vm157, %v1710, 0.0
  %1730 = vadd.xlane.f32.xlu0 %v1729
  %v1731 = vpop.xlane.xlu0 %1730
  %v1732 = vsel %vm157, %v1712, 0.0
  %1733 = vadd.xlane.f32.xlu0 %v1732
  %v1734 = vpop.xlane.xlu0 %1733
  %v1735 = vsel %vm157, %v1714, 0.0
  %1736 = vadd.xlane.f32.xlu0 %v1735
  %v1737 = vpop.xlane.xlu0 %1736
  %v1738 = vsel %vm157, %v1716, 0.0
  %1739 = vadd.xlane.f32.xlu0 %v1738
  %v1740 = vpop.xlane.xlu0 %1739
  %v1741 = vrcp.pop %v1719
  %v1742 = vrcp.pop %v1722
  %v1743 = vrcp.pop %v1725
  %v1744 = vrcp.pop %v1728
  %v1745 = vrcp.pop %v1731
  %v1746 = vrcp.pop %v1734
  %v1747 = vrcp.pop %v1737
  %v1748 = vrcp.pop %v1740
  %v1749 = vmul.f32 %v1702, %v1741
  %v1750 = vmul.f32 %v1704, %v1742
  %v1751 = vmul.f32 %v1706, %v1743
  %v1752 = vmul.f32 %v1708, %v1744
  %v1753 = vmul.f32 %v1710, %v1745
  %v1754 = vmul.f32 %v1712, %v1746
  %v1755 = vmul.f32 %v1714, %v1747
  %v1756 = vmul.f32 %v1716, %v1748
  %1757 = vrot.lane.b32.xlu0 %v411, 112
  %v1758 = vpop.permute.xlu0 %1757
  %1759 = vrot.lane.b32.xlu0 %v412, 112
  %v1760 = vpop.permute.xlu0 %1759
  %1761 = vrot.lane.b32.xlu0 %v413, 112
  %v1762 = vpop.permute.xlu0 %1761
  %1763 = vrot.lane.b32.xlu0 %v414, 112
  %v1764 = vpop.permute.xlu0 %1763
  %1765 = vrot.lane.b32.xlu0 %v415, 112
  %v1766 = vpop.permute.xlu0 %1765
  %1767 = vrot.lane.b32.xlu0 %v416, 112
  %v1768 = vpop.permute.xlu0 %1767
  %1769 = vrot.lane.b32.xlu0 %v417, 112
  %v1770 = vpop.permute.xlu0 %1769
  %1771 = vrot.lane.b32.xlu0 %v418, 112
  %v1772 = vpop.permute.xlu0 %1771
  %1773 = vrot.lane.b32.xlu0 %v433, 48
  %v1774 = vpop.permute.xlu0 %1773
  %1775 = vrot.lane.b32.xlu0 %v434, 48
  %v1776 = vpop.permute.xlu0 %1775
  %1777 = vrot.lane.b32.xlu0 %v435, 48
  %v1778 = vpop.permute.xlu0 %1777
  %1779 = vrot.lane.b32.xlu0 %v436, 48
  %v1780 = vpop.permute.xlu0 %1779
  %1781 = vrot.lane.b32.xlu0 %v437, 48
  %v1782 = vpop.permute.xlu0 %1781
  %1783 = vrot.lane.b32.xlu0 %v438, 48
  %v1784 = vpop.permute.xlu0 %1783
  %1785 = vrot.lane.b32.xlu0 %v439, 48
  %v1786 = vpop.permute.xlu0 %1785
  %1787 = vrot.lane.b32.xlu0 %v440, 48
  %v1788 = vpop.permute.xlu0 %1787
  %v1789 = vsel %vm466, %v1758, 0
  %v1791 = vsel %vm466, %v1760, 0
  %v1793 = vsel %vm466, %v1762, 0
  %v1795 = vsel %vm466, %v1764, 0
  %v1797 = vsel %vm466, %v1766, 0
  %v1799 = vsel %vm466, %v1768, 0
  %v1801 = vsel %vm466, %v1770, 0
  %v1803 = vsel %vm466, %v1772, 0
  %v1805 = vsel %vm466, %v1774, 0
  %v1807 = vsel %vm466, %v1776, 0
  %v1809 = vsel %vm466, %v1778, 0
  %v1811 = vsel %vm466, %v1780, 0
  %v1813 = vsel %vm466, %v1782, 0
  %v1815 = vsel %vm466, %v1784, 0
  %v1817 = vsel %vm466, %v1786, 0
  %v1819 = vsel %vm466, %v1788, 0
  %1821 = vmatpush.xpose.msra.mxu0 0.0
  %1822 = vmatpush.xpose.msra.mxu0 0.0
  %1823 = vmatpush.xpose.msra.mxu0 0.0
  %1824 = vmatpush.xpose.msra.mxu0 0.0
  %1825 = vmatpush.xpose.msra.mxu0 0.0
  %1826 = vmatpush.xpose.msra.mxu0 0.0
  %1827 = vmatpush.xpose.msra.mxu0 0.0
  %1828 = vmatpush.xpose.msra.mxu0 0.0
  %1829 = vmatpush.xpose.msra.mxu0 %v1819
  %1830 = vmatpush.xpose.msra.mxu0 %v1817
  %1831 = vmatpush.xpose.msra.mxu0 %v1815
  %1832 = vmatpush.xpose.msra.mxu0 %v1813
  %1833 = vmatpush.xpose.msra.mxu0 %v1811
  %1834 = vmatpush.xpose.msra.mxu0 %v1809
  %1835 = vmatpush.xpose.msra.mxu0 %v1807
  %1836 = vmatpush.xpose.msra.mxu0 %v1805
  %1837 = vmatmul.f32.gmra.mxu0 %v1789
  %v1838 = vpop.f32.mrf.mxu0
  %v1839 = vadd.f32 0.0, %v1838
  %1840 = vmatmul.f32.gmra.mxu0 %v1791
  %v1841 = vpop.f32.mrf.mxu0
  %v1842 = vadd.f32 0.0, %v1841
  %1843 = vmatmul.f32.gmra.mxu0 %v1793
  %v1844 = vpop.f32.mrf.mxu0
  %v1845 = vadd.f32 0.0, %v1844
  %1846 = vmatmul.f32.gmra.mxu0 %v1795
  %v1847 = vpop.f32.mrf.mxu0
  %v1848 = vadd.f32 0.0, %v1847
  %1849 = vmatmul.f32.gmra.mxu0 %v1797
  %v1850 = vpop.f32.mrf.mxu0
  %v1851 = vadd.f32 0.0, %v1850
  %1852 = vmatmul.f32.gmra.mxu0 %v1799
  %v1853 = vpop.f32.mrf.mxu0
  %v1854 = vadd.f32 0.0, %v1853
  %1855 = vmatmul.f32.gmra.mxu0 %v1801
  %v1856 = vpop.f32.mrf.mxu0
  %v1857 = vadd.f32 0.0, %v1856
  %1858 = vmatmul.f32.gmra.mxu0 %v1803
  %v1859 = vpop.f32.mrf.mxu0
  %v1860 = vadd.f32 0.0, %v1859
  %1861 = vdwg.mxu0
  %v1862 = vsel %vm157, %v1839, -inf
  %1863 = vmax.xlane.f32.xlu0 %v1862
  %v1864 = vpop.xlane.xlu0 %1863
  %v1865 = vsel %vm157, %v1842, -inf
  %1866 = vmax.xlane.f32.xlu0 %v1865
  %v1867 = vpop.xlane.xlu0 %1866
  %v1868 = vsel %vm157, %v1845, -inf
  %1869 = vmax.xlane.f32.xlu0 %v1868
  %v1870 = vpop.xlane.xlu0 %1869
  %v1871 = vsel %vm157, %v1848, -inf
  %1872 = vmax.xlane.f32.xlu0 %v1871
  %v1873 = vpop.xlane.xlu0 %1872
  %v1874 = vsel %vm157, %v1851, -inf
  %1875 = vmax.xlane.f32.xlu0 %v1874
  %v1876 = vpop.xlane.xlu0 %1875
  %v1877 = vsel %vm157, %v1854, -inf
  %1878 = vmax.xlane.f32.xlu0 %v1877
  %v1879 = vpop.xlane.xlu0 %1878
  %v1880 = vsel %vm157, %v1857, -inf
  %1881 = vmax.xlane.f32.xlu0 %v1880
  %v1882 = vpop.xlane.xlu0 %1881
  %v1883 = vsel %vm157, %v1860, -inf
  %1884 = vmax.xlane.f32.xlu0 %v1883
  %v1885 = vpop.xlane.xlu0 %1884
  %v1886 = vsub.f32 %v1839, %v1864
  %v1887 = vsub.f32 %v1842, %v1867
  %v1888 = vsub.f32 %v1845, %v1870
  %v1889 = vsub.f32 %v1848, %v1873
  %v1890 = vsub.f32 %v1851, %v1876
  %v1891 = vsub.f32 %v1854, %v1879
  %v1892 = vsub.f32 %v1857, %v1882
  %v1893 = vsub.f32 %v1860, %v1885
  %v1894 = vmul.f32 %v1886, 1.442695
  %v1895 = vpow.pop %v1894
  %v1896 = vmul.f32 %v1887, 1.442695
  %v1897 = vpow.pop %v1896
  %v1898 = vmul.f32 %v1888, 1.442695
  %v1899 = vpow.pop %v1898
  %v1900 = vmul.f32 %v1889, 1.442695
  %v1901 = vpow.pop %v1900
  %v1902 = vmul.f32 %v1890, 1.442695
  %v1903 = vpow.pop %v1902
  %v1904 = vmul.f32 %v1891, 1.442695
  %v1905 = vpow.pop %v1904
  %v1906 = vmul.f32 %v1892, 1.442695
  %v1907 = vpow.pop %v1906
  %v1908 = vmul.f32 %v1893, 1.442695
  %v1909 = vpow.pop %v1908
  %v1910 = vsel %vm157, %v1895, 0.0
  %1911 = vadd.xlane.f32.xlu0 %v1910
  %v1912 = vpop.xlane.xlu0 %1911
  %v1913 = vsel %vm157, %v1897, 0.0
  %1914 = vadd.xlane.f32.xlu0 %v1913
  %v1915 = vpop.xlane.xlu0 %1914
  %v1916 = vsel %vm157, %v1899, 0.0
  %1917 = vadd.xlane.f32.xlu0 %v1916
  %v1918 = vpop.xlane.xlu0 %1917
  %v1919 = vsel %vm157, %v1901, 0.0
  %1920 = vadd.xlane.f32.xlu0 %v1919
  %v1921 = vpop.xlane.xlu0 %1920
  %v1922 = vsel %vm157, %v1903, 0.0
  %1923 = vadd.xlane.f32.xlu0 %v1922
  %v1924 = vpop.xlane.xlu0 %1923
  %v1925 = vsel %vm157, %v1905, 0.0
  %1926 = vadd.xlane.f32.xlu0 %v1925
  %v1927 = vpop.xlane.xlu0 %1926
  %v1928 = vsel %vm157, %v1907, 0.0
  %1929 = vadd.xlane.f32.xlu0 %v1928
  %v1930 = vpop.xlane.xlu0 %1929
  %v1931 = vsel %vm157, %v1909, 0.0
  %1932 = vadd.xlane.f32.xlu0 %v1931
  %v1933 = vpop.xlane.xlu0 %1932
  %v1934 = vrcp.pop %v1912
  %v1935 = vrcp.pop %v1915
  %v1936 = vrcp.pop %v1918
  %v1937 = vrcp.pop %v1921
  %v1938 = vrcp.pop %v1924
  %v1939 = vrcp.pop %v1927
  %v1940 = vrcp.pop %v1930
  %v1941 = vrcp.pop %v1933
  %v1942 = vmul.f32 %v1895, %v1934
  %v1943 = vmul.f32 %v1897, %v1935
  %v1944 = vmul.f32 %v1899, %v1936
  %v1945 = vmul.f32 %v1901, %v1937
  %v1946 = vmul.f32 %v1903, %v1938
  %v1947 = vmul.f32 %v1905, %v1939
  %v1948 = vmul.f32 %v1907, %v1940
  %v1949 = vmul.f32 %v1909, %v1941
  %1958 = vrot.lane.b32.xlu0 %v313, 64
  %v1959 = vpop.permute.xlu0 %1958
  %1960 = vrot.lane.b32.xlu0 %v316, 64
  %v1961 = vpop.permute.xlu0 %1960
  %1962 = vrot.lane.b32.xlu0 %v319, 64
  %v1963 = vpop.permute.xlu0 %1962
  %1964 = vrot.lane.b32.xlu0 %v322, 64
  %v1965 = vpop.permute.xlu0 %1964
  %1966 = vrot.lane.b32.xlu0 %v325, 64
  %v1967 = vpop.permute.xlu0 %1966
  %1968 = vrot.lane.b32.xlu0 %v328, 64
  %v1969 = vpop.permute.xlu0 %1968
  %1970 = vrot.lane.b32.xlu0 %v331, 64
  %v1971 = vpop.permute.xlu0 %1970
  %1972 = vrot.lane.b32.xlu0 %v334, 64
  %v1973 = vpop.permute.xlu0 %1972
  %v1983 = vsel %vm157, %v1942, 0
  %v1986 = vsel %vm157, %v1943, 0
  %v1989 = vsel %vm157, %v1944, 0
  %v1992 = vsel %vm157, %v1945, 0
  %v1995 = vsel %vm157, %v1946, 0
  %v1998 = vsel %vm157, %v1947, 0
  %v2001 = vsel %vm157, %v1948, 0
  %v2004 = vsel %vm157, %v1949, 0
  %2006 = vmatpush.msra.mxu0 0.0
  %2007 = vmatpush.msra.mxu0 0.0
  %2008 = vmatpush.msra.mxu0 0.0
  %2009 = vmatpush.msra.mxu0 0.0
  %2010 = vmatpush.msra.mxu0 0.0
  %2011 = vmatpush.msra.mxu0 0.0
  %2012 = vmatpush.msra.mxu0 0.0
  %2013 = vmatpush.msra.mxu0 0.0
  %2014 = vmatpush.msra.mxu0 %v1973
  %2015 = vmatpush.msra.mxu0 %v1971
  %2016 = vmatpush.msra.mxu0 %v1969
  %2017 = vmatpush.msra.mxu0 %v1967
  %2018 = vmatpush.msra.mxu0 %v1965
  %2019 = vmatpush.msra.mxu0 %v1963
  %2020 = vmatpush.msra.mxu0 %v1961
  %2021 = vmatpush.msra.mxu0 %v1959
  %2022 = vmatmul.f32.gmra.mxu0 %v1983
  %v2023 = vpop.f32.mrf.mxu0
  %v2024 = vadd.f32 0.0, %v2023
  %2025 = vmatmul.f32.gmra.mxu0 %v1986
  %v2026 = vpop.f32.mrf.mxu0
  %v2027 = vadd.f32 0.0, %v2026
  %2028 = vmatmul.f32.gmra.mxu0 %v1989
  %v2029 = vpop.f32.mrf.mxu0
  %v2030 = vadd.f32 0.0, %v2029
  %2031 = vmatmul.f32.gmra.mxu0 %v1992
  %v2032 = vpop.f32.mrf.mxu0
  %v2033 = vadd.f32 0.0, %v2032
  %2034 = vmatmul.f32.gmra.mxu0 %v1995
  %v2035 = vpop.f32.mrf.mxu0
  %v2036 = vadd.f32 0.0, %v2035
  %2037 = vmatmul.f32.gmra.mxu0 %v1998
  %v2038 = vpop.f32.mrf.mxu0
  %v2039 = vadd.f32 0.0, %v2038
  %2040 = vmatmul.f32.gmra.mxu0 %v2001
  %v2041 = vpop.f32.mrf.mxu0
  %v2042 = vadd.f32 0.0, %v2041
  %2043 = vmatmul.f32.gmra.mxu0 %v2004
  %v2044 = vpop.f32.mrf.mxu0
  %v2045 = vadd.f32 0.0, %v2044
  %2046 = vdwg.mxu0
  %2047 = vrot.lane.b32.xlu0 %v411, 96
  %v2048 = vpop.permute.xlu0 %2047
  %2049 = vrot.lane.b32.xlu0 %v412, 96
  %v2050 = vpop.permute.xlu0 %2049
  %2051 = vrot.lane.b32.xlu0 %v413, 96
  %v2052 = vpop.permute.xlu0 %2051
  %2053 = vrot.lane.b32.xlu0 %v414, 96
  %v2054 = vpop.permute.xlu0 %2053
  %2055 = vrot.lane.b32.xlu0 %v415, 96
  %v2056 = vpop.permute.xlu0 %2055
  %2057 = vrot.lane.b32.xlu0 %v416, 96
  %v2058 = vpop.permute.xlu0 %2057
  %2059 = vrot.lane.b32.xlu0 %v417, 96
  %v2060 = vpop.permute.xlu0 %2059
  %2061 = vrot.lane.b32.xlu0 %v418, 96
  %v2062 = vpop.permute.xlu0 %2061
  %2063 = vrot.lane.b32.xlu0 %v433, 32
  %v2064 = vpop.permute.xlu0 %2063
  %2065 = vrot.lane.b32.xlu0 %v434, 32
  %v2066 = vpop.permute.xlu0 %2065
  %2067 = vrot.lane.b32.xlu0 %v435, 32
  %v2068 = vpop.permute.xlu0 %2067
  %2069 = vrot.lane.b32.xlu0 %v436, 32
  %v2070 = vpop.permute.xlu0 %2069
  %2071 = vrot.lane.b32.xlu0 %v437, 32
  %v2072 = vpop.permute.xlu0 %2071
  %2073 = vrot.lane.b32.xlu0 %v438, 32
  %v2074 = vpop.permute.xlu0 %2073
  %2075 = vrot.lane.b32.xlu0 %v439, 32
  %v2076 = vpop.permute.xlu0 %2075
  %2077 = vrot.lane.b32.xlu0 %v440, 32
  %v2078 = vpop.permute.xlu0 %2077
  %v2079 = vsel %vm466, %v2048, 0
  %v2081 = vsel %vm466, %v2050, 0
  %v2083 = vsel %vm466, %v2052, 0
  %v2085 = vsel %vm466, %v2054, 0
  %v2087 = vsel %vm466, %v2056, 0
  %v2089 = vsel %vm466, %v2058, 0
  %v2091 = vsel %vm466, %v2060, 0
  %v2093 = vsel %vm466, %v2062, 0
  %v2095 = vsel %vm466, %v2064, 0
  %v2097 = vsel %vm466, %v2066, 0
  %v2099 = vsel %vm466, %v2068, 0
  %v2101 = vsel %vm466, %v2070, 0
  %v2103 = vsel %vm466, %v2072, 0
  %v2105 = vsel %vm466, %v2074, 0
  %v2107 = vsel %vm466, %v2076, 0
  %v2109 = vsel %vm466, %v2078, 0
  %2111 = vmatpush.xpose.msra.mxu0 0.0
  %2112 = vmatpush.xpose.msra.mxu0 0.0
  %2113 = vmatpush.xpose.msra.mxu0 0.0
  %2114 = vmatpush.xpose.msra.mxu0 0.0
  %2115 = vmatpush.xpose.msra.mxu0 0.0
  %2116 = vmatpush.xpose.msra.mxu0 0.0
  %2117 = vmatpush.xpose.msra.mxu0 0.0
  %2118 = vmatpush.xpose.msra.mxu0 0.0
  %2119 = vmatpush.xpose.msra.mxu0 %v2109
  %2120 = vmatpush.xpose.msra.mxu0 %v2107
  %2121 = vmatpush.xpose.msra.mxu0 %v2105
  %2122 = vmatpush.xpose.msra.mxu0 %v2103
  %2123 = vmatpush.xpose.msra.mxu0 %v2101
  %2124 = vmatpush.xpose.msra.mxu0 %v2099
  %2125 = vmatpush.xpose.msra.mxu0 %v2097
  %2126 = vmatpush.xpose.msra.mxu0 %v2095
  %2127 = vmatmul.f32.gmra.mxu0 %v2079
  %v2128 = vpop.f32.mrf.mxu0
  %v2129 = vadd.f32 0.0, %v2128
  %2130 = vmatmul.f32.gmra.mxu0 %v2081
  %v2131 = vpop.f32.mrf.mxu0
  %v2132 = vadd.f32 0.0, %v2131
  %2133 = vmatmul.f32.gmra.mxu0 %v2083
  %v2134 = vpop.f32.mrf.mxu0
  %v2135 = vadd.f32 0.0, %v2134
  %2136 = vmatmul.f32.gmra.mxu0 %v2085
  %v2137 = vpop.f32.mrf.mxu0
  %v2138 = vadd.f32 0.0, %v2137
  %2139 = vmatmul.f32.gmra.mxu0 %v2087
  %v2140 = vpop.f32.mrf.mxu0
  %v2141 = vadd.f32 0.0, %v2140
  %2142 = vmatmul.f32.gmra.mxu0 %v2089
  %v2143 = vpop.f32.mrf.mxu0
  %v2144 = vadd.f32 0.0, %v2143
  %2145 = vmatmul.f32.gmra.mxu0 %v2091
  %v2146 = vpop.f32.mrf.mxu0
  %v2147 = vadd.f32 0.0, %v2146
  %2148 = vmatmul.f32.gmra.mxu0 %v2093
  %v2149 = vpop.f32.mrf.mxu0
  %v2150 = vadd.f32 0.0, %v2149
  %2151 = vdwg.mxu0
  %v2152 = vsel %vm157, %v2129, -inf
  %2153 = vmax.xlane.f32.xlu0 %v2152
  %v2154 = vpop.xlane.xlu0 %2153
  %v2155 = vsel %vm157, %v2132, -inf
  %2156 = vmax.xlane.f32.xlu0 %v2155
  %v2157 = vpop.xlane.xlu0 %2156
  %v2158 = vsel %vm157, %v2135, -inf
  %2159 = vmax.xlane.f32.xlu0 %v2158
  %v2160 = vpop.xlane.xlu0 %2159
  %v2161 = vsel %vm157, %v2138, -inf
  %2162 = vmax.xlane.f32.xlu0 %v2161
  %v2163 = vpop.xlane.xlu0 %2162
  %v2164 = vsel %vm157, %v2141, -inf
  %2165 = vmax.xlane.f32.xlu0 %v2164
  %v2166 = vpop.xlane.xlu0 %2165
  %v2167 = vsel %vm157, %v2144, -inf
  %2168 = vmax.xlane.f32.xlu0 %v2167
  %v2169 = vpop.xlane.xlu0 %2168
  %v2170 = vsel %vm157, %v2147, -inf
  %2171 = vmax.xlane.f32.xlu0 %v2170
  %v2172 = vpop.xlane.xlu0 %2171
  %v2173 = vsel %vm157, %v2150, -inf
  %2174 = vmax.xlane.f32.xlu0 %v2173
  %v2175 = vpop.xlane.xlu0 %2174
  %v2176 = vsub.f32 %v2129, %v2154
  %v2177 = vsub.f32 %v2132, %v2157
  %v2178 = vsub.f32 %v2135, %v2160
  %v2179 = vsub.f32 %v2138, %v2163
  %v2180 = vsub.f32 %v2141, %v2166
  %v2181 = vsub.f32 %v2144, %v2169
  %v2182 = vsub.f32 %v2147, %v2172
  %v2183 = vsub.f32 %v2150, %v2175
  %v2184 = vmul.f32 %v2176, 1.442695
  %v2185 = vpow.pop %v2184
  %v2186 = vmul.f32 %v2177, 1.442695
  %v2187 = vpow.pop %v2186
  %v2188 = vmul.f32 %v2178, 1.442695
  %v2189 = vpow.pop %v2188
  %v2190 = vmul.f32 %v2179, 1.442695
  %v2191 = vpow.pop %v2190
  %v2192 = vmul.f32 %v2180, 1.442695
  %v2193 = vpow.pop %v2192
  %v2194 = vmul.f32 %v2181, 1.442695
  %v2195 = vpow.pop %v2194
  %v2196 = vmul.f32 %v2182, 1.442695
  %v2197 = vpow.pop %v2196
  %v2198 = vmul.f32 %v2183, 1.442695
  %v2199 = vpow.pop %v2198
  %v2200 = vsel %vm157, %v2185, 0.0
  %2201 = vadd.xlane.f32.xlu0 %v2200
  %v2202 = vpop.xlane.xlu0 %2201
  %v2203 = vsel %vm157, %v2187, 0.0
  %2204 = vadd.xlane.f32.xlu0 %v2203
  %v2205 = vpop.xlane.xlu0 %2204
  %v2206 = vsel %vm157, %v2189, 0.0
  %2207 = vadd.xlane.f32.xlu0 %v2206
  %v2208 = vpop.xlane.xlu0 %2207
  %v2209 = vsel %vm157, %v2191, 0.0
  %2210 = vadd.xlane.f32.xlu0 %v2209
  %v2211 = vpop.xlane.xlu0 %2210
  %v2212 = vsel %vm157, %v2193, 0.0
  %2213 = vadd.xlane.f32.xlu0 %v2212
  %v2214 = vpop.xlane.xlu0 %2213
  %v2215 = vsel %vm157, %v2195, 0.0
  %2216 = vadd.xlane.f32.xlu0 %v2215
  %v2217 = vpop.xlane.xlu0 %2216
  %v2218 = vsel %vm157, %v2197, 0.0
  %2219 = vadd.xlane.f32.xlu0 %v2218
  %v2220 = vpop.xlane.xlu0 %2219
  %v2221 = vsel %vm157, %v2199, 0.0
  %2222 = vadd.xlane.f32.xlu0 %v2221
  %v2223 = vpop.xlane.xlu0 %2222
  %v2224 = vrcp.pop %v2202
  %v2225 = vrcp.pop %v2205
  %v2226 = vrcp.pop %v2208
  %v2227 = vrcp.pop %v2211
  %v2228 = vrcp.pop %v2214
  %v2229 = vrcp.pop %v2217
  %v2230 = vrcp.pop %v2220
  %v2231 = vrcp.pop %v2223
  %v2232 = vmul.f32 %v2185, %v2224
  %v2233 = vmul.f32 %v2187, %v2225
  %v2234 = vmul.f32 %v2189, %v2226
  %v2235 = vmul.f32 %v2191, %v2227
  %v2236 = vmul.f32 %v2193, %v2228
  %v2237 = vmul.f32 %v2195, %v2229
  %v2238 = vmul.f32 %v2197, %v2230
  %v2239 = vmul.f32 %v2199, %v2231
  %2240 = vrot.lane.b32.xlu0 %v411, 80
  %v2241 = vpop.permute.xlu0 %2240
  %2242 = vrot.lane.b32.xlu0 %v412, 80
  %v2243 = vpop.permute.xlu0 %2242
  %2244 = vrot.lane.b32.xlu0 %v413, 80
  %v2245 = vpop.permute.xlu0 %2244
  %2246 = vrot.lane.b32.xlu0 %v414, 80
  %v2247 = vpop.permute.xlu0 %2246
  %2248 = vrot.lane.b32.xlu0 %v415, 80
  %v2249 = vpop.permute.xlu0 %2248
  %2250 = vrot.lane.b32.xlu0 %v416, 80
  %v2251 = vpop.permute.xlu0 %2250
  %2252 = vrot.lane.b32.xlu0 %v417, 80
  %v2253 = vpop.permute.xlu0 %2252
  %2254 = vrot.lane.b32.xlu0 %v418, 80
  %v2255 = vpop.permute.xlu0 %2254
  %2256 = vrot.lane.b32.xlu0 %v433, 16
  %v2257 = vpop.permute.xlu0 %2256
  %2258 = vrot.lane.b32.xlu0 %v434, 16
  %v2259 = vpop.permute.xlu0 %2258
  %2260 = vrot.lane.b32.xlu0 %v435, 16
  %v2261 = vpop.permute.xlu0 %2260
  %2262 = vrot.lane.b32.xlu0 %v436, 16
  %v2263 = vpop.permute.xlu0 %2262
  %2264 = vrot.lane.b32.xlu0 %v437, 16
  %v2265 = vpop.permute.xlu0 %2264
  %2266 = vrot.lane.b32.xlu0 %v438, 16
  %v2267 = vpop.permute.xlu0 %2266
  %2268 = vrot.lane.b32.xlu0 %v439, 16
  %v2269 = vpop.permute.xlu0 %2268
  %2270 = vrot.lane.b32.xlu0 %v440, 16
  %v2271 = vpop.permute.xlu0 %2270
  %v2272 = vsel %vm466, %v2241, 0
  %v2274 = vsel %vm466, %v2243, 0
  %v2276 = vsel %vm466, %v2245, 0
  %v2278 = vsel %vm466, %v2247, 0
  %v2280 = vsel %vm466, %v2249, 0
  %v2282 = vsel %vm466, %v2251, 0
  %v2284 = vsel %vm466, %v2253, 0
  %v2286 = vsel %vm466, %v2255, 0
  %v2288 = vsel %vm466, %v2257, 0
  %v2290 = vsel %vm466, %v2259, 0
  %v2292 = vsel %vm466, %v2261, 0
  %v2294 = vsel %vm466, %v2263, 0
  %v2296 = vsel %vm466, %v2265, 0
  %v2298 = vsel %vm466, %v2267, 0
  %v2300 = vsel %vm466, %v2269, 0
  %v2302 = vsel %vm466, %v2271, 0
  %2304 = vmatpush.xpose.msra.mxu0 0.0
  %2305 = vmatpush.xpose.msra.mxu0 0.0
  %2306 = vmatpush.xpose.msra.mxu0 0.0
  %2307 = vmatpush.xpose.msra.mxu0 0.0
  %2308 = vmatpush.xpose.msra.mxu0 0.0
  %2309 = vmatpush.xpose.msra.mxu0 0.0
  %2310 = vmatpush.xpose.msra.mxu0 0.0
  %2311 = vmatpush.xpose.msra.mxu0 0.0
  %2312 = vmatpush.xpose.msra.mxu0 %v2302
  %2313 = vmatpush.xpose.msra.mxu0 %v2300
  %2314 = vmatpush.xpose.msra.mxu0 %v2298
  %2315 = vmatpush.xpose.msra.mxu0 %v2296
  %2316 = vmatpush.xpose.msra.mxu0 %v2294
  %2317 = vmatpush.xpose.msra.mxu0 %v2292
  %2318 = vmatpush.xpose.msra.mxu0 %v2290
  %2319 = vmatpush.xpose.msra.mxu0 %v2288
  %2320 = vmatmul.f32.gmra.mxu0 %v2272
  %v2321 = vpop.f32.mrf.mxu0
  %v2322 = vadd.f32 0.0, %v2321
  %2323 = vmatmul.f32.gmra.mxu0 %v2274
  %v2324 = vpop.f32.mrf.mxu0
  %v2325 = vadd.f32 0.0, %v2324
  %2326 = vmatmul.f32.gmra.mxu0 %v2276
  %v2327 = vpop.f32.mrf.mxu0
  %v2328 = vadd.f32 0.0, %v2327
  %2329 = vmatmul.f32.gmra.mxu0 %v2278
  %v2330 = vpop.f32.mrf.mxu0
  %v2331 = vadd.f32 0.0, %v2330
  %2332 = vmatmul.f32.gmra.mxu0 %v2280
  %v2333 = vpop.f32.mrf.mxu0
  %v2334 = vadd.f32 0.0, %v2333
  %2335 = vmatmul.f32.gmra.mxu0 %v2282
  %v2336 = vpop.f32.mrf.mxu0
  %v2337 = vadd.f32 0.0, %v2336
  %2338 = vmatmul.f32.gmra.mxu0 %v2284
  %v2339 = vpop.f32.mrf.mxu0
  %v2340 = vadd.f32 0.0, %v2339
  %2341 = vmatmul.f32.gmra.mxu0 %v2286
  %v2342 = vpop.f32.mrf.mxu0
  %v2343 = vadd.f32 0.0, %v2342
  %2344 = vdwg.mxu0
  %v2345 = vsel %vm157, %v2322, -inf
  %2346 = vmax.xlane.f32.xlu0 %v2345
  %v2347 = vpop.xlane.xlu0 %2346
  %v2348 = vsel %vm157, %v2325, -inf
  %2349 = vmax.xlane.f32.xlu0 %v2348
  %v2350 = vpop.xlane.xlu0 %2349
  %v2351 = vsel %vm157, %v2328, -inf
  %2352 = vmax.xlane.f32.xlu0 %v2351
  %v2353 = vpop.xlane.xlu0 %2352
  %v2354 = vsel %vm157, %v2331, -inf
  %2355 = vmax.xlane.f32.xlu0 %v2354
  %v2356 = vpop.xlane.xlu0 %2355
  %v2357 = vsel %vm157, %v2334, -inf
  %2358 = vmax.xlane.f32.xlu0 %v2357
  %v2359 = vpop.xlane.xlu0 %2358
  %v2360 = vsel %vm157, %v2337, -inf
  %2361 = vmax.xlane.f32.xlu0 %v2360
  %v2362 = vpop.xlane.xlu0 %2361
  %v2363 = vsel %vm157, %v2340, -inf
  %2364 = vmax.xlane.f32.xlu0 %v2363
  %v2365 = vpop.xlane.xlu0 %2364
  %v2366 = vsel %vm157, %v2343, -inf
  %2367 = vmax.xlane.f32.xlu0 %v2366
  %v2368 = vpop.xlane.xlu0 %2367
  %v2369 = vsub.f32 %v2322, %v2347
  %v2370 = vsub.f32 %v2325, %v2350
  %v2371 = vsub.f32 %v2328, %v2353
  %v2372 = vsub.f32 %v2331, %v2356
  %v2373 = vsub.f32 %v2334, %v2359
  %v2374 = vsub.f32 %v2337, %v2362
  %v2375 = vsub.f32 %v2340, %v2365
  %v2376 = vsub.f32 %v2343, %v2368
  %v2377 = vmul.f32 %v2369, 1.442695
  %v2378 = vpow.pop %v2377
  %v2379 = vmul.f32 %v2370, 1.442695
  %v2380 = vpow.pop %v2379
  %v2381 = vmul.f32 %v2371, 1.442695
  %v2382 = vpow.pop %v2381
  %v2383 = vmul.f32 %v2372, 1.442695
  %v2384 = vpow.pop %v2383
  %v2385 = vmul.f32 %v2373, 1.442695
  %v2386 = vpow.pop %v2385
  %v2387 = vmul.f32 %v2374, 1.442695
  %v2388 = vpow.pop %v2387
  %v2389 = vmul.f32 %v2375, 1.442695
  %v2390 = vpow.pop %v2389
  %v2391 = vmul.f32 %v2376, 1.442695
  %v2392 = vpow.pop %v2391
  %v2393 = vsel %vm157, %v2378, 0.0
  %2394 = vadd.xlane.f32.xlu0 %v2393
  %v2395 = vpop.xlane.xlu0 %2394
  %v2396 = vsel %vm157, %v2380, 0.0
  %2397 = vadd.xlane.f32.xlu0 %v2396
  %v2398 = vpop.xlane.xlu0 %2397
  %v2399 = vsel %vm157, %v2382, 0.0
  %2400 = vadd.xlane.f32.xlu0 %v2399
  %v2401 = vpop.xlane.xlu0 %2400
  %v2402 = vsel %vm157, %v2384, 0.0
  %2403 = vadd.xlane.f32.xlu0 %v2402
  %v2404 = vpop.xlane.xlu0 %2403
  %v2405 = vsel %vm157, %v2386, 0.0
  %2406 = vadd.xlane.f32.xlu0 %v2405
  %v2407 = vpop.xlane.xlu0 %2406
  %v2408 = vsel %vm157, %v2388, 0.0
  %2409 = vadd.xlane.f32.xlu0 %v2408
  %v2410 = vpop.xlane.xlu0 %2409
  %v2411 = vsel %vm157, %v2390, 0.0
  %2412 = vadd.xlane.f32.xlu0 %v2411
  %v2413 = vpop.xlane.xlu0 %2412
  %v2414 = vsel %vm157, %v2392, 0.0
  %2415 = vadd.xlane.f32.xlu0 %v2414
  %v2416 = vpop.xlane.xlu0 %2415
  %v2417 = vrcp.pop %v2395
  %v2418 = vrcp.pop %v2398
  %v2419 = vrcp.pop %v2401
  %v2420 = vrcp.pop %v2404
  %v2421 = vrcp.pop %v2407
  %v2422 = vrcp.pop %v2410
  %v2423 = vrcp.pop %v2413
  %v2424 = vrcp.pop %v2416
  %v2425 = vmul.f32 %v2378, %v2417
  %v2426 = vmul.f32 %v2380, %v2418
  %v2427 = vmul.f32 %v2382, %v2419
  %v2428 = vmul.f32 %v2384, %v2420
  %v2429 = vmul.f32 %v2386, %v2421
  %v2430 = vmul.f32 %v2388, %v2422
  %v2431 = vmul.f32 %v2390, %v2423
  %v2432 = vmul.f32 %v2392, %v2424
  %2441 = vrot.lane.b32.xlu0 %v378, 64
  %v2442 = vpop.permute.xlu0 %2441
  %2443 = vrot.lane.b32.xlu0 %v381, 64
  %v2444 = vpop.permute.xlu0 %2443
  %2445 = vrot.lane.b32.xlu0 %v384, 64
  %v2446 = vpop.permute.xlu0 %2445
  %2447 = vrot.lane.b32.xlu0 %v387, 64
  %v2448 = vpop.permute.xlu0 %2447
  %2449 = vrot.lane.b32.xlu0 %v390, 64
  %v2450 = vpop.permute.xlu0 %2449
  %2451 = vrot.lane.b32.xlu0 %v393, 64
  %v2452 = vpop.permute.xlu0 %2451
  %2453 = vrot.lane.b32.xlu0 %v396, 64
  %v2454 = vpop.permute.xlu0 %2453
  %2455 = vrot.lane.b32.xlu0 %v399, 64
  %v2456 = vpop.permute.xlu0 %2455
  %v2466 = vsel %vm157, %v2425, 0
  %v2469 = vsel %vm157, %v2426, 0
  %v2472 = vsel %vm157, %v2427, 0
  %v2475 = vsel %vm157, %v2428, 0
  %v2478 = vsel %vm157, %v2429, 0
  %v2481 = vsel %vm157, %v2430, 0
  %v2484 = vsel %vm157, %v2431, 0
  %v2487 = vsel %vm157, %v2432, 0
  %2489 = vmatpush.msra.mxu0 0.0
  %2490 = vmatpush.msra.mxu0 0.0
  %2491 = vmatpush.msra.mxu0 0.0
  %2492 = vmatpush.msra.mxu0 0.0
  %2493 = vmatpush.msra.mxu0 0.0
  %2494 = vmatpush.msra.mxu0 0.0
  %2495 = vmatpush.msra.mxu0 0.0
  %2496 = vmatpush.msra.mxu0 0.0
  %2497 = vmatpush.msra.mxu0 %v2456
  %2498 = vmatpush.msra.mxu0 %v2454
  %2499 = vmatpush.msra.mxu0 %v2452
  %2500 = vmatpush.msra.mxu0 %v2450
  %2501 = vmatpush.msra.mxu0 %v2448
  %2502 = vmatpush.msra.mxu0 %v2446
  %2503 = vmatpush.msra.mxu0 %v2444
  %2504 = vmatpush.msra.mxu0 %v2442
  %2505 = vmatmul.f32.gmra.mxu0 %v2466
  %v2506 = vpop.f32.mrf.mxu0
  %v2507 = vadd.f32 0.0, %v2506
  %2508 = vmatmul.f32.gmra.mxu0 %v2469
  %v2509 = vpop.f32.mrf.mxu0
  %v2510 = vadd.f32 0.0, %v2509
  %2511 = vmatmul.f32.gmra.mxu0 %v2472
  %v2512 = vpop.f32.mrf.mxu0
  %v2513 = vadd.f32 0.0, %v2512
  %2514 = vmatmul.f32.gmra.mxu0 %v2475
  %v2515 = vpop.f32.mrf.mxu0
  %v2516 = vadd.f32 0.0, %v2515
  %2517 = vmatmul.f32.gmra.mxu0 %v2478
  %v2518 = vpop.f32.mrf.mxu0
  %v2519 = vadd.f32 0.0, %v2518
  %2520 = vmatmul.f32.gmra.mxu0 %v2481
  %v2521 = vpop.f32.mrf.mxu0
  %v2522 = vadd.f32 0.0, %v2521
  %2523 = vmatmul.f32.gmra.mxu0 %v2484
  %v2524 = vpop.f32.mrf.mxu0
  %v2525 = vadd.f32 0.0, %v2524
  %2526 = vmatmul.f32.gmra.mxu0 %v2487
  %v2527 = vpop.f32.mrf.mxu0
  %v2528 = vadd.f32 0.0, %v2527
  %2529 = vdwg.mxu0
  %v2531 = vsel %vm157, %v1749, 0
  %v2534 = vsel %vm157, %v1750, 0
  %v2537 = vsel %vm157, %v1751, 0
  %v2540 = vsel %vm157, %v1752, 0
  %v2543 = vsel %vm157, %v1753, 0
  %v2546 = vsel %vm157, %v1754, 0
  %v2549 = vsel %vm157, %v1755, 0
  %v2552 = vsel %vm157, %v1756, 0
  %2554 = vmatpush.msra.mxu0 0.0
  %2555 = vmatpush.msra.mxu0 0.0
  %2556 = vmatpush.msra.mxu0 0.0
  %2557 = vmatpush.msra.mxu0 0.0
  %2558 = vmatpush.msra.mxu0 0.0
  %2559 = vmatpush.msra.mxu0 0.0
  %2560 = vmatpush.msra.mxu0 0.0
  %2561 = vmatpush.msra.mxu0 0.0
  %2562 = vmatpush.msra.mxu0 %v334
  %2563 = vmatpush.msra.mxu0 %v331
  %2564 = vmatpush.msra.mxu0 %v328
  %2565 = vmatpush.msra.mxu0 %v325
  %2566 = vmatpush.msra.mxu0 %v322
  %2567 = vmatpush.msra.mxu0 %v319
  %2568 = vmatpush.msra.mxu0 %v316
  %2569 = vmatpush.msra.mxu0 %v313
  %2570 = vmatmul.f32.gmra.mxu0 %v2531
  %v2571 = vpop.f32.mrf.mxu0
  %v2572 = vadd.f32 %v2024, %v2571
  %2573 = vmatmul.f32.gmra.mxu0 %v2534
  %v2574 = vpop.f32.mrf.mxu0
  %v2575 = vadd.f32 %v2027, %v2574
  %2576 = vmatmul.f32.gmra.mxu0 %v2537
  %v2577 = vpop.f32.mrf.mxu0
  %v2578 = vadd.f32 %v2030, %v2577
  %2579 = vmatmul.f32.gmra.mxu0 %v2540
  %v2580 = vpop.f32.mrf.mxu0
  %v2581 = vadd.f32 %v2033, %v2580
  %2582 = vmatmul.f32.gmra.mxu0 %v2543
  %v2583 = vpop.f32.mrf.mxu0
  %v2584 = vadd.f32 %v2036, %v2583
  %2585 = vmatmul.f32.gmra.mxu0 %v2546
  %v2586 = vpop.f32.mrf.mxu0
  %v2587 = vadd.f32 %v2039, %v2586
  %2588 = vmatmul.f32.gmra.mxu0 %v2549
  %v2589 = vpop.f32.mrf.mxu0
  %v2590 = vadd.f32 %v2042, %v2589
  %2591 = vmatmul.f32.gmra.mxu0 %v2552
  %v2592 = vpop.f32.mrf.mxu0
  %v2593 = vadd.f32 %v2045, %v2592
  %2594 = vdwg.mxu0
  %v2596 = vsel %vm157, %v2232, 0
  %v2599 = vsel %vm157, %v2233, 0
  %v2602 = vsel %vm157, %v2234, 0
  %v2605 = vsel %vm157, %v2235, 0
  %v2608 = vsel %vm157, %v2236, 0
  %v2611 = vsel %vm157, %v2237, 0
  %v2614 = vsel %vm157, %v2238, 0
  %v2617 = vsel %vm157, %v2239, 0
  %2619 = vmatpush.msra.mxu0 0.0
  %2620 = vmatpush.msra.mxu0 0.0
  %2621 = vmatpush.msra.mxu0 0.0
  %2622 = vmatpush.msra.mxu0 0.0
  %2623 = vmatpush.msra.mxu0 0.0
  %2624 = vmatpush.msra.mxu0 0.0
  %2625 = vmatpush.msra.mxu0 0.0
  %2626 = vmatpush.msra.mxu0 0.0
  %2627 = vmatpush.msra.mxu0 %v399
  %2628 = vmatpush.msra.mxu0 %v396
  %2629 = vmatpush.msra.mxu0 %v393
  %2630 = vmatpush.msra.mxu0 %v390
  %2631 = vmatpush.msra.mxu0 %v387
  %2632 = vmatpush.msra.mxu0 %v384
  %2633 = vmatpush.msra.mxu0 %v381
  %2634 = vmatpush.msra.mxu0 %v378
  %2635 = vmatmul.f32.gmra.mxu0 %v2596
  %v2636 = vpop.f32.mrf.mxu0
  %v2637 = vadd.f32 %v2507, %v2636
  %2638 = vmatmul.f32.gmra.mxu0 %v2599
  %v2639 = vpop.f32.mrf.mxu0
  %v2640 = vadd.f32 %v2510, %v2639
  %2641 = vmatmul.f32.gmra.mxu0 %v2602
  %v2642 = vpop.f32.mrf.mxu0
  %v2643 = vadd.f32 %v2513, %v2642
  %2644 = vmatmul.f32.gmra.mxu0 %v2605
  %v2645 = vpop.f32.mrf.mxu0
  %v2646 = vadd.f32 %v2516, %v2645
  %2647 = vmatmul.f32.gmra.mxu0 %v2608
  %v2648 = vpop.f32.mrf.mxu0
  %v2649 = vadd.f32 %v2519, %v2648
  %2650 = vmatmul.f32.gmra.mxu0 %v2611
  %v2651 = vpop.f32.mrf.mxu0
  %v2652 = vadd.f32 %v2522, %v2651
  %2653 = vmatmul.f32.gmra.mxu0 %v2614
  %v2654 = vpop.f32.mrf.mxu0
  %v2655 = vadd.f32 %v2525, %v2654
  %2656 = vmatmul.f32.gmra.mxu0 %v2617
  %v2657 = vpop.f32.mrf.mxu0
  %v2658 = vadd.f32 %v2528, %v2657
  %2659 = vdwg.mxu0
  %v2660 = vadd.f32 %v2572, %v2637
  %v2661 = vadd.f32 %v2575, %v2640
  %v2662 = vadd.f32 %v2578, %v2643
  %v2663 = vadd.f32 %v2581, %v2646
  %v2664 = vadd.f32 %v2584, %v2649
  %v2665 = vadd.f32 %v2587, %v2652
  %v2666 = vadd.f32 %v2590, %v2655
  %v2667 = vadd.f32 %v2593, %v2658
  %v2668 = vadd.f32 %v110, %v2660
  %v2669 = vadd.f32 %v113, %v2661
  %v2670 = vadd.f32 %v116, %v2662
  %v2671 = vadd.f32 %v119, %v2663
  %v2672 = vadd.f32 %v122, %v2664
  %v2673 = vadd.f32 %v125, %v2665
  %v2674 = vadd.f32 %v128, %v2666
  %v2675 = vadd.f32 %v131, %v2667
  %v2676 = vadd.f32 %v2668, %v1555
  %v2677 = vadd.f32 %v2669, %v1555
  %v2678 = vadd.f32 %v2670, %v1555
  %v2679 = vadd.f32 %v2671, %v1555
  %v2680 = vadd.f32 %v2672, %v1555
  %v2681 = vadd.f32 %v2673, %v1555
  %v2682 = vadd.f32 %v2674, %v1555
  %v2683 = vadd.f32 %v2675, %v1555
  %v2684 = vld [vmem:[%s4 + $0xb] sm:$0x1]
  %v2685 = vld [vmem:[%s4 + $0xc] sm:$0x1]
  %v2686 = vsel %vm157, %v1556, 0.0
  %2687 = vadd.xlane.f32.xlu0 %v2686
  %v2688 = vpop.xlane.xlu0 %2687
  %v2689 = vsel %vm157, %v1557, 0.0
  %2690 = vadd.xlane.f32.xlu0 %v2689
  %v2691 = vpop.xlane.xlu0 %2690
  %v2692 = vsel %vm157, %v1558, 0.0
  %2693 = vadd.xlane.f32.xlu0 %v2692
  %v2694 = vpop.xlane.xlu0 %2693
  %v2695 = vsel %vm157, %v1559, 0.0
  %2696 = vadd.xlane.f32.xlu0 %v2695
  %v2697 = vpop.xlane.xlu0 %2696
  %v2698 = vsel %vm157, %v1560, 0.0
  %2699 = vadd.xlane.f32.xlu0 %v2698
  %v2700 = vpop.xlane.xlu0 %2699
  %v2701 = vsel %vm157, %v1561, 0.0
  %2702 = vadd.xlane.f32.xlu0 %v2701
  %v2703 = vpop.xlane.xlu0 %2702
  %v2704 = vsel %vm157, %v1562, 0.0
  %2705 = vadd.xlane.f32.xlu0 %v2704
  %v2706 = vpop.xlane.xlu0 %2705
  %v2707 = vsel %vm157, %v1563, 0.0
  %2708 = vadd.xlane.f32.xlu0 %v2707
  %v2709 = vpop.xlane.xlu0 %2708
  %v2710 = vsel %vm157, %v2676, 0.0
  %2711 = vadd.xlane.f32.xlu0 %v2710
  %v2712 = vpop.xlane.xlu0 %2711
  %v2713 = vsel %vm157, %v2677, 0.0
  %2714 = vadd.xlane.f32.xlu0 %v2713
  %v2715 = vpop.xlane.xlu0 %2714
  %v2716 = vsel %vm157, %v2678, 0.0
  %2717 = vadd.xlane.f32.xlu0 %v2716
  %v2718 = vpop.xlane.xlu0 %2717
  %v2719 = vsel %vm157, %v2679, 0.0
  %2720 = vadd.xlane.f32.xlu0 %v2719
  %v2721 = vpop.xlane.xlu0 %2720
  %v2722 = vsel %vm157, %v2680, 0.0
  %2723 = vadd.xlane.f32.xlu0 %v2722
  %v2724 = vpop.xlane.xlu0 %2723
  %v2725 = vsel %vm157, %v2681, 0.0
  %2726 = vadd.xlane.f32.xlu0 %v2725
  %v2727 = vpop.xlane.xlu0 %2726
  %v2728 = vsel %vm157, %v2682, 0.0
  %2729 = vadd.xlane.f32.xlu0 %v2728
  %v2730 = vpop.xlane.xlu0 %2729
  %v2731 = vsel %vm157, %v2683, 0.0
  %2732 = vadd.xlane.f32.xlu0 %v2731
  %v2733 = vpop.xlane.xlu0 %2732
  %v2734 = vrcp.pop 64.0
  %v2735 = vmul.f32 64.0, %v2734
  %v2736 = vsub.f32 1.0, %v2735
  %v2737 = vmul.f32 %v2734, %v2736
  %v2738 = vadd.f32 %v2734, %v2737
  %vm2739 = vweird.f32 %v2734
  %v2740 = vsel %vm2739, %v2734, %v2738
  %v2741 = vmul.f32 %v2688, %v2740
  %v2742 = vmul.f32 %v2691, %v2740
  %v2743 = vmul.f32 %v2694, %v2740
  %v2744 = vmul.f32 %v2697, %v2740
  %v2745 = vmul.f32 %v2700, %v2740
  %v2746 = vmul.f32 %v2703, %v2740
  %v2747 = vmul.f32 %v2706, %v2740
  %v2748 = vmul.f32 %v2709, %v2740
  %v2749 = vmul.f32 %v2712, %v2740
  %v2750 = vmul.f32 %v2715, %v2740
  %v2751 = vmul.f32 %v2718, %v2740
  %v2752 = vmul.f32 %v2721, %v2740
  %v2753 = vmul.f32 %v2724, %v2740
  %v2754 = vmul.f32 %v2727, %v2740
  %v2755 = vmul.f32 %v2730, %v2740
  %v2756 = vmul.f32 %v2733, %v2740
  %v2757 = vmul.f32 %v1556, %v1556
  %v2758 = vmul.f32 %v1557, %v1557
  %v2759 = vmul.f32 %v1558, %v1558
  %v2760 = vmul.f32 %v1559, %v1559
  %v2761 = vmul.f32 %v1560, %v1560
  %v2762 = vmul.f32 %v1561, %v1561
  %v2763 = vmul.f32 %v1562, %v1562
  %v2764 = vmul.f32 %v1563, %v1563
  %v2765 = vmul.f32 %v2676, %v2676
  %v2766 = vmul.f32 %v2677, %v2677
  %v2767 = vmul.f32 %v2678, %v2678
  %v2768 = vmul.f32 %v2679, %v2679
  %v2769 = vmul.f32 %v2680, %v2680
  %v2770 = vmul.f32 %v2681, %v2681
  %v2771 = vmul.f32 %v2682, %v2682
  %v2772 = vmul.f32 %v2683, %v2683
  %v2773 = vsel %vm157, %v2757, 0.0
  %2774 = vadd.xlane.f32.xlu0 %v2773
  %v2775 = vpop.xlane.xlu0 %2774
  %v2776 = vsel %vm157, %v2758, 0.0
  %2777 = vadd.xlane.f32.xlu0 %v2776
  %v2778 = vpop.xlane.xlu0 %2777
  %v2779 = vsel %vm157, %v2759, 0.0
  %2780 = vadd.xlane.f32.xlu0 %v2779
  %v2781 = vpop.xlane.xlu0 %2780
  %v2782 = vsel %vm157, %v2760, 0.0
  %2783 = vadd.xlane.f32.xlu0 %v2782
  %v2784 = vpop.xlane.xlu0 %2783
  %v2785 = vsel %vm157, %v2761, 0.0
  %2786 = vadd.xlane.f32.xlu0 %v2785
  %v2787 = vpop.xlane.xlu0 %2786
  %v2788 = vsel %vm157, %v2762, 0.0
  %2789 = vadd.xlane.f32.xlu0 %v2788
  %v2790 = vpop.xlane.xlu0 %2789
  %v2791 = vsel %vm157, %v2763, 0.0
  %2792 = vadd.xlane.f32.xlu0 %v2791
  %v2793 = vpop.xlane.xlu0 %2792
  %v2794 = vsel %vm157, %v2764, 0.0
  %2795 = vadd.xlane.f32.xlu0 %v2794
  %v2796 = vpop.xlane.xlu0 %2795
  %v2797 = vsel %vm157, %v2765, 0.0
  %2798 = vadd.xlane.f32.xlu0 %v2797
  %v2799 = vpop.xlane.xlu0 %2798
  %v2800 = vsel %vm157, %v2766, 0.0
  %2801 = vadd.xlane.f32.xlu0 %v2800
  %v2802 = vpop.xlane.xlu0 %2801
  %v2803 = vsel %vm157, %v2767, 0.0
  %2804 = vadd.xlane.f32.xlu0 %v2803
  %v2805 = vpop.xlane.xlu0 %2804
  %v2806 = vsel %vm157, %v2768, 0.0
  %2807 = vadd.xlane.f32.xlu0 %v2806
  %v2808 = vpop.xlane.xlu0 %2807
  %v2809 = vsel %vm157, %v2769, 0.0
  %2810 = vadd.xlane.f32.xlu0 %v2809
  %v2811 = vpop.xlane.xlu0 %2810
  %v2812 = vsel %vm157, %v2770, 0.0
  %2813 = vadd.xlane.f32.xlu0 %v2812
  %v2814 = vpop.xlane.xlu0 %2813
  %v2815 = vsel %vm157, %v2771, 0.0
  %2816 = vadd.xlane.f32.xlu0 %v2815
  %v2817 = vpop.xlane.xlu0 %2816
  %v2818 = vsel %vm157, %v2772, 0.0
  %2819 = vadd.xlane.f32.xlu0 %v2818
  %v2820 = vpop.xlane.xlu0 %2819
  %v2821 = vmul.f32 %v2775, %v2740
  %v2822 = vmul.f32 %v2778, %v2740
  %v2823 = vmul.f32 %v2781, %v2740
  %v2824 = vmul.f32 %v2784, %v2740
  %v2825 = vmul.f32 %v2787, %v2740
  %v2826 = vmul.f32 %v2790, %v2740
  %v2827 = vmul.f32 %v2793, %v2740
  %v2828 = vmul.f32 %v2796, %v2740
  %v2829 = vmul.f32 %v2799, %v2740
  %v2830 = vmul.f32 %v2802, %v2740
  %v2831 = vmul.f32 %v2805, %v2740
  %v2832 = vmul.f32 %v2808, %v2740
  %v2833 = vmul.f32 %v2811, %v2740
  %v2834 = vmul.f32 %v2814, %v2740
  %v2835 = vmul.f32 %v2817, %v2740
  %v2836 = vmul.f32 %v2820, %v2740
  %v2837 = vsub.f32 %v1556, %v2741
  %v2838 = vsub.f32 %v1557, %v2742
  %v2839 = vsub.f32 %v1558, %v2743
  %v2840 = vsub.f32 %v1559, %v2744
  %v2841 = vsub.f32 %v1560, %v2745
  %v2842 = vsub.f32 %v1561, %v2746
  %v2843 = vsub.f32 %v1562, %v2747
  %v2844 = vsub.f32 %v1563, %v2748
  %v2845 = vsub.f32 %v2676, %v2749
  %v2846 = vsub.f32 %v2677, %v2750
  %v2847 = vsub.f32 %v2678, %v2751
  %v2848 = vsub.f32 %v2679, %v2752
  %v2849 = vsub.f32 %v2680, %v2753
  %v2850 = vsub.f32 %v2681, %v2754
  %v2851 = vsub.f32 %v2682, %v2755
  %v2852 = vsub.f32 %v2683, %v2756
  %v2853 = vmul.f32 %v2741, %v2741
  %v2854 = vmul.f32 %v2742, %v2742
  %v2855 = vmul.f32 %v2743, %v2743
  %v2856 = vmul.f32 %v2744, %v2744
  %v2857 = vmul.f32 %v2745, %v2745
  %v2858 = vmul.f32 %v2746, %v2746
  %v2859 = vmul.f32 %v2747, %v2747
  %v2860 = vmul.f32 %v2748, %v2748
  %v2861 = vmul.f32 %v2749, %v2749
  %v2862 = vmul.f32 %v2750, %v2750
  %v2863 = vmul.f32 %v2751, %v2751
  %v2864 = vmul.f32 %v2752, %v2752
  %v2865 = vmul.f32 %v2753, %v2753
  %v2866 = vmul.f32 %v2754, %v2754
  %v2867 = vmul.f32 %v2755, %v2755
  %v2868 = vmul.f32 %v2756, %v2756
  %v2869 = vsub.f32 %v2821, %v2853
  %v2870 = vsub.f32 %v2822, %v2854
  %v2871 = vsub.f32 %v2823, %v2855
  %v2872 = vsub.f32 %v2824, %v2856
  %v2873 = vsub.f32 %v2825, %v2857
  %v2874 = vsub.f32 %v2826, %v2858
  %v2875 = vsub.f32 %v2827, %v2859
  %v2876 = vsub.f32 %v2828, %v2860
  %v2877 = vsub.f32 %v2829, %v2861
  %v2878 = vsub.f32 %v2830, %v2862
  %v2879 = vsub.f32 %v2831, %v2863
  %v2880 = vsub.f32 %v2832, %v2864
  %v2881 = vsub.f32 %v2833, %v2865
  %v2882 = vsub.f32 %v2834, %v2866
  %v2883 = vsub.f32 %v2835, %v2867
  %v2884 = vsub.f32 %v2836, %v2868
  %v2885 = vadd.f32 %v2869, 1e-05
  %v2886 = vadd.f32 %v2870, 1e-05
  %v2887 = vadd.f32 %v2871, 1e-05
  %v2888 = vadd.f32 %v2872, 1e-05
  %v2889 = vadd.f32 %v2873, 1e-05
  %v2890 = vadd.f32 %v2874, 1e-05
  %v2891 = vadd.f32 %v2875, 1e-05
  %v2892 = vadd.f32 %v2876, 1e-05
  %v2893 = vadd.f32 %v2877, 1e-05
  %v2894 = vadd.f32 %v2878, 1e-05
  %v2895 = vadd.f32 %v2879, 1e-05
  %v2896 = vadd.f32 %v2880, 1e-05
  %v2897 = vadd.f32 %v2881, 1e-05
  %v2898 = vadd.f32 %v2882, 1e-05
  %v2899 = vadd.f32 %v2883, 1e-05
  %v2900 = vadd.f32 %v2884, 1e-05
  %v2901 = vrsqrt.pop %v2885
  %v2902 = vmul.f32 %v2901, %v2885
  %v2903 = vmul.f32 %v2902, %v2901
  %v2904 = vmul.f32 0.5, %v2903
  %v2905 = vsub.f32 1.5, %v2904
  %v2906 = vmul.f32 %v2901, %v2905
  %vm2907 = vweird.f32 %v2885
  %vm2908 = vweird.f32 %v2901
  %vm2909 = vmor %vm2907, %vm2908
  %v2910 = vsel %vm2909, %v2901, %v2906
  %v2911 = vrsqrt.pop %v2886
  %v2912 = vmul.f32 %v2911, %v2886
  %v2913 = vmul.f32 %v2912, %v2911
  %v2914 = vmul.f32 0.5, %v2913
  %v2915 = vsub.f32 1.5, %v2914
  %v2916 = vmul.f32 %v2911, %v2915
  %vm2917 = vweird.f32 %v2886
  %vm2918 = vweird.f32 %v2911
  %vm2919 = vmor %vm2917, %vm2918
  %v2920 = vsel %vm2919, %v2911, %v2916
  %v2921 = vrsqrt.pop %v2887
  %v2922 = vmul.f32 %v2921, %v2887
  %v2923 = vmul.f32 %v2922, %v2921
  %v2924 = vmul.f32 0.5, %v2923
  %v2925 = vsub.f32 1.5, %v2924
  %v2926 = vmul.f32 %v2921, %v2925
  %vm2927 = vweird.f32 %v2887
  %vm2928 = vweird.f32 %v2921
  %vm2929 = vmor %vm2927, %vm2928
  %v2930 = vsel %vm2929, %v2921, %v2926
  %v2931 = vrsqrt.pop %v2888
  %v2932 = vmul.f32 %v2931, %v2888
  %v2933 = vmul.f32 %v2932, %v2931
  %v2934 = vmul.f32 0.5, %v2933
  %v2935 = vsub.f32 1.5, %v2934
  %v2936 = vmul.f32 %v2931, %v2935
  %vm2937 = vweird.f32 %v2888
  %vm2938 = vweird.f32 %v2931
  %vm2939 = vmor %vm2937, %vm2938
  %v2940 = vsel %vm2939, %v2931, %v2936
  %v2941 = vrsqrt.pop %v2889
  %v2942 = vmul.f32 %v2941, %v2889
  %v2943 = vmul.f32 %v2942, %v2941
  %v2944 = vmul.f32 0.5, %v2943
  %v2945 = vsub.f32 1.5, %v2944
  %v2946 = vmul.f32 %v2941, %v2945
  %vm2947 = vweird.f32 %v2889
  %vm2948 = vweird.f32 %v2941
  %vm2949 = vmor %vm2947, %vm2948
  %v2950 = vsel %vm2949, %v2941, %v2946
  %v2951 = vrsqrt.pop %v2890
  %v2952 = vmul.f32 %v2951, %v2890
  %v2953 = vmul.f32 %v2952, %v2951
  %v2954 = vmul.f32 0.5, %v2953
  %v2955 = vsub.f32 1.5, %v2954
  %v2956 = vmul.f32 %v2951, %v2955
  %vm2957 = vweird.f32 %v2890
  %vm2958 = vweird.f32 %v2951
  %vm2959 = vmor %vm2957, %vm2958
  %v2960 = vsel %vm2959, %v2951, %v2956
  %v2961 = vrsqrt.pop %v2891
  %v2962 = vmul.f32 %v2961, %v2891
  %v2963 = vmul.f32 %v2962, %v2961
  %v2964 = vmul.f32 0.5, %v2963
  %v2965 = vsub.f32 1.5, %v2964
  %v2966 = vmul.f32 %v2961, %v2965
  %vm2967 = vweird.f32 %v2891
  %vm2968 = vweird.f32 %v2961
  %vm2969 = vmor %vm2967, %vm2968
  %v2970 = vsel %vm2969, %v2961, %v2966
  %v2971 = vrsqrt.pop %v2892
  %v2972 = vmul.f32 %v2971, %v2892
  %v2973 = vmul.f32 %v2972, %v2971
  %v2974 = vmul.f32 0.5, %v2973
  %v2975 = vsub.f32 1.5, %v2974
  %v2976 = vmul.f32 %v2971, %v2975
  %vm2977 = vweird.f32 %v2892
  %vm2978 = vweird.f32 %v2971
  %vm2979 = vmor %vm2977, %vm2978
  %v2980 = vsel %vm2979, %v2971, %v2976
  %v2981 = vrsqrt.pop %v2893
  %v2982 = vmul.f32 %v2981, %v2893
  %v2983 = vmul.f32 %v2982, %v2981
  %v2984 = vmul.f32 0.5, %v2983
  %v2985 = vsub.f32 1.5, %v2984
  %v2986 = vmul.f32 %v2981, %v2985
  %vm2987 = vweird.f32 %v2893
  %vm2988 = vweird.f32 %v2981
  %vm2989 = vmor %vm2987, %vm2988
  %v2990 = vsel %vm2989, %v2981, %v2986
  %v2991 = vrsqrt.pop %v2894
  %v2992 = vmul.f32 %v2991, %v2894
  %v2993 = vmul.f32 %v2992, %v2991
  %v2994 = vmul.f32 0.5, %v2993
  %v2995 = vsub.f32 1.5, %v2994
  %v2996 = vmul.f32 %v2991, %v2995
  %vm2997 = vweird.f32 %v2894
  %vm2998 = vweird.f32 %v2991
  %vm2999 = vmor %vm2997, %vm2998
  %v3000 = vsel %vm2999, %v2991, %v2996
  %v3001 = vrsqrt.pop %v2895
  %v3002 = vmul.f32 %v3001, %v2895
  %v3003 = vmul.f32 %v3002, %v3001
  %v3004 = vmul.f32 0.5, %v3003
  %v3005 = vsub.f32 1.5, %v3004
  %v3006 = vmul.f32 %v3001, %v3005
  %vm3007 = vweird.f32 %v2895
  %vm3008 = vweird.f32 %v3001
  %vm3009 = vmor %vm3007, %vm3008
  %v3010 = vsel %vm3009, %v3001, %v3006
  %v3011 = vrsqrt.pop %v2896
  %v3012 = vmul.f32 %v3011, %v2896
  %v3013 = vmul.f32 %v3012, %v3011
  %v3014 = vmul.f32 0.5, %v3013
  %v3015 = vsub.f32 1.5, %v3014
  %v3016 = vmul.f32 %v3011, %v3015
  %vm3017 = vweird.f32 %v2896
  %vm3018 = vweird.f32 %v3011
  %vm3019 = vmor %vm3017, %vm3018
  %v3020 = vsel %vm3019, %v3011, %v3016
  %v3021 = vrsqrt.pop %v2897
  %v3022 = vmul.f32 %v3021, %v2897
  %v3023 = vmul.f32 %v3022, %v3021
  %v3024 = vmul.f32 0.5, %v3023
  %v3025 = vsub.f32 1.5, %v3024
  %v3026 = vmul.f32 %v3021, %v3025
  %vm3027 = vweird.f32 %v2897
  %vm3028 = vweird.f32 %v3021
  %vm3029 = vmor %vm3027, %vm3028
  %v3030 = vsel %vm3029, %v3021, %v3026
  %v3031 = vrsqrt.pop %v2898
  %v3032 = vmul.f32 %v3031, %v2898
  %v3033 = vmul.f32 %v3032, %v3031
  %v3034 = vmul.f32 0.5, %v3033
  %v3035 = vsub.f32 1.5, %v3034
  %v3036 = vmul.f32 %v3031, %v3035
  %vm3037 = vweird.f32 %v2898
  %vm3038 = vweird.f32 %v3031
  %vm3039 = vmor %vm3037, %vm3038
  %v3040 = vsel %vm3039, %v3031, %v3036
  %v3041 = vrsqrt.pop %v2899
  %v3042 = vmul.f32 %v3041, %v2899
  %v3043 = vmul.f32 %v3042, %v3041
  %v3044 = vmul.f32 0.5, %v3043
  %v3045 = vsub.f32 1.5, %v3044
  %v3046 = vmul.f32 %v3041, %v3045
  %vm3047 = vweird.f32 %v2899
  %vm3048 = vweird.f32 %v3041
  %vm3049 = vmor %vm3047, %vm3048
  %v3050 = vsel %vm3049, %v3041, %v3046
  %v3051 = vrsqrt.pop %v2900
  %v3052 = vmul.f32 %v3051, %v2900
  %v3053 = vmul.f32 %v3052, %v3051
  %v3054 = vmul.f32 0.5, %v3053
  %v3055 = vsub.f32 1.5, %v3054
  %v3056 = vmul.f32 %v3051, %v3055
  %vm3057 = vweird.f32 %v2900
  %vm3058 = vweird.f32 %v3051
  %vm3059 = vmor %vm3057, %vm3058
  %v3060 = vsel %vm3059, %v3051, %v3056
  %v3061 = vmul.f32 %v2837, %v2910
  %v3062 = vmul.f32 %v2838, %v2920
  %v3063 = vmul.f32 %v2839, %v2930
  %v3064 = vmul.f32 %v2840, %v2940
  %v3065 = vmul.f32 %v2841, %v2950
  %v3066 = vmul.f32 %v2842, %v2960
  %v3067 = vmul.f32 %v2843, %v2970
  %v3068 = vmul.f32 %v2844, %v2980
  %v3069 = vmul.f32 %v2845, %v2990
  %v3070 = vmul.f32 %v2846, %v3000
  %v3071 = vmul.f32 %v2847, %v3010
  %v3072 = vmul.f32 %v2848, %v3020
  %v3073 = vmul.f32 %v2849, %v3030
  %v3074 = vmul.f32 %v2850, %v3040
  %v3075 = vmul.f32 %v2851, %v3050
  %v3076 = vmul.f32 %v2852, %v3060
  %v3077 = vperm.slane %v2684, 0
  %v3078 = vmul.f32 %v3061, %v3077
  %v3079 = vmul.f32 %v3062, %v3077
  %v3080 = vmul.f32 %v3063, %v3077
  %v3081 = vmul.f32 %v3064, %v3077
  %v3082 = vmul.f32 %v3065, %v3077
  %v3083 = vmul.f32 %v3066, %v3077
  %v3084 = vmul.f32 %v3067, %v3077
  %v3085 = vmul.f32 %v3068, %v3077
  %v3086 = vmul.f32 %v3069, %v3077
  %v3087 = vmul.f32 %v3070, %v3077
  %v3088 = vmul.f32 %v3071, %v3077
  %v3089 = vmul.f32 %v3072, %v3077
  %v3090 = vmul.f32 %v3073, %v3077
  %v3091 = vmul.f32 %v3074, %v3077
  %v3092 = vmul.f32 %v3075, %v3077
  %v3093 = vmul.f32 %v3076, %v3077
  %v3094 = vperm.slane %v2685, 0
  %v3095 = vadd.f32 %v3078, %v3094
  %v3096 = vadd.f32 %v3079, %v3094
  %v3097 = vadd.f32 %v3080, %v3094
  %v3098 = vadd.f32 %v3081, %v3094
  %v3099 = vadd.f32 %v3082, %v3094
  %v3100 = vadd.f32 %v3083, %v3094
  %v3101 = vadd.f32 %v3084, %v3094
  %v3102 = vadd.f32 %v3085, %v3094
  %v3103 = vadd.f32 %v3086, %v3094
  %v3104 = vadd.f32 %v3087, %v3094
  %v3105 = vadd.f32 %v3088, %v3094
  %v3106 = vadd.f32 %v3089, %v3094
  %v3107 = vadd.f32 %v3090, %v3094
  %v3108 = vadd.f32 %v3091, %v3094
  %v3109 = vadd.f32 %v3092, %v3094
  %v3110 = vadd.f32 %v3093, %v3094
  %v3111 = vld [vmem:[%s3] sm:$0xff]
  %v3112 = vld [vmem:[%s3 + $0x8] sm:$0xff]
  %v3113 = vld [vmem:[%s3 + $0x10] sm:$0xff]
  %v3114 = vld [vmem:[%s3 + $0x18] sm:$0xff]
  %v3115 = vld [vmem:[%s3 + $0x20] sm:$0xff]
  %v3116 = vld [vmem:[%s3 + $0x28] sm:$0xff]
  %v3117 = vld [vmem:[%s3 + $0x30] sm:$0xff]
  %v3118 = vld [vmem:[%s3 + $0x38] sm:$0xff]
  %v3119 = vld [vmem:[%s4 + $0xd] sm:$0x1]
  %v3120 = vperm.slane %v3119, 0
  %v3122 = vsel %vm157, %v3095, 0
  %v3125 = vsel %vm157, %v3096, 0
  %v3128 = vsel %vm157, %v3097, 0
  %v3131 = vsel %vm157, %v3098, 0
  %v3134 = vsel %vm157, %v3099, 0
  %v3137 = vsel %vm157, %v3100, 0
  %v3140 = vsel %vm157, %v3101, 0
  %v3143 = vsel %vm157, %v3102, 0
  %v3146 = vsel %vm157, %v3103, 0
  %v3149 = vsel %vm157, %v3104, 0
  %v3152 = vsel %vm157, %v3105, 0
  %v3155 = vsel %vm157, %v3106, 0
  %v3158 = vsel %vm157, %v3107, 0
  %v3161 = vsel %vm157, %v3108, 0
  %v3164 = vsel %vm157, %v3109, 0
  %v3167 = vsel %vm157, %v3110, 0
  %3169 = vmatpush.msra.mxu0 0.0
  %3170 = vmatpush.msra.mxu0 0.0
  %3171 = vmatpush.msra.mxu0 0.0
  %3172 = vmatpush.msra.mxu0 0.0
  %3173 = vmatpush.msra.mxu0 0.0
  %3174 = vmatpush.msra.mxu0 0.0
  %3175 = vmatpush.msra.mxu0 0.0
  %3176 = vmatpush.msra.mxu0 0.0
  %3177 = vmatpush.msra.mxu0 %v3118
  %3178 = vmatpush.msra.mxu0 %v3117
  %3179 = vmatpush.msra.mxu0 %v3116
  %3180 = vmatpush.msra.mxu0 %v3115
  %3181 = vmatpush.msra.mxu0 %v3114
  %3182 = vmatpush.msra.mxu0 %v3113
  %3183 = vmatpush.msra.mxu0 %v3112
  %3184 = vmatpush.msra.mxu0 %v3111
  %3185 = vmatmul.f32.gmra.mxu0 %v3122
  %v3186 = vpop.f32.mrf.mxu0
  %v3187 = vadd.f32 %v3120, %v3186
  %3188 = vmatmul.f32.gmra.mxu0 %v3125
  %v3189 = vpop.f32.mrf.mxu0
  %v3190 = vadd.f32 %v3120, %v3189
  %3191 = vmatmul.f32.gmra.mxu0 %v3128
  %v3192 = vpop.f32.mrf.mxu0
  %v3193 = vadd.f32 %v3120, %v3192
  %3194 = vmatmul.f32.gmra.mxu0 %v3131
  %v3195 = vpop.f32.mrf.mxu0
  %v3196 = vadd.f32 %v3120, %v3195
  %3197 = vmatmul.f32.gmra.mxu0 %v3134
  %v3198 = vpop.f32.mrf.mxu0
  %v3199 = vadd.f32 %v3120, %v3198
  %3200 = vmatmul.f32.gmra.mxu0 %v3137
  %v3201 = vpop.f32.mrf.mxu0
  %v3202 = vadd.f32 %v3120, %v3201
  %3203 = vmatmul.f32.gmra.mxu0 %v3140
  %v3204 = vpop.f32.mrf.mxu0
  %v3205 = vadd.f32 %v3120, %v3204
  %3206 = vmatmul.f32.gmra.mxu0 %v3143
  %v3207 = vpop.f32.mrf.mxu0
  %v3208 = vadd.f32 %v3120, %v3207
  %3209 = vmatmul.f32.gmra.mxu0 %v3146
  %v3210 = vpop.f32.mrf.mxu0
  %v3211 = vadd.f32 %v3120, %v3210
  %3212 = vmatmul.f32.gmra.mxu0 %v3149
  %v3213 = vpop.f32.mrf.mxu0
  %v3214 = vadd.f32 %v3120, %v3213
  %3215 = vmatmul.f32.gmra.mxu0 %v3152
  %v3216 = vpop.f32.mrf.mxu0
  %v3217 = vadd.f32 %v3120, %v3216
  %3218 = vmatmul.f32.gmra.mxu0 %v3155
  %v3219 = vpop.f32.mrf.mxu0
  %v3220 = vadd.f32 %v3120, %v3219
  %3221 = vmatmul.f32.gmra.mxu0 %v3158
  %v3222 = vpop.f32.mrf.mxu0
  %v3223 = vadd.f32 %v3120, %v3222
  %3224 = vmatmul.f32.gmra.mxu0 %v3161
  %v3225 = vpop.f32.mrf.mxu0
  %v3226 = vadd.f32 %v3120, %v3225
  %3227 = vmatmul.f32.gmra.mxu0 %v3164
  %v3228 = vpop.f32.mrf.mxu0
  %v3229 = vadd.f32 %v3120, %v3228
  %3230 = vmatmul.f32.gmra.mxu0 %v3167
  %v3231 = vpop.f32.mrf.mxu0
  %v3232 = vadd.f32 %v3120, %v3231
  %3233 = vdwg.mxu0
  %v3234 = vmax.f32 %v3187, 0.0
  %v3235 = vmax.f32 %v3190, 0.0
  %v3236 = vmax.f32 %v3193, 0.0
  %v3237 = vmax.f32 %v3196, 0.0
  %v3238 = vmax.f32 %v3199, 0.0
  %v3239 = vmax.f32 %v3202, 0.0
  %v3240 = vmax.f32 %v3205, 0.0
  %v3241 = vmax.f32 %v3208, 0.0
  %v3242 = vmax.f32 %v3211, 0.0
  %v3243 = vmax.f32 %v3214, 0.0
  %v3244 = vmax.f32 %v3217, 0.0
  %v3245 = vmax.f32 %v3220, 0.0
  %v3246 = vmax.f32 %v3223, 0.0
  %v3247 = vmax.f32 %v3226, 0.0
  %v3248 = vmax.f32 %v3229, 0.0
  %v3249 = vmax.f32 %v3232, 0.0
  %v3250 = vld [vmem:[%s2 + $0x80] sm:$0xff]
  %v3251 = vld [vmem:[%s2 + $0x88] sm:$0xff]
  %v3252 = vld [vmem:[%s2 + $0x90] sm:$0xff]
  %v3253 = vld [vmem:[%s2 + $0x98] sm:$0xff]
  %v3254 = vld [vmem:[%s2 + $0xa0] sm:$0xff]
  %v3255 = vld [vmem:[%s2 + $0xa8] sm:$0xff]
  %v3256 = vld [vmem:[%s2 + $0xb0] sm:$0xff]
  %v3257 = vld [vmem:[%s2 + $0xb8] sm:$0xff]
  %v3258 = vld [vmem:[%s2 + $0xc0] sm:$0xff]
  %v3259 = vld [vmem:[%s2 + $0xc8] sm:$0xff]
  %v3260 = vld [vmem:[%s2 + $0xd0] sm:$0xff]
  %v3261 = vld [vmem:[%s2 + $0xd8] sm:$0xff]
  %v3262 = vld [vmem:[%s2 + $0xe0] sm:$0xff]
  %v3263 = vld [vmem:[%s2 + $0xe8] sm:$0xff]
  %v3264 = vld [vmem:[%s2 + $0xf0] sm:$0xff]
  %v3265 = vld [vmem:[%s2 + $0xf8] sm:$0xff]
  %v3266 = vld [vmem:[%s4 + $0xe] sm:$0x1]
  %v3267 = vperm.slane %v3266, 0
  %3268 = vmatpush.msra.mxu0 %v3265
  %3269 = vmatpush.msra.mxu0 %v3264
  %3270 = vmatpush.msra.mxu0 %v3263
  %3271 = vmatpush.msra.mxu0 %v3262
  %3272 = vmatpush.msra.mxu0 %v3261
  %3273 = vmatpush.msra.mxu0 %v3260
  %3274 = vmatpush.msra.mxu0 %v3259
  %3275 = vmatpush.msra.mxu0 %v3258
  %3276 = vmatpush.msra.mxu0 %v3257
  %3277 = vmatpush.msra.mxu0 %v3256
  %3278 = vmatpush.msra.mxu0 %v3255
  %3279 = vmatpush.msra.mxu0 %v3254
  %3280 = vmatpush.msra.mxu0 %v3253
  %3281 = vmatpush.msra.mxu0 %v3252
  %3282 = vmatpush.msra.mxu0 %v3251
  %3283 = vmatpush.msra.mxu0 %v3250
  %3284 = vmatmul.f32.gmra.mxu0 %v3234
  %v3285 = vpop.f32.mrf.mxu0
  %v3286 = vadd.f32 %v3267, %v3285
  %3287 = vmatmul.f32.gmra.mxu0 %v3235
  %v3288 = vpop.f32.mrf.mxu0
  %v3289 = vadd.f32 %v3267, %v3288
  %3290 = vmatmul.f32.gmra.mxu0 %v3236
  %v3291 = vpop.f32.mrf.mxu0
  %v3292 = vadd.f32 %v3267, %v3291
  %3293 = vmatmul.f32.gmra.mxu0 %v3237
  %v3294 = vpop.f32.mrf.mxu0
  %v3295 = vadd.f32 %v3267, %v3294
  %3296 = vmatmul.f32.gmra.mxu0 %v3238
  %v3297 = vpop.f32.mrf.mxu0
  %v3298 = vadd.f32 %v3267, %v3297
  %3299 = vmatmul.f32.gmra.mxu0 %v3239
  %v3300 = vpop.f32.mrf.mxu0
  %v3301 = vadd.f32 %v3267, %v3300
  %3302 = vmatmul.f32.gmra.mxu0 %v3240
  %v3303 = vpop.f32.mrf.mxu0
  %v3304 = vadd.f32 %v3267, %v3303
  %3305 = vmatmul.f32.gmra.mxu0 %v3241
  %v3306 = vpop.f32.mrf.mxu0
  %v3307 = vadd.f32 %v3267, %v3306
  %3308 = vmatmul.f32.gmra.mxu0 %v3242
  %v3309 = vpop.f32.mrf.mxu0
  %v3310 = vadd.f32 %v3267, %v3309
  %3311 = vmatmul.f32.gmra.mxu0 %v3243
  %v3312 = vpop.f32.mrf.mxu0
  %v3313 = vadd.f32 %v3267, %v3312
  %3314 = vmatmul.f32.gmra.mxu0 %v3244
  %v3315 = vpop.f32.mrf.mxu0
  %v3316 = vadd.f32 %v3267, %v3315
  %3317 = vmatmul.f32.gmra.mxu0 %v3245
  %v3318 = vpop.f32.mrf.mxu0
  %v3319 = vadd.f32 %v3267, %v3318
  %3320 = vmatmul.f32.gmra.mxu0 %v3246
  %v3321 = vpop.f32.mrf.mxu0
  %v3322 = vadd.f32 %v3267, %v3321
  %3323 = vmatmul.f32.gmra.mxu0 %v3247
  %v3324 = vpop.f32.mrf.mxu0
  %v3325 = vadd.f32 %v3267, %v3324
  %3326 = vmatmul.f32.gmra.mxu0 %v3248
  %v3327 = vpop.f32.mrf.mxu0
  %v3328 = vadd.f32 %v3267, %v3327
  %3329 = vmatmul.f32.gmra.mxu0 %v3249
  %v3330 = vpop.f32.mrf.mxu0
  %v3331 = vadd.f32 %v3267, %v3330
  %3332 = vdwg.mxu0
  %v3333 = vadd.f32 %v3095, %v3286
  %v3334 = vadd.f32 %v3096, %v3289
  %v3335 = vadd.f32 %v3097, %v3292
  %v3336 = vadd.f32 %v3098, %v3295
  %v3337 = vadd.f32 %v3099, %v3298
  %v3338 = vadd.f32 %v3100, %v3301
  %v3339 = vadd.f32 %v3101, %v3304
  %v3340 = vadd.f32 %v3102, %v3307
  %v3341 = vadd.f32 %v3103, %v3310
  %v3342 = vadd.f32 %v3104, %v3313
  %v3343 = vadd.f32 %v3105, %v3316
  %v3344 = vadd.f32 %v3106, %v3319
  %v3345 = vadd.f32 %v3107, %v3322
  %v3346 = vadd.f32 %v3108, %v3325
  %v3347 = vadd.f32 %v3109, %v3328
  %v3348 = vadd.f32 %v3110, %v3331
  %v3349 = vld [vmem:[%s4 + $0xf] sm:$0x1]
  %v3350 = vld [vmem:[%s4 + $0x10] sm:$0x1]
  %v3351 = vsel %vm157, %v3333, 0.0
  %3352 = vadd.xlane.f32.xlu0 %v3351
  %v3353 = vpop.xlane.xlu0 %3352
  %v3354 = vsel %vm157, %v3334, 0.0
  %3355 = vadd.xlane.f32.xlu0 %v3354
  %v3356 = vpop.xlane.xlu0 %3355
  %v3357 = vsel %vm157, %v3335, 0.0
  %3358 = vadd.xlane.f32.xlu0 %v3357
  %v3359 = vpop.xlane.xlu0 %3358
  %v3360 = vsel %vm157, %v3336, 0.0
  %3361 = vadd.xlane.f32.xlu0 %v3360
  %v3362 = vpop.xlane.xlu0 %3361
  %v3363 = vsel %vm157, %v3337, 0.0
  %3364 = vadd.xlane.f32.xlu0 %v3363
  %v3365 = vpop.xlane.xlu0 %3364
  %v3366 = vsel %vm157, %v3338, 0.0
  %3367 = vadd.xlane.f32.xlu0 %v3366
  %v3368 = vpop.xlane.xlu0 %3367
  %v3369 = vsel %vm157, %v3339, 0.0
  %3370 = vadd.xlane.f32.xlu0 %v3369
  %v3371 = vpop.xlane.xlu0 %3370
  %v3372 = vsel %vm157, %v3340, 0.0
  %3373 = vadd.xlane.f32.xlu0 %v3372
  %v3374 = vpop.xlane.xlu0 %3373
  %v3375 = vsel %vm157, %v3341, 0.0
  %3376 = vadd.xlane.f32.xlu0 %v3375
  %v3377 = vpop.xlane.xlu0 %3376
  %v3378 = vsel %vm157, %v3342, 0.0
  %3379 = vadd.xlane.f32.xlu0 %v3378
  %v3380 = vpop.xlane.xlu0 %3379
  %v3381 = vsel %vm157, %v3343, 0.0
  %3382 = vadd.xlane.f32.xlu0 %v3381
  %v3383 = vpop.xlane.xlu0 %3382
  %v3384 = vsel %vm157, %v3344, 0.0
  %3385 = vadd.xlane.f32.xlu0 %v3384
  %v3386 = vpop.xlane.xlu0 %3385
  %v3387 = vsel %vm157, %v3345, 0.0
  %3388 = vadd.xlane.f32.xlu0 %v3387
  %v3389 = vpop.xlane.xlu0 %3388
  %v3390 = vsel %vm157, %v3346, 0.0
  %3391 = vadd.xlane.f32.xlu0 %v3390
  %v3392 = vpop.xlane.xlu0 %3391
  %v3393 = vsel %vm157, %v3347, 0.0
  %3394 = vadd.xlane.f32.xlu0 %v3393
  %v3395 = vpop.xlane.xlu0 %3394
  %v3396 = vsel %vm157, %v3348, 0.0
  %3397 = vadd.xlane.f32.xlu0 %v3396
  %v3398 = vpop.xlane.xlu0 %3397
  %v3399 = vmul.f32 %v3353, %v2740
  %v3400 = vmul.f32 %v3356, %v2740
  %v3401 = vmul.f32 %v3359, %v2740
  %v3402 = vmul.f32 %v3362, %v2740
  %v3403 = vmul.f32 %v3365, %v2740
  %v3404 = vmul.f32 %v3368, %v2740
  %v3405 = vmul.f32 %v3371, %v2740
  %v3406 = vmul.f32 %v3374, %v2740
  %v3407 = vmul.f32 %v3377, %v2740
  %v3408 = vmul.f32 %v3380, %v2740
  %v3409 = vmul.f32 %v3383, %v2740
  %v3410 = vmul.f32 %v3386, %v2740
  %v3411 = vmul.f32 %v3389, %v2740
  %v3412 = vmul.f32 %v3392, %v2740
  %v3413 = vmul.f32 %v3395, %v2740
  %v3414 = vmul.f32 %v3398, %v2740
  %v3415 = vmul.f32 %v3333, %v3333
  %v3416 = vmul.f32 %v3334, %v3334
  %v3417 = vmul.f32 %v3335, %v3335
  %v3418 = vmul.f32 %v3336, %v3336
  %v3419 = vmul.f32 %v3337, %v3337
  %v3420 = vmul.f32 %v3338, %v3338
  %v3421 = vmul.f32 %v3339, %v3339
  %v3422 = vmul.f32 %v3340, %v3340
  %v3423 = vmul.f32 %v3341, %v3341
  %v3424 = vmul.f32 %v3342, %v3342
  %v3425 = vmul.f32 %v3343, %v3343
  %v3426 = vmul.f32 %v3344, %v3344
  %v3427 = vmul.f32 %v3345, %v3345
  %v3428 = vmul.f32 %v3346, %v3346
  %v3429 = vmul.f32 %v3347, %v3347
  %v3430 = vmul.f32 %v3348, %v3348
  %v3431 = vsel %vm157, %v3415, 0.0
  %3432 = vadd.xlane.f32.xlu0 %v3431
  %v3433 = vpop.xlane.xlu0 %3432
  %v3434 = vsel %vm157, %v3416, 0.0
  %3435 = vadd.xlane.f32.xlu0 %v3434
  %v3436 = vpop.xlane.xlu0 %3435
  %v3437 = vsel %vm157, %v3417, 0.0
  %3438 = vadd.xlane.f32.xlu0 %v3437
  %v3439 = vpop.xlane.xlu0 %3438
  %v3440 = vsel %vm157, %v3418, 0.0
  %3441 = vadd.xlane.f32.xlu0 %v3440
  %v3442 = vpop.xlane.xlu0 %3441
  %v3443 = vsel %vm157, %v3419, 0.0
  %3444 = vadd.xlane.f32.xlu0 %v3443
  %v3445 = vpop.xlane.xlu0 %3444
  %v3446 = vsel %vm157, %v3420, 0.0
  %3447 = vadd.xlane.f32.xlu0 %v3446
  %v3448 = vpop.xlane.xlu0 %3447
  %v3449 = vsel %vm157, %v3421, 0.0
  %3450 = vadd.xlane.f32.xlu0 %v3449
  %v3451 = vpop.xlane.xlu0 %3450
  %v3452 = vsel %vm157, %v3422, 0.0
  %3453 = vadd.xlane.f32.xlu0 %v3452
  %v3454 = vpop.xlane.xlu0 %3453
  %v3455 = vsel %vm157, %v3423, 0.0
  %3456 = vadd.xlane.f32.xlu0 %v3455
  %v3457 = vpop.xlane.xlu0 %3456
  %v3458 = vsel %vm157, %v3424, 0.0
  %3459 = vadd.xlane.f32.xlu0 %v3458
  %v3460 = vpop.xlane.xlu0 %3459
  %v3461 = vsel %vm157, %v3425, 0.0
  %3462 = vadd.xlane.f32.xlu0 %v3461
  %v3463 = vpop.xlane.xlu0 %3462
  %v3464 = vsel %vm157, %v3426, 0.0
  %3465 = vadd.xlane.f32.xlu0 %v3464
  %v3466 = vpop.xlane.xlu0 %3465
  %v3467 = vsel %vm157, %v3427, 0.0
  %3468 = vadd.xlane.f32.xlu0 %v3467
  %v3469 = vpop.xlane.xlu0 %3468
  %v3470 = vsel %vm157, %v3428, 0.0
  %3471 = vadd.xlane.f32.xlu0 %v3470
  %v3472 = vpop.xlane.xlu0 %3471
  %v3473 = vsel %vm157, %v3429, 0.0
  %3474 = vadd.xlane.f32.xlu0 %v3473
  %v3475 = vpop.xlane.xlu0 %3474
  %v3476 = vsel %vm157, %v3430, 0.0
  %3477 = vadd.xlane.f32.xlu0 %v3476
  %v3478 = vpop.xlane.xlu0 %3477
  %v3479 = vmul.f32 %v3433, %v2740
  %v3480 = vmul.f32 %v3436, %v2740
  %v3481 = vmul.f32 %v3439, %v2740
  %v3482 = vmul.f32 %v3442, %v2740
  %v3483 = vmul.f32 %v3445, %v2740
  %v3484 = vmul.f32 %v3448, %v2740
  %v3485 = vmul.f32 %v3451, %v2740
  %v3486 = vmul.f32 %v3454, %v2740
  %v3487 = vmul.f32 %v3457, %v2740
  %v3488 = vmul.f32 %v3460, %v2740
  %v3489 = vmul.f32 %v3463, %v2740
  %v3490 = vmul.f32 %v3466, %v2740
  %v3491 = vmul.f32 %v3469, %v2740
  %v3492 = vmul.f32 %v3472, %v2740
  %v3493 = vmul.f32 %v3475, %v2740
  %v3494 = vmul.f32 %v3478, %v2740
  %v3495 = vsub.f32 %v3333, %v3399
  %v3496 = vsub.f32 %v3334, %v3400
  %v3497 = vsub.f32 %v3335, %v3401
  %v3498 = vsub.f32 %v3336, %v3402
  %v3499 = vsub.f32 %v3337, %v3403
  %v3500 = vsub.f32 %v3338, %v3404
  %v3501 = vsub.f32 %v3339, %v3405
  %v3502 = vsub.f32 %v3340, %v3406
  %v3503 = vsub.f32 %v3341, %v3407
  %v3504 = vsub.f32 %v3342, %v3408
  %v3505 = vsub.f32 %v3343, %v3409
  %v3506 = vsub.f32 %v3344, %v3410
  %v3507 = vsub.f32 %v3345, %v3411
  %v3508 = vsub.f32 %v3346, %v3412
  %v3509 = vsub.f32 %v3347, %v3413
  %v3510 = vsub.f32 %v3348, %v3414
  %v3511 = vmul.f32 %v3399, %v3399
  %v3512 = vmul.f32 %v3400, %v3400
  %v3513 = vmul.f32 %v3401, %v3401
  %v3514 = vmul.f32 %v3402, %v3402
  %v3515 = vmul.f32 %v3403, %v3403
  %v3516 = vmul.f32 %v3404, %v3404
  %v3517 = vmul.f32 %v3405, %v3405
  %v3518 = vmul.f32 %v3406, %v3406
  %v3519 = vmul.f32 %v3407, %v3407
  %v3520 = vmul.f32 %v3408, %v3408
  %v3521 = vmul.f32 %v3409, %v3409
  %v3522 = vmul.f32 %v3410, %v3410
  %v3523 = vmul.f32 %v3411, %v3411
  %v3524 = vmul.f32 %v3412, %v3412
  %v3525 = vmul.f32 %v3413, %v3413
  %v3526 = vmul.f32 %v3414, %v3414
  %v3527 = vsub.f32 %v3479, %v3511
  %v3528 = vsub.f32 %v3480, %v3512
  %v3529 = vsub.f32 %v3481, %v3513
  %v3530 = vsub.f32 %v3482, %v3514
  %v3531 = vsub.f32 %v3483, %v3515
  %v3532 = vsub.f32 %v3484, %v3516
  %v3533 = vsub.f32 %v3485, %v3517
  %v3534 = vsub.f32 %v3486, %v3518
  %v3535 = vsub.f32 %v3487, %v3519
  %v3536 = vsub.f32 %v3488, %v3520
  %v3537 = vsub.f32 %v3489, %v3521
  %v3538 = vsub.f32 %v3490, %v3522
  %v3539 = vsub.f32 %v3491, %v3523
  %v3540 = vsub.f32 %v3492, %v3524
  %v3541 = vsub.f32 %v3493, %v3525
  %v3542 = vsub.f32 %v3494, %v3526
  %v3543 = vadd.f32 %v3527, 1e-05
  %v3544 = vadd.f32 %v3528, 1e-05
  %v3545 = vadd.f32 %v3529, 1e-05
  %v3546 = vadd.f32 %v3530, 1e-05
  %v3547 = vadd.f32 %v3531, 1e-05
  %v3548 = vadd.f32 %v3532, 1e-05
  %v3549 = vadd.f32 %v3533, 1e-05
  %v3550 = vadd.f32 %v3534, 1e-05
  %v3551 = vadd.f32 %v3535, 1e-05
  %v3552 = vadd.f32 %v3536, 1e-05
  %v3553 = vadd.f32 %v3537, 1e-05
  %v3554 = vadd.f32 %v3538, 1e-05
  %v3555 = vadd.f32 %v3539, 1e-05
  %v3556 = vadd.f32 %v3540, 1e-05
  %v3557 = vadd.f32 %v3541, 1e-05
  %v3558 = vadd.f32 %v3542, 1e-05
  %v3559 = vrsqrt.pop %v3543
  %v3560 = vmul.f32 %v3559, %v3543
  %v3561 = vmul.f32 %v3560, %v3559
  %v3562 = vmul.f32 0.5, %v3561
  %v3563 = vsub.f32 1.5, %v3562
  %v3564 = vmul.f32 %v3559, %v3563
  %vm3565 = vweird.f32 %v3543
  %vm3566 = vweird.f32 %v3559
  %vm3567 = vmor %vm3565, %vm3566
  %v3568 = vsel %vm3567, %v3559, %v3564
  %v3569 = vrsqrt.pop %v3544
  %v3570 = vmul.f32 %v3569, %v3544
  %v3571 = vmul.f32 %v3570, %v3569
  %v3572 = vmul.f32 0.5, %v3571
  %v3573 = vsub.f32 1.5, %v3572
  %v3574 = vmul.f32 %v3569, %v3573
  %vm3575 = vweird.f32 %v3544
  %vm3576 = vweird.f32 %v3569
  %vm3577 = vmor %vm3575, %vm3576
  %v3578 = vsel %vm3577, %v3569, %v3574
  %v3579 = vrsqrt.pop %v3545
  %v3580 = vmul.f32 %v3579, %v3545
  %v3581 = vmul.f32 %v3580, %v3579
  %v3582 = vmul.f32 0.5, %v3581
  %v3583 = vsub.f32 1.5, %v3582
  %v3584 = vmul.f32 %v3579, %v3583
  %vm3585 = vweird.f32 %v3545
  %vm3586 = vweird.f32 %v3579
  %vm3587 = vmor %vm3585, %vm3586
  %v3588 = vsel %vm3587, %v3579, %v3584
  %v3589 = vrsqrt.pop %v3546
  %v3590 = vmul.f32 %v3589, %v3546
  %v3591 = vmul.f32 %v3590, %v3589
  %v3592 = vmul.f32 0.5, %v3591
  %v3593 = vsub.f32 1.5, %v3592
  %v3594 = vmul.f32 %v3589, %v3593
  %vm3595 = vweird.f32 %v3546
  %vm3596 = vweird.f32 %v3589
  %vm3597 = vmor %vm3595, %vm3596
  %v3598 = vsel %vm3597, %v3589, %v3594
  %v3599 = vrsqrt.pop %v3547
  %v3600 = vmul.f32 %v3599, %v3547
  %v3601 = vmul.f32 %v3600, %v3599
  %v3602 = vmul.f32 0.5, %v3601
  %v3603 = vsub.f32 1.5, %v3602
  %v3604 = vmul.f32 %v3599, %v3603
  %vm3605 = vweird.f32 %v3547
  %vm3606 = vweird.f32 %v3599
  %vm3607 = vmor %vm3605, %vm3606
  %v3608 = vsel %vm3607, %v3599, %v3604
  %v3609 = vrsqrt.pop %v3548
  %v3610 = vmul.f32 %v3609, %v3548
  %v3611 = vmul.f32 %v3610, %v3609
  %v3612 = vmul.f32 0.5, %v3611
  %v3613 = vsub.f32 1.5, %v3612
  %v3614 = vmul.f32 %v3609, %v3613
  %vm3615 = vweird.f32 %v3548
  %vm3616 = vweird.f32 %v3609
  %vm3617 = vmor %vm3615, %vm3616
  %v3618 = vsel %vm3617, %v3609, %v3614
  %v3619 = vrsqrt.pop %v3549
  %v3620 = vmul.f32 %v3619, %v3549
  %v3621 = vmul.f32 %v3620, %v3619
  %v3622 = vmul.f32 0.5, %v3621
  %v3623 = vsub.f32 1.5, %v3622
  %v3624 = vmul.f32 %v3619, %v3623
  %vm3625 = vweird.f32 %v3549
  %vm3626 = vweird.f32 %v3619
  %vm3627 = vmor %vm3625, %vm3626
  %v3628 = vsel %vm3627, %v3619, %v3624
  %v3629 = vrsqrt.pop %v3550
  %v3630 = vmul.f32 %v3629, %v3550
  %v3631 = vmul.f32 %v3630, %v3629
  %v3632 = vmul.f32 0.5, %v3631
  %v3633 = vsub.f32 1.5, %v3632
  %v3634 = vmul.f32 %v3629, %v3633
  %vm3635 = vweird.f32 %v3550
  %vm3636 = vweird.f32 %v3629
  %vm3637 = vmor %vm3635, %vm3636
  %v3638 = vsel %vm3637, %v3629, %v3634
  %v3639 = vrsqrt.pop %v3551
  %v3640 = vmul.f32 %v3639, %v3551
  %v3641 = vmul.f32 %v3640, %v3639
  %v3642 = vmul.f32 0.5, %v3641
  %v3643 = vsub.f32 1.5, %v3642
  %v3644 = vmul.f32 %v3639, %v3643
  %vm3645 = vweird.f32 %v3551
  %vm3646 = vweird.f32 %v3639
  %vm3647 = vmor %vm3645, %vm3646
  %v3648 = vsel %vm3647, %v3639, %v3644
  %v3649 = vrsqrt.pop %v3552
  %v3650 = vmul.f32 %v3649, %v3552
  %v3651 = vmul.f32 %v3650, %v3649
  %v3652 = vmul.f32 0.5, %v3651
  %v3653 = vsub.f32 1.5, %v3652
  %v3654 = vmul.f32 %v3649, %v3653
  %vm3655 = vweird.f32 %v3552
  %vm3656 = vweird.f32 %v3649
  %vm3657 = vmor %vm3655, %vm3656
  %v3658 = vsel %vm3657, %v3649, %v3654
  %v3659 = vrsqrt.pop %v3553
  %v3660 = vmul.f32 %v3659, %v3553
  %v3661 = vmul.f32 %v3660, %v3659
  %v3662 = vmul.f32 0.5, %v3661
  %v3663 = vsub.f32 1.5, %v3662
  %v3664 = vmul.f32 %v3659, %v3663
  %vm3665 = vweird.f32 %v3553
  %vm3666 = vweird.f32 %v3659
  %vm3667 = vmor %vm3665, %vm3666
  %v3668 = vsel %vm3667, %v3659, %v3664
  %v3669 = vrsqrt.pop %v3554
  %v3670 = vmul.f32 %v3669, %v3554
  %v3671 = vmul.f32 %v3670, %v3669
  %v3672 = vmul.f32 0.5, %v3671
  %v3673 = vsub.f32 1.5, %v3672
  %v3674 = vmul.f32 %v3669, %v3673
  %vm3675 = vweird.f32 %v3554
  %vm3676 = vweird.f32 %v3669
  %vm3677 = vmor %vm3675, %vm3676
  %v3678 = vsel %vm3677, %v3669, %v3674
  %v3679 = vrsqrt.pop %v3555
  %v3680 = vmul.f32 %v3679, %v3555
  %v3681 = vmul.f32 %v3680, %v3679
  %v3682 = vmul.f32 0.5, %v3681
  %v3683 = vsub.f32 1.5, %v3682
  %v3684 = vmul.f32 %v3679, %v3683
  %vm3685 = vweird.f32 %v3555
  %vm3686 = vweird.f32 %v3679
  %vm3687 = vmor %vm3685, %vm3686
  %v3688 = vsel %vm3687, %v3679, %v3684
  %v3689 = vrsqrt.pop %v3556
  %v3690 = vmul.f32 %v3689, %v3556
  %v3691 = vmul.f32 %v3690, %v3689
  %v3692 = vmul.f32 0.5, %v3691
  %v3693 = vsub.f32 1.5, %v3692
  %v3694 = vmul.f32 %v3689, %v3693
  %vm3695 = vweird.f32 %v3556
  %vm3696 = vweird.f32 %v3689
  %vm3697 = vmor %vm3695, %vm3696
  %v3698 = vsel %vm3697, %v3689, %v3694
  %v3699 = vrsqrt.pop %v3557
  %v3700 = vmul.f32 %v3699, %v3557
  %v3701 = vmul.f32 %v3700, %v3699
  %v3702 = vmul.f32 0.5, %v3701
  %v3703 = vsub.f32 1.5, %v3702
  %v3704 = vmul.f32 %v3699, %v3703
  %vm3705 = vweird.f32 %v3557
  %vm3706 = vweird.f32 %v3699
  %vm3707 = vmor %vm3705, %vm3706
  %v3708 = vsel %vm3707, %v3699, %v3704
  %v3709 = vrsqrt.pop %v3558
  %v3710 = vmul.f32 %v3709, %v3558
  %v3711 = vmul.f32 %v3710, %v3709
  %v3712 = vmul.f32 0.5, %v3711
  %v3713 = vsub.f32 1.5, %v3712
  %v3714 = vmul.f32 %v3709, %v3713
  %vm3715 = vweird.f32 %v3558
  %vm3716 = vweird.f32 %v3709
  %vm3717 = vmor %vm3715, %vm3716
  %v3718 = vsel %vm3717, %v3709, %v3714
  %v3719 = vmul.f32 %v3495, %v3568
  %v3720 = vmul.f32 %v3496, %v3578
  %v3721 = vmul.f32 %v3497, %v3588
  %v3722 = vmul.f32 %v3498, %v3598
  %v3723 = vmul.f32 %v3499, %v3608
  %v3724 = vmul.f32 %v3500, %v3618
  %v3725 = vmul.f32 %v3501, %v3628
  %v3726 = vmul.f32 %v3502, %v3638
  %v3727 = vmul.f32 %v3503, %v3648
  %v3728 = vmul.f32 %v3504, %v3658
  %v3729 = vmul.f32 %v3505, %v3668
  %v3730 = vmul.f32 %v3506, %v3678
  %v3731 = vmul.f32 %v3507, %v3688
  %v3732 = vmul.f32 %v3508, %v3698
  %v3733 = vmul.f32 %v3509, %v3708
  %v3734 = vmul.f32 %v3510, %v3718
  %v3735 = vperm.slane %v3349, 0
  %v3736 = vmul.f32 %v3719, %v3735
  %v3737 = vmul.f32 %v3720, %v3735
  %v3738 = vmul.f32 %v3721, %v3735
  %v3739 = vmul.f32 %v3722, %v3735
  %v3740 = vmul.f32 %v3723, %v3735
  %v3741 = vmul.f32 %v3724, %v3735
  %v3742 = vmul.f32 %v3725, %v3735
  %v3743 = vmul.f32 %v3726, %v3735
  %v3744 = vmul.f32 %v3727, %v3735
  %v3745 = vmul.f32 %v3728, %v3735
  %v3746 = vmul.f32 %v3729, %v3735
  %v3747 = vmul.f32 %v3730, %v3735
  %v3748 = vmul.f32 %v3731, %v3735
  %v3749 = vmul.f32 %v3732, %v3735
  %v3750 = vmul.f32 %v3733, %v3735
  %v3751 = vmul.f32 %v3734, %v3735
  %v3752 = vperm.slane %v3350, 0
  %v3753 = vadd.f32 %v3736, %v3752
  %v3754 = vadd.f32 %v3737, %v3752
  %v3755 = vadd.f32 %v3738, %v3752
  %v3756 = vadd.f32 %v3739, %v3752
  %v3757 = vadd.f32 %v3740, %v3752
  %v3758 = vadd.f32 %v3741, %v3752
  %v3759 = vadd.f32 %v3742, %v3752
  %v3760 = vadd.f32 %v3743, %v3752
  %v3761 = vadd.f32 %v3744, %v3752
  %v3762 = vadd.f32 %v3745, %v3752
  %v3763 = vadd.f32 %v3746, %v3752
  %v3764 = vadd.f32 %v3747, %v3752
  %v3765 = vadd.f32 %v3748, %v3752
  %v3766 = vadd.f32 %v3749, %v3752
  %v3767 = vadd.f32 %v3750, %v3752
  %v3768 = vadd.f32 %v3751, %v3752
  %v3769 = vld [vmem:[%s4] sm:$0xff]
  %3770 = vmatpush.msra.mxu0 %v3768
  %3771 = vmatpush.msra.mxu0 %v3767
  %3772 = vmatpush.msra.mxu0 %v3766
  %3773 = vmatpush.msra.mxu0 %v3765
  %3774 = vmatpush.msra.mxu0 %v3764
  %3775 = vmatpush.msra.mxu0 %v3763
  %3776 = vmatpush.msra.mxu0 %v3762
  %3777 = vmatpush.msra.mxu0 %v3761
  %3778 = vmatpush.msra.mxu0 %v3760
  %3779 = vmatpush.msra.mxu0 %v3759
  %3780 = vmatpush.msra.mxu0 %v3758
  %3781 = vmatpush.msra.mxu0 %v3757
  %3782 = vmatpush.msra.mxu0 %v3756
  %3783 = vmatpush.msra.mxu0 %v3755
  %3784 = vmatpush.msra.mxu0 %v3754
  %3785 = vmatpush.msra.mxu0 %v3753
  %3786 = vmatmul.f32.gmra.mxu0 %v3769
  %v3787 = vpop.f32.mrf.mxu0
  %v3788 = vadd.f32 0.0, %v3787
  %3789 = vdwg.mxu0
  %v3790 = vld [vmem:[%s3 + $0x40] sm:$0xff]
  %v3791 = vld [vmem:[%s3 + $0x48] sm:$0xff]
  %v3792 = vld [vmem:[%s3 + $0x50] sm:$0xff]
  %v3793 = vld [vmem:[%s3 + $0x58] sm:$0xff]
  %v3794 = vld [vmem:[%s3 + $0x60] sm:$0xff]
  %v3795 = vld [vmem:[%s3 + $0x68] sm:$0xff]
  %v3796 = vld [vmem:[%s3 + $0x70] sm:$0xff]
  %v3797 = vld [vmem:[%s3 + $0x78] sm:$0xff]
  %v3798 = vld [vmem:[%s4 + $0x11] sm:$0x1]
  %v3799 = vperm.slane %v3798, 0
  %v3801 = vsel %vm157, %v3788, 0
  %3803 = vmatpush.msra.mxu0 0.0
  %3804 = vmatpush.msra.mxu0 0.0
  %3805 = vmatpush.msra.mxu0 0.0
  %3806 = vmatpush.msra.mxu0 0.0
  %3807 = vmatpush.msra.mxu0 0.0
  %3808 = vmatpush.msra.mxu0 0.0
  %3809 = vmatpush.msra.mxu0 0.0
  %3810 = vmatpush.msra.mxu0 0.0
  %3811 = vmatpush.msra.mxu0 %v3797
  %3812 = vmatpush.msra.mxu0 %v3796
  %3813 = vmatpush.msra.mxu0 %v3795
  %3814 = vmatpush.msra.mxu0 %v3794
  %3815 = vmatpush.msra.mxu0 %v3793
  %3816 = vmatpush.msra.mxu0 %v3792
  %3817 = vmatpush.msra.mxu0 %v3791
  %3818 = vmatpush.msra.mxu0 %v3790
  %3819 = vmatmul.f32.gmra.mxu0 %v3801
  %v3820 = vpop.f32.mrf.mxu0
  %v3821 = vadd.f32 %v3799, %v3820
  %3822 = vdwg.mxu0
  %3823 = vst [vmem:[%s5] sm:$0xff] %v3821
  // Predicated region
  $region22: #{simple_vit_forward.1} parent=0 // pred_check
    _
  $region23: #{simple_vit_forward.1} parent=0 // pred_check_branch
    %3825 = sbr.rel (0) target = $region25
  $region24: #{simple_vit_forward.1} parent=0 // pred_region
    _
  $region25: #{simple_vit_forward.1} parent=0 // pred_fallthru
    _
  // Predicated region
  $region26: #{simple_vit_forward.1} parent=0 // pred_check
    _
  $region27: #{simple_vit_forward.1} parent=0 // pred_check_branch
    %3827 = sbr.rel (0) target = $region29
  $region28: #{simple_vit_forward.1} parent=0 // pred_region
    _
  $region29: #{simple_vit_forward.1} parent=0 // pred_fallthru
    _

</llo_original>
